<compile_context>
chip_gen: v5e
topology: v5e:2x2
jax: 0.10.0
libtpu: 0.0.40
codegen_flags: <defaults>
</compile_context>

<pallas_src>
import jax
import jax.numpy as jnp
from jax.experimental import pallas as pl
from jax.experimental.pallas import tpu as pltpu

OP_NAMES = ("none", "skip_connect", "nor_conv_1x1", "nor_conv_3x3", "avg_pool_3x3")
BN_EPS = 1e-5
MAX_NODES = 4


def _make_cell_kernel(bb, H, W, C):
    """Build the fused-cell kernel body for a (bb, H, W, C) NHWC batch block."""

    def kernel(sw_ref, x_ref, wc_ref, out_ref):
        # sw_ref : SMEM (num_edges*2,)   per-edge [skip, avg_pool] scalar weights
        # x_ref  : VMEM (bb, H, W, C)    input batch block (node 0)
        # wc_ref : VMEM (num_edges, 9C, C) bf16 folded conv weights
        # out_ref: VMEM (bb, H, W, C)    node 3 (cell output)
        f32 = jnp.float32

        # Static avg-pool reciprocal-count map (count_include_pad=False),
        # computed once per grid step and shared by all 6 edges.
        row = jax.lax.broadcasted_iota(jnp.int32, (H, W, 1), 0)
        col = jax.lax.broadcasted_iota(jnp.int32, (H, W, 1), 1)
        cnt_h = 3.0 - (row == 0).astype(f32) - (row == H - 1).astype(f32)
        cnt_w = 3.0 - (col == 0).astype(f32) - (col == W - 1).astype(f32)
        inv_cnt = (1.0 / (cnt_h * cnt_w))[None]                  # (1, H, W, 1)

        def node_features(v):
            """Per source node: in-VMEM zero-pad, ReLU, im2col and the avg-pool
            numerator.  Computed once per node, reused by every outgoing edge."""
            zw = jnp.zeros((bb, H, 1, C), f32)
            xw = jnp.concatenate([zw, v, zw], axis=2)            # (bb, H,   W+2, C)
            zh = jnp.zeros((bb, 1, W + 2, C), f32)
            xpad = jnp.concatenate([zh, xw, zh], axis=1)         # (bb, H+2, W+2, C)

            rpad = jnp.maximum(xpad, 0.0)                        # ReLU (pad stays 0)
            # im2col: 9 shifted taps stacked along the channel axis.
            cols = [rpad[:, dy:dy + H, dx:dx + W, :].reshape(bb * H * W, C)
                    for dy in range(3) for dx in range(3)]
            im2col = jnp.concatenate(cols, axis=-1).astype(jnp.bfloat16)  # (bb*H*W, 9C)

            # avg_pool_3x3 numerator via separable 3-tap sums (4 adds total).
            csum = xpad[:, :, 0:W, :] + xpad[:, :, 1:W + 1, :] + xpad[:, :, 2:W + 2, :]
            psum = csum[:, 0:H, :, :] + csum[:, 1:H + 1, :, :] + csum[:, 2:H + 2, :, :]
            pool = psum * inv_cnt                                # (bb, H, W, C)
            return im2col, pool

        def edge(e, v, im2col, pool):
            """One NAS-201 mixed edge: conv1x1 + conv3x3 + BN + their mixture
            weights are folded into one (9C, C) matrix -> a single MXU matmul;
            skip / avg_pool keep per-op scalars; 'none' contributes 0."""
            conv = jnp.dot(im2col, wc_ref[e],
                           preferred_element_type=jnp.float32).reshape(bb, H, W, C)
            return conv + sw_ref[2 * e] * v + sw_ref[2 * e + 1] * pool

        # DAG (edge indices follow sorted edge keys: 1<-0, 2<-0, 2<-1, 3<-0, 3<-1, 3<-2)
        x0 = x_ref[...].astype(f32)
        f0 = node_features(x0)
        n1 = edge(0, x0, *f0)
        f1 = node_features(n1)
        n2 = edge(1, x0, *f0) + edge(2, n1, *f1)
        f2 = node_features(n2)
        n3 = edge(3, x0, *f0) + edge(4, n1, *f1) + edge(5, n2, *f2)
        out_ref[...] = n3.astype(out_ref.dtype)

    return kernel


def _fold_edge_weights(params, weightss, edge_keys):
    """Fold mixture weights + eval-mode BN scale into the conv weights.
    Returns (num_edges, 9C, C) bf16 conv matrices and a flat (num_edges*2,)
    f32 vector of [skip, avg_pool] scalars.  Recomputed every call (depends on
    the architecture weights), never baked into params."""
    bn_scale = 1.0 / jnp.sqrt(jnp.float32(1.0 + BN_EPS))     # BN eval: mean=0, var=1
    wcombs, sw = [], []
    for idx, key in enumerate(edge_keys):
        w1, w3 = params[key]                                 # (C, C), (9, C, C)
        C = w1.shape[0]
        wts = weightss[idx].astype(jnp.float32)              # (5,)
        wc = w3 * (wts[3] * bn_scale)                        # conv3x3 taps pre-scaled
        wc = wc.at[4].add(w1 * (wts[2] * bn_scale))          # conv1x1 -> center tap
        wcombs.append(wc.reshape(9 * C, C))
        sw.append(jnp.stack([wts[1], wts[4]]))               # [skip, avg_pool]
    return (jnp.stack(wcombs).astype(jnp.bfloat16),
            jnp.concatenate(sw).astype(jnp.float32))


def init_cell_params(key, C, max_nodes=4):
    """Deterministic per-edge conv weights (1x1 and 3x3), mirroring __init__ shapes."""
    params = {}
    for i in range(1, max_nodes):
        for j in range(i):
            node_str = "{:}<-{:}".format(i, j)
            key, k1, k2 = jax.random.split(key, 3)
            w1 = jax.random.normal(k1, (C, C), jnp.float32) * (1.0 / jnp.sqrt(C))
            w3 = jax.random.normal(k2, (9, C, C), jnp.float32) * (1.0 / jnp.sqrt(9.0 * C))
            params[node_str] = (w1, w3)
    return params


def nas201_cell_forward(x_nchw, params, weightss, max_nodes=4):
    """Equivalent of NAS201SearchCell.forward(inputs, weightss, weightss_mix=None)."""
    assert max_nodes == MAX_NODES
    N, C, H, W = x_nchw.shape
    x = jnp.transpose(x_nchw, (0, 2, 3, 1))                  # NCHW -> NHWC
    edge_keys = sorted(params.keys())
    num_edges = len(edge_keys)
    wcomb, sw = _fold_edge_weights(params, weightss, edge_keys)

    # At most 2 grid steps over the batch: parallel across the 2 TCs on v7x,
    # and big per-step blocks to amortize serial grid overhead on v5e/v6e.
    g = 2 if (N >= 2 and N % 2 == 0) else 1
    bb = N // g

    kernel = _make_cell_kernel(bb, H, W, C)
    out = pl.pallas_call(
        kernel,
        out_shape=jax.ShapeDtypeStruct((N, H, W, C), x.dtype),
        grid=(g,),
        in_specs=[
            pl.BlockSpec(memory_space=pltpu.MemorySpace.SMEM),            # skip/pool scalars
            pl.BlockSpec((bb, H, W, C), lambda n: (n, 0, 0, 0)),          # input batch block
            pl.BlockSpec((num_edges, 9 * C, C), lambda n: (0, 0, 0)),     # folded conv weights
        ],
        out_specs=pl.BlockSpec((bb, H, W, C), lambda n: (n, 0, 0, 0)),
        compiler_params=pltpu.CompilerParams(dimension_semantics=("parallel",)),
    )(sw, x, wcomb)
    return jnp.transpose(out, (0, 3, 1, 2))                  # NHWC -> NCHW


if __name__ == "__main__":
    key = jax.random.PRNGKey(0)
    N, C, H, W = 2, 4, 16, 16

    kx, kw, kp = jax.random.split(key, 3)
    x = jax.random.normal(kx, (N, C, H, W), jnp.float32)     # NCHW like PyTorch
    params = init_cell_params(kp, C, MAX_NODES)
    num_edges = len(params)                                  # 6 edges for max_nodes=4
    logits = jax.random.normal(kw, (num_edges, len(OP_NAMES)), jnp.float32)
    weightss = jax.nn.softmax(logits, axis=-1)               # architecture weights

    out = nas201_cell_forward(x, params, weightss, MAX_NODES)
    out = jax.block_until_ready(out)
    assert out.shape == (N, C, H, W), out.shape
    assert bool(jnp.all(jnp.isfinite(out)))
    print("KERNEL_OK")
</pallas_src>

<mosaic_0001>
module attributes {stable_mosaic.version = 11 : i64} {
  func.func @kernel(%arg0: i32, %arg1: memref<12xf32, #tpu.memory_space<smem>>, %arg2: memref<1x16x16x4xf32, #tpu.memory_space<vmem>>, %arg3: memref<6x36x4xbf16, #tpu.memory_space<vmem>>, %arg4: memref<1x16x16x4xf32, #tpu.memory_space<vmem>>) attributes {dimension_semantics = [#tpu.dimension_semantics<parallel>], iteration_bounds = array<i64: 2>, scalar_prefetch = 0 : i64, scratch_operands = 0 : i64, tpu.core_type = #tpu.core_type<tc>, window_params = [{transform_indices = @transform_0, window_bounds = array<i64: 12>}, {transform_indices = @transform_1, window_bounds = array<i64: 1, 16, 16, 4>}, {pipeline_mode = #tpu.pipeline_mode<synchronous>, transform_indices = @transform_2, window_bounds = array<i64: 6, 36, 4>}, {transform_indices = @transform_3, window_bounds = array<i64: 1, 16, 16, 4>}]} {
    %0 = tpu.iota {dimensions = array<i32: 0>} : vector<16x16x1xi32>
    %1 = tpu.iota {dimensions = array<i32: 1>} : vector<16x16x1xi32>
    %c0_i32 = arith.constant 0 : i32
    %2 = vector.broadcast %c0_i32 : i32 to vector<16x16x1xi32>
    %3 = arith.cmpi eq, %0, %2 : vector<16x16x1xi32>
    %4 = arith.extui %3 : vector<16x16x1xi1> to vector<16x16x1xi32>
    %5 = arith.sitofp %4 : vector<16x16x1xi32> to vector<16x16x1xf32>
    %cst = arith.constant 3.000000e+00 : f32
    %6 = vector.broadcast %cst : f32 to vector<16x16x1xf32>
    %7 = arith.subf %6, %5 : vector<16x16x1xf32>
    %c15_i32 = arith.constant 15 : i32
    %8 = vector.broadcast %c15_i32 : i32 to vector<16x16x1xi32>
    %9 = arith.cmpi eq, %0, %8 : vector<16x16x1xi32>
    %10 = arith.extui %9 : vector<16x16x1xi1> to vector<16x16x1xi32>
    %11 = arith.sitofp %10 : vector<16x16x1xi32> to vector<16x16x1xf32>
    %12 = arith.subf %7, %11 : vector<16x16x1xf32>
    %c0_i32_0 = arith.constant 0 : i32
    %13 = vector.broadcast %c0_i32_0 : i32 to vector<16x16x1xi32>
    %14 = arith.cmpi eq, %1, %13 : vector<16x16x1xi32>
    %15 = arith.extui %14 : vector<16x16x1xi1> to vector<16x16x1xi32>
    %16 = arith.sitofp %15 : vector<16x16x1xi32> to vector<16x16x1xf32>
    %cst_1 = arith.constant 3.000000e+00 : f32
    %17 = vector.broadcast %cst_1 : f32 to vector<16x16x1xf32>
    %18 = arith.subf %17, %16 : vector<16x16x1xf32>
    %c15_i32_2 = arith.constant 15 : i32
    %19 = vector.broadcast %c15_i32_2 : i32 to vector<16x16x1xi32>
    %20 = arith.cmpi eq, %1, %19 : vector<16x16x1xi32>
    %21 = arith.extui %20 : vector<16x16x1xi1> to vector<16x16x1xi32>
    %22 = arith.sitofp %21 : vector<16x16x1xi32> to vector<16x16x1xf32>
    %23 = arith.subf %18, %22 : vector<16x16x1xf32>
    %24 = arith.mulf %12, %23 : vector<16x16x1xf32>
    %cst_3 = arith.constant 1.000000e+00 : f32
    %25 = vector.broadcast %cst_3 : f32 to vector<16x16x1xf32>
    %26 = arith.divf %25, %24 : vector<16x16x1xf32>
    %27 = vector.shape_cast %26 : vector<16x16x1xf32> to vector<1x16x16x1xf32>
    %c0 = arith.constant 0 : index
    %c0_4 = arith.constant 0 : index
    %c0_5 = arith.constant 0 : index
    %c0_6 = arith.constant 0 : index
    %28 = vector.load %arg2[%c0, %c0_4, %c0_5, %c0_6] : memref<1x16x16x4xf32, #tpu.memory_space<vmem>>, vector<1x16x16x4xf32>
    %cst_7 = arith.constant 0.000000e+00 : f32
    %29 = vector.broadcast %cst_7 : f32 to vector<1x16x1x4xf32>
    %30 = tpu.concatenate %29, %28, %29 in 2 : vector<1x16x1x4xf32>, vector<1x16x16x4xf32>, vector<1x16x1x4xf32> -> vector<1x16x18x4xf32>
    %cst_8 = arith.constant 0.000000e+00 : f32
    %31 = vector.broadcast %cst_8 : f32 to vector<1x1x18x4xf32>
    %32 = tpu.concatenate %31, %30, %31 in 1 : vector<1x1x18x4xf32>, vector<1x16x18x4xf32>, vector<1x1x18x4xf32> -> vector<1x18x18x4xf32>
    %cst_9 = arith.constant 0.000000e+00 : f32
    %33 = vector.broadcast %cst_9 : f32 to vector<1x18x18x4xf32>
    %34 = arith.maximumf %32, %33 : vector<1x18x18x4xf32>
    %35 = vector.extract_strided_slice %34 {offsets = [0, 0, 0, 0], sizes = [1, 16, 16, 4], strides = [1, 1, 1, 1]} : vector<1x18x18x4xf32> to vector<1x16x16x4xf32>
    %36 = vector.shape_cast %35 : vector<1x16x16x4xf32> to vector<256x4xf32>
    %37 = vector.extract_strided_slice %34 {offsets = [0, 0, 1, 0], sizes = [1, 16, 16, 4], strides = [1, 1, 1, 1]} : vector<1x18x18x4xf32> to vector<1x16x16x4xf32>
    %38 = vector.shape_cast %37 : vector<1x16x16x4xf32> to vector<256x4xf32>
    %39 = vector.extract_strided_slice %34 {offsets = [0, 0, 2, 0], sizes = [1, 16, 16, 4], strides = [1, 1, 1, 1]} : vector<1x18x18x4xf32> to vector<1x16x16x4xf32>
    %40 = vector.shape_cast %39 : vector<1x16x16x4xf32> to vector<256x4xf32>
    %41 = vector.extract_strided_slice %34 {offsets = [0, 1, 0, 0], sizes = [1, 16, 16, 4], strides = [1, 1, 1, 1]} : vector<1x18x18x4xf32> to vector<1x16x16x4xf32>
    %42 = vector.shape_cast %41 : vector<1x16x16x4xf32> to vector<256x4xf32>
    %43 = vector.extract_strided_slice %34 {offsets = [0, 1, 1, 0], sizes = [1, 16, 16, 4], strides = [1, 1, 1, 1]} : vector<1x18x18x4xf32> to vector<1x16x16x4xf32>
    %44 = vector.shape_cast %43 : vector<1x16x16x4xf32> to vector<256x4xf32>
    %45 = vector.extract_strided_slice %34 {offsets = [0, 1, 2, 0], sizes = [1, 16, 16, 4], strides = [1, 1, 1, 1]} : vector<1x18x18x4xf32> to vector<1x16x16x4xf32>
    %46 = vector.shape_cast %45 : vector<1x16x16x4xf32> to vector<256x4xf32>
    %47 = vector.extract_strided_slice %34 {offsets = [0, 2, 0, 0], sizes = [1, 16, 16, 4], strides = [1, 1, 1, 1]} : vector<1x18x18x4xf32> to vector<1x16x16x4xf32>
    %48 = vector.shape_cast %47 : vector<1x16x16x4xf32> to vector<256x4xf32>
    %49 = vector.extract_strided_slice %34 {offsets = [0, 2, 1, 0], sizes = [1, 16, 16, 4], strides = [1, 1, 1, 1]} : vector<1x18x18x4xf32> to vector<1x16x16x4xf32>
    %50 = vector.shape_cast %49 : vector<1x16x16x4xf32> to vector<256x4xf32>
    %51 = vector.extract_strided_slice %34 {offsets = [0, 2, 2, 0], sizes = [1, 16, 16, 4], strides = [1, 1, 1, 1]} : vector<1x18x18x4xf32> to vector<1x16x16x4xf32>
    %52 = vector.shape_cast %51 : vector<1x16x16x4xf32> to vector<256x4xf32>
    %53 = tpu.concatenate %36, %38, %40, %42, %44, %46, %48, %50, %52 in 1 : vector<256x4xf32>, vector<256x4xf32>, vector<256x4xf32>, vector<256x4xf32>, vector<256x4xf32>, vector<256x4xf32>, vector<256x4xf32>, vector<256x4xf32>, vector<256x4xf32> -> vector<256x36xf32>
    %54 = arith.truncf %53 : vector<256x36xf32> to vector<256x36xbf16>
    %55 = vector.extract_strided_slice %32 {offsets = [0, 0, 0, 0], sizes = [1, 18, 16, 4], strides = [1, 1, 1, 1]} : vector<1x18x18x4xf32> to vector<1x18x16x4xf32>
    %56 = vector.extract_strided_slice %32 {offsets = [0, 0, 1, 0], sizes = [1, 18, 16, 4], strides = [1, 1, 1, 1]} : vector<1x18x18x4xf32> to vector<1x18x16x4xf32>
    %57 = arith.addf %55, %56 : vector<1x18x16x4xf32>
    %58 = vector.extract_strided_slice %32 {offsets = [0, 0, 2, 0], sizes = [1, 18, 16, 4], strides = [1, 1, 1, 1]} : vector<1x18x18x4xf32> to vector<1x18x16x4xf32>
    %59 = arith.addf %57, %58 : vector<1x18x16x4xf32>
    %60 = vector.extract_strided_slice %59 {offsets = [0, 0, 0, 0], sizes = [1, 16, 16, 4], strides = [1, 1, 1, 1]} : vector<1x18x16x4xf32> to vector<1x16x16x4xf32>
    %61 = vector.extract_strided_slice %59 {offsets = [0, 1, 0, 0], sizes = [1, 16, 16, 4], strides = [1, 1, 1, 1]} : vector<1x18x16x4xf32> to vector<1x16x16x4xf32>
    %62 = arith.addf %60, %61 : vector<1x16x16x4xf32>
    %63 = vector.extract_strided_slice %59 {offsets = [0, 2, 0, 0], sizes = [1, 16, 16, 4], strides = [1, 1, 1, 1]} : vector<1x18x16x4xf32> to vector<1x16x16x4xf32>
    %64 = arith.addf %62, %63 : vector<1x16x16x4xf32>
    %65 = vector.broadcast %27 : vector<1x16x16x1xf32> to vector<1x16x16x4xf32>
    %66 = arith.mulf %64, %65 : vector<1x16x16x4xf32>
    %c0_10 = arith.constant 0 : index
    %c0_11 = arith.constant 0 : index
    %c0_12 = arith.constant 0 : index
    %67 = vector.load %arg3[%c0_10, %c0_11, %c0_12] : memref<6x36x4xbf16, #tpu.memory_space<vmem>>, vector<1x36x4xbf16>
    %68 = vector.shape_cast %67 : vector<1x36x4xbf16> to vector<36x4xbf16>
    %cst_13 = arith.constant dense<0.000000e+00> : vector<256x4xf32>
    %69 = tpu.matmul %54, %68, %cst_13 {dimension_numbers = #tpu.dot_dimension_numbers<[1], [0], [0], [1], [0, 0, 1, 1], [], []>} : vector<256x36xbf16>, vector<36x4xbf16>, vector<256x4xf32> -> vector<256x4xf32>
    %70 = vector.shape_cast %69 : vector<256x4xf32> to vector<1x16x16x4xf32>
    %c0_14 = arith.constant 0 : index
    %71 = memref.load %arg1[%c0_14] : memref<12xf32, #tpu.memory_space<smem>>
    %72 = vector.broadcast %71 : f32 to vector<1x16x16x4xf32>
    %73 = arith.mulf %72, %28 : vector<1x16x16x4xf32>
    %74 = arith.addf %70, %73 : vector<1x16x16x4xf32>
    %c1 = arith.constant 1 : index
    %75 = memref.load %arg1[%c1] : memref<12xf32, #tpu.memory_space<smem>>
    %76 = vector.broadcast %75 : f32 to vector<1x16x16x4xf32>
    %77 = arith.mulf %76, %66 : vector<1x16x16x4xf32>
    %78 = arith.addf %74, %77 : vector<1x16x16x4xf32>
    %cst_15 = arith.constant 0.000000e+00 : f32
    %79 = vector.broadcast %cst_15 : f32 to vector<1x16x1x4xf32>
    %80 = tpu.concatenate %79, %78, %79 in 2 : vector<1x16x1x4xf32>, vector<1x16x16x4xf32>, vector<1x16x1x4xf32> -> vector<1x16x18x4xf32>
    %cst_16 = arith.constant 0.000000e+00 : f32
    %81 = vector.broadcast %cst_16 : f32 to vector<1x1x18x4xf32>
    %82 = tpu.concatenate %81, %80, %81 in 1 : vector<1x1x18x4xf32>, vector<1x16x18x4xf32>, vector<1x1x18x4xf32> -> vector<1x18x18x4xf32>
    %cst_17 = arith.constant 0.000000e+00 : f32
    %83 = vector.broadcast %cst_17 : f32 to vector<1x18x18x4xf32>
    %84 = arith.maximumf %82, %83 : vector<1x18x18x4xf32>
    %85 = vector.extract_strided_slice %84 {offsets = [0, 0, 0, 0], sizes = [1, 16, 16, 4], strides = [1, 1, 1, 1]} : vector<1x18x18x4xf32> to vector<1x16x16x4xf32>
    %86 = vector.shape_cast %85 : vector<1x16x16x4xf32> to vector<256x4xf32>
    %87 = vector.extract_strided_slice %84 {offsets = [0, 0, 1, 0], sizes = [1, 16, 16, 4], strides = [1, 1, 1, 1]} : vector<1x18x18x4xf32> to vector<1x16x16x4xf32>
    %88 = vector.shape_cast %87 : vector<1x16x16x4xf32> to vector<256x4xf32>
    %89 = vector.extract_strided_slice %84 {offsets = [0, 0, 2, 0], sizes = [1, 16, 16, 4], strides = [1, 1, 1, 1]} : vector<1x18x18x4xf32> to vector<1x16x16x4xf32>
    %90 = vector.shape_cast %89 : vector<1x16x16x4xf32> to vector<256x4xf32>
    %91 = vector.extract_strided_slice %84 {offsets = [0, 1, 0, 0], sizes = [1, 16, 16, 4], strides = [1, 1, 1, 1]} : vector<1x18x18x4xf32> to vector<1x16x16x4xf32>
    %92 = vector.shape_cast %91 : vector<1x16x16x4xf32> to vector<256x4xf32>
    %93 = vector.extract_strided_slice %84 {offsets = [0, 1, 1, 0], sizes = [1, 16, 16, 4], strides = [1, 1, 1, 1]} : vector<1x18x18x4xf32> to vector<1x16x16x4xf32>
    %94 = vector.shape_cast %93 : vector<1x16x16x4xf32> to vector<256x4xf32>
    %95 = vector.extract_strided_slice %84 {offsets = [0, 1, 2, 0], sizes = [1, 16, 16, 4], strides = [1, 1, 1, 1]} : vector<1x18x18x4xf32> to vector<1x16x16x4xf32>
    %96 = vector.shape_cast %95 : vector<1x16x16x4xf32> to vector<256x4xf32>
    %97 = vector.extract_strided_slice %84 {offsets = [0, 2, 0, 0], sizes = [1, 16, 16, 4], strides = [1, 1, 1, 1]} : vector<1x18x18x4xf32> to vector<1x16x16x4xf32>
    %98 = vector.shape_cast %97 : vector<1x16x16x4xf32> to vector<256x4xf32>
    %99 = vector.extract_strided_slice %84 {offsets = [0, 2, 1, 0], sizes = [1, 16, 16, 4], strides = [1, 1, 1, 1]} : vector<1x18x18x4xf32> to vector<1x16x16x4xf32>
    %100 = vector.shape_cast %99 : vector<1x16x16x4xf32> to vector<256x4xf32>
    %101 = vector.extract_strided_slice %84 {offsets = [0, 2, 2, 0], sizes = [1, 16, 16, 4], strides = [1, 1, 1, 1]} : vector<1x18x18x4xf32> to vector<1x16x16x4xf32>
    %102 = vector.shape_cast %101 : vector<1x16x16x4xf32> to vector<256x4xf32>
    %103 = tpu.concatenate %86, %88, %90, %92, %94, %96, %98, %100, %102 in 1 : vector<256x4xf32>, vector<256x4xf32>, vector<256x4xf32>, vector<256x4xf32>, vector<256x4xf32>, vector<256x4xf32>, vector<256x4xf32>, vector<256x4xf32>, vector<256x4xf32> -> vector<256x36xf32>
    %104 = arith.truncf %103 : vector<256x36xf32> to vector<256x36xbf16>
    %105 = vector.extract_strided_slice %82 {offsets = [0, 0, 0, 0], sizes = [1, 18, 16, 4], strides = [1, 1, 1, 1]} : vector<1x18x18x4xf32> to vector<1x18x16x4xf32>
    %106 = vector.extract_strided_slice %82 {offsets = [0, 0, 1, 0], sizes = [1, 18, 16, 4], strides = [1, 1, 1, 1]} : vector<1x18x18x4xf32> to vector<1x18x16x4xf32>
    %107 = arith.addf %105, %106 : vector<1x18x16x4xf32>
    %108 = vector.extract_strided_slice %82 {offsets = [0, 0, 2, 0], sizes = [1, 18, 16, 4], strides = [1, 1, 1, 1]} : vector<1x18x18x4xf32> to vector<1x18x16x4xf32>
    %109 = arith.addf %107, %108 : vector<1x18x16x4xf32>
    %110 = vector.extract_strided_slice %109 {offsets = [0, 0, 0, 0], sizes = [1, 16, 16, 4], strides = [1, 1, 1, 1]} : vector<1x18x16x4xf32> to vector<1x16x16x4xf32>
    %111 = vector.extract_strided_slice %109 {offsets = [0, 1, 0, 0], sizes = [1, 16, 16, 4], strides = [1, 1, 1, 1]} : vector<1x18x16x4xf32> to vector<1x16x16x4xf32>
    %112 = arith.addf %110, %111 : vector<1x16x16x4xf32>
    %113 = vector.extract_strided_slice %109 {offsets = [0, 2, 0, 0], sizes = [1, 16, 16, 4], strides = [1, 1, 1, 1]} : vector<1x18x16x4xf32> to vector<1x16x16x4xf32>
    %114 = arith.addf %112, %113 : vector<1x16x16x4xf32>
    %115 = vector.broadcast %27 : vector<1x16x16x1xf32> to vector<1x16x16x4xf32>
    %116 = arith.mulf %114, %115 : vector<1x16x16x4xf32>
    %c1_18 = arith.constant 1 : index
    %c0_19 = arith.constant 0 : index
    %c0_20 = arith.constant 0 : index
    %117 = vector.load %arg3[%c1_18, %c0_19, %c0_20] : memref<6x36x4xbf16, #tpu.memory_space<vmem>>, vector<1x36x4xbf16>
    %118 = vector.shape_cast %117 : vector<1x36x4xbf16> to vector<36x4xbf16>
    %cst_21 = arith.constant dense<0.000000e+00> : vector<256x4xf32>
    %119 = tpu.matmul %54, %118, %cst_21 {dimension_numbers = #tpu.dot_dimension_numbers<[1], [0], [0], [1], [0, 0, 1, 1], [], []>} : vector<256x36xbf16>, vector<36x4xbf16>, vector<256x4xf32> -> vector<256x4xf32>
    %120 = vector.shape_cast %119 : vector<256x4xf32> to vector<1x16x16x4xf32>
    %c2 = arith.constant 2 : index
    %121 = memref.load %arg1[%c2] : memref<12xf32, #tpu.memory_space<smem>>
    %122 = vector.broadcast %121 : f32 to vector<1x16x16x4xf32>
    %123 = arith.mulf %122, %28 : vector<1x16x16x4xf32>
    %124 = arith.addf %120, %123 : vector<1x16x16x4xf32>
    %c3 = arith.constant 3 : index
    %125 = memref.load %arg1[%c3] : memref<12xf32, #tpu.memory_space<smem>>
    %126 = vector.broadcast %125 : f32 to vector<1x16x16x4xf32>
    %127 = arith.mulf %126, %66 : vector<1x16x16x4xf32>
    %128 = arith.addf %124, %127 : vector<1x16x16x4xf32>
    %c2_22 = arith.constant 2 : index
    %c0_23 = arith.constant 0 : index
    %c0_24 = arith.constant 0 : index
    %129 = vector.load %arg3[%c2_22, %c0_23, %c0_24] : memref<6x36x4xbf16, #tpu.memory_space<vmem>>, vector<1x36x4xbf16>
    %130 = vector.shape_cast %129 : vector<1x36x4xbf16> to vector<36x4xbf16>
    %cst_25 = arith.constant dense<0.000000e+00> : vector<256x4xf32>
    %131 = tpu.matmul %104, %130, %cst_25 {dimension_numbers = #tpu.dot_dimension_numbers<[1], [0], [0], [1], [0, 0, 1, 1], [], []>} : vector<256x36xbf16>, vector<36x4xbf16>, vector<256x4xf32> -> vector<256x4xf32>
    %132 = vector.shape_cast %131 : vector<256x4xf32> to vector<1x16x16x4xf32>
    %c4 = arith.constant 4 : index
    %133 = memref.load %arg1[%c4] : memref<12xf32, #tpu.memory_space<smem>>
    %134 = vector.broadcast %133 : f32 to vector<1x16x16x4xf32>
    %135 = arith.mulf %134, %78 : vector<1x16x16x4xf32>
    %136 = arith.addf %132, %135 : vector<1x16x16x4xf32>
    %c5 = arith.constant 5 : index
    %137 = memref.load %arg1[%c5] : memref<12xf32, #tpu.memory_space<smem>>
    %138 = vector.broadcast %137 : f32 to vector<1x16x16x4xf32>
    %139 = arith.mulf %138, %116 : vector<1x16x16x4xf32>
    %140 = arith.addf %136, %139 : vector<1x16x16x4xf32>
    %141 = arith.addf %128, %140 : vector<1x16x16x4xf32>
    %cst_26 = arith.constant 0.000000e+00 : f32
    %142 = vector.broadcast %cst_26 : f32 to vector<1x16x1x4xf32>
    %143 = tpu.concatenate %142, %141, %142 in 2 : vector<1x16x1x4xf32>, vector<1x16x16x4xf32>, vector<1x16x1x4xf32> -> vector<1x16x18x4xf32>
    %cst_27 = arith.constant 0.000000e+00 : f32
    %144 = vector.broadcast %cst_27 : f32 to vector<1x1x18x4xf32>
    %145 = tpu.concatenate %144, %143, %144 in 1 : vector<1x1x18x4xf32>, vector<1x16x18x4xf32>, vector<1x1x18x4xf32> -> vector<1x18x18x4xf32>
    %cst_28 = arith.constant 0.000000e+00 : f32
    %146 = vector.broadcast %cst_28 : f32 to vector<1x18x18x4xf32>
    %147 = arith.maximumf %145, %146 : vector<1x18x18x4xf32>
    %148 = vector.extract_strided_slice %147 {offsets = [0, 0, 0, 0], sizes = [1, 16, 16, 4], strides = [1, 1, 1, 1]} : vector<1x18x18x4xf32> to vector<1x16x16x4xf32>
    %149 = vector.shape_cast %148 : vector<1x16x16x4xf32> to vector<256x4xf32>
    %150 = vector.extract_strided_slice %147 {offsets = [0, 0, 1, 0], sizes = [1, 16, 16, 4], strides = [1, 1, 1, 1]} : vector<1x18x18x4xf32> to vector<1x16x16x4xf32>
    %151 = vector.shape_cast %150 : vector<1x16x16x4xf32> to vector<256x4xf32>
    %152 = vector.extract_strided_slice %147 {offsets = [0, 0, 2, 0], sizes = [1, 16, 16, 4], strides = [1, 1, 1, 1]} : vector<1x18x18x4xf32> to vector<1x16x16x4xf32>
    %153 = vector.shape_cast %152 : vector<1x16x16x4xf32> to vector<256x4xf32>
    %154 = vector.extract_strided_slice %147 {offsets = [0, 1, 0, 0], sizes = [1, 16, 16, 4], strides = [1, 1, 1, 1]} : vector<1x18x18x4xf32> to vector<1x16x16x4xf32>
    %155 = vector.shape_cast %154 : vector<1x16x16x4xf32> to vector<256x4xf32>
    %156 = vector.extract_strided_slice %147 {offsets = [0, 1, 1, 0], sizes = [1, 16, 16, 4], strides = [1, 1, 1, 1]} : vector<1x18x18x4xf32> to vector<1x16x16x4xf32>
    %157 = vector.shape_cast %156 : vector<1x16x16x4xf32> to vector<256x4xf32>
    %158 = vector.extract_strided_slice %147 {offsets = [0, 1, 2, 0], sizes = [1, 16, 16, 4], strides = [1, 1, 1, 1]} : vector<1x18x18x4xf32> to vector<1x16x16x4xf32>
    %159 = vector.shape_cast %158 : vector<1x16x16x4xf32> to vector<256x4xf32>
    %160 = vector.extract_strided_slice %147 {offsets = [0, 2, 0, 0], sizes = [1, 16, 16, 4], strides = [1, 1, 1, 1]} : vector<1x18x18x4xf32> to vector<1x16x16x4xf32>
    %161 = vector.shape_cast %160 : vector<1x16x16x4xf32> to vector<256x4xf32>
    %162 = vector.extract_strided_slice %147 {offsets = [0, 2, 1, 0], sizes = [1, 16, 16, 4], strides = [1, 1, 1, 1]} : vector<1x18x18x4xf32> to vector<1x16x16x4xf32>
    %163 = vector.shape_cast %162 : vector<1x16x16x4xf32> to vector<256x4xf32>
    %164 = vector.extract_strided_slice %147 {offsets = [0, 2, 2, 0], sizes = [1, 16, 16, 4], strides = [1, 1, 1, 1]} : vector<1x18x18x4xf32> to vector<1x16x16x4xf32>
    %165 = vector.shape_cast %164 : vector<1x16x16x4xf32> to vector<256x4xf32>
    %166 = tpu.concatenate %149, %151, %153, %155, %157, %159, %161, %163, %165 in 1 : vector<256x4xf32>, vector<256x4xf32>, vector<256x4xf32>, vector<256x4xf32>, vector<256x4xf32>, vector<256x4xf32>, vector<256x4xf32>, vector<256x4xf32>, vector<256x4xf32> -> vector<256x36xf32>
    %167 = arith.truncf %166 : vector<256x36xf32> to vector<256x36xbf16>
    %168 = vector.extract_strided_slice %145 {offsets = [0, 0, 0, 0], sizes = [1, 18, 16, 4], strides = [1, 1, 1, 1]} : vector<1x18x18x4xf32> to vector<1x18x16x4xf32>
    %169 = vector.extract_strided_slice %145 {offsets = [0, 0, 1, 0], sizes = [1, 18, 16, 4], strides = [1, 1, 1, 1]} : vector<1x18x18x4xf32> to vector<1x18x16x4xf32>
    %170 = arith.addf %168, %169 : vector<1x18x16x4xf32>
    %171 = vector.extract_strided_slice %145 {offsets = [0, 0, 2, 0], sizes = [1, 18, 16, 4], strides = [1, 1, 1, 1]} : vector<1x18x18x4xf32> to vector<1x18x16x4xf32>
    %172 = arith.addf %170, %171 : vector<1x18x16x4xf32>
    %173 = vector.extract_strided_slice %172 {offsets = [0, 0, 0, 0], sizes = [1, 16, 16, 4], strides = [1, 1, 1, 1]} : vector<1x18x16x4xf32> to vector<1x16x16x4xf32>
    %174 = vector.extract_strided_slice %172 {offsets = [0, 1, 0, 0], sizes = [1, 16, 16, 4], strides = [1, 1, 1, 1]} : vector<1x18x16x4xf32> to vector<1x16x16x4xf32>
    %175 = arith.addf %173, %174 : vector<1x16x16x4xf32>
    %176 = vector.extract_strided_slice %172 {offsets = [0, 2, 0, 0], sizes = [1, 16, 16, 4], strides = [1, 1, 1, 1]} : vector<1x18x16x4xf32> to vector<1x16x16x4xf32>
    %177 = arith.addf %175, %176 : vector<1x16x16x4xf32>
    %178 = vector.broadcast %27 : vector<1x16x16x1xf32> to vector<1x16x16x4xf32>
    %179 = arith.mulf %177, %178 : vector<1x16x16x4xf32>
    %c3_29 = arith.constant 3 : index
    %c0_30 = arith.constant 0 : index
    %c0_31 = arith.constant 0 : index
    %180 = vector.load %arg3[%c3_29, %c0_30, %c0_31] : memref<6x36x4xbf16, #tpu.memory_space<vmem>>, vector<1x36x4xbf16>
    %181 = vector.shape_cast %180 : vector<1x36x4xbf16> to vector<36x4xbf16>
    %cst_32 = arith.constant dense<0.000000e+00> : vector<256x4xf32>
    %182 = tpu.matmul %54, %181, %cst_32 {dimension_numbers = #tpu.dot_dimension_numbers<[1], [0], [0], [1], [0, 0, 1, 1], [], []>} : vector<256x36xbf16>, vector<36x4xbf16>, vector<256x4xf32> -> vector<256x4xf32>
    %183 = vector.shape_cast %182 : vector<256x4xf32> to vector<1x16x16x4xf32>
    %c6 = arith.constant 6 : index
    %184 = memref.load %arg1[%c6] : memref<12xf32, #tpu.memory_space<smem>>
    %185 = vector.broadcast %184 : f32 to vector<1x16x16x4xf32>
    %186 = arith.mulf %185, %28 : vector<1x16x16x4xf32>
    %187 = arith.addf %183, %186 : vector<1x16x16x4xf32>
    %c7 = arith.constant 7 : index
    %188 = memref.load %arg1[%c7] : memref<12xf32, #tpu.memory_space<smem>>
    %189 = vector.broadcast %188 : f32 to vector<1x16x16x4xf32>
    %190 = arith.mulf %189, %66 : vector<1x16x16x4xf32>
    %191 = arith.addf %187, %190 : vector<1x16x16x4xf32>
    %c4_33 = arith.constant 4 : index
    %c0_34 = arith.constant 0 : index
    %c0_35 = arith.constant 0 : index
    %192 = vector.load %arg3[%c4_33, %c0_34, %c0_35] : memref<6x36x4xbf16, #tpu.memory_space<vmem>>, vector<1x36x4xbf16>
    %193 = vector.shape_cast %192 : vector<1x36x4xbf16> to vector<36x4xbf16>
    %cst_36 = arith.constant dense<0.000000e+00> : vector<256x4xf32>
    %194 = tpu.matmul %104, %193, %cst_36 {dimension_numbers = #tpu.dot_dimension_numbers<[1], [0], [0], [1], [0, 0, 1, 1], [], []>} : vector<256x36xbf16>, vector<36x4xbf16>, vector<256x4xf32> -> vector<256x4xf32>
    %195 = vector.shape_cast %194 : vector<256x4xf32> to vector<1x16x16x4xf32>
    %c8 = arith.constant 8 : index
    %196 = memref.load %arg1[%c8] : memref<12xf32, #tpu.memory_space<smem>>
    %197 = vector.broadcast %196 : f32 to vector<1x16x16x4xf32>
    %198 = arith.mulf %197, %78 : vector<1x16x16x4xf32>
    %199 = arith.addf %195, %198 : vector<1x16x16x4xf32>
    %c9 = arith.constant 9 : index
    %200 = memref.load %arg1[%c9] : memref<12xf32, #tpu.memory_space<smem>>
    %201 = vector.broadcast %200 : f32 to vector<1x16x16x4xf32>
    %202 = arith.mulf %201, %116 : vector<1x16x16x4xf32>
    %203 = arith.addf %199, %202 : vector<1x16x16x4xf32>
    %204 = arith.addf %191, %203 : vector<1x16x16x4xf32>
    %c5_37 = arith.constant 5 : index
    %c0_38 = arith.constant 0 : index
    %c0_39 = arith.constant 0 : index
    %205 = vector.load %arg3[%c5_37, %c0_38, %c0_39] : memref<6x36x4xbf16, #tpu.memory_space<vmem>>, vector<1x36x4xbf16>
    %206 = vector.shape_cast %205 : vector<1x36x4xbf16> to vector<36x4xbf16>
    %cst_40 = arith.constant dense<0.000000e+00> : vector<256x4xf32>
    %207 = tpu.matmul %167, %206, %cst_40 {dimension_numbers = #tpu.dot_dimension_numbers<[1], [0], [0], [1], [0, 0, 1, 1], [], []>} : vector<256x36xbf16>, vector<36x4xbf16>, vector<256x4xf32> -> vector<256x4xf32>
    %208 = vector.shape_cast %207 : vector<256x4xf32> to vector<1x16x16x4xf32>
    %c10 = arith.constant 10 : index
    %209 = memref.load %arg1[%c10] : memref<12xf32, #tpu.memory_space<smem>>
    %210 = vector.broadcast %209 : f32 to vector<1x16x16x4xf32>
    %211 = arith.mulf %210, %141 : vector<1x16x16x4xf32>
    %212 = arith.addf %208, %211 : vector<1x16x16x4xf32>
    %c11 = arith.constant 11 : index
    %213 = memref.load %arg1[%c11] : memref<12xf32, #tpu.memory_space<smem>>
    %214 = vector.broadcast %213 : f32 to vector<1x16x16x4xf32>
    %215 = arith.mulf %214, %179 : vector<1x16x16x4xf32>
    %216 = arith.addf %212, %215 : vector<1x16x16x4xf32>
    %217 = arith.addf %204, %216 : vector<1x16x16x4xf32>
    %c0_41 = arith.constant 0 : index
    %c0_42 = arith.constant 0 : index
    %c0_43 = arith.constant 0 : index
    %c0_44 = arith.constant 0 : index
    %218 = vector.load %arg4[%c0_41, %c0_42, %c0_43, %c0_44] : memref<1x16x16x4xf32, #tpu.memory_space<vmem>>, vector<1x16x16x4xf32>
    tpu.vector_store %arg4[%c0_41, %c0_42, %c0_43, %c0_44], %217 {strides = array<i32>} : memref<1x16x16x4xf32, #tpu.memory_space<vmem>>, vector<1x16x16x4xf32>,
    return
  }
  func.func @transform_0(%arg0: i32) -> i32 {
    %c0_i32 = arith.constant 0 : i32
    %c0_i32_0 = arith.constant 0 : i32
    return %c0_i32 : i32
  }
  func.func @transform_1(%arg0: i32) -> (i32, i32, i32, i32) {
    %c0_i32 = arith.constant 0 : i32
    %c0_i32_0 = arith.constant 0 : i32
    %c0_i32_1 = arith.constant 0 : i32
    %c0_i32_2 = arith.constant 0 : i32
    return %arg0, %c0_i32, %c0_i32_0, %c0_i32_1 : i32, i32, i32, i32
  }
  func.func @transform_2(%arg0: i32) -> (i32, i32, i32) {
    %c0_i32 = arith.constant 0 : i32
    %c0_i32_0 = arith.constant 0 : i32
    %c0_i32_1 = arith.constant 0 : i32
    %c0_i32_2 = arith.constant 0 : i32
    return %c0_i32, %c0_i32_0, %c0_i32_1 : i32, i32, i32
  }
  func.func @transform_3(%arg0: i32) -> (i32, i32, i32, i32) {
    %c0_i32 = arith.constant 0 : i32
    %c0_i32_0 = arith.constant 0 : i32
    %c0_i32_1 = arith.constant 0 : i32
    %c0_i32_2 = arith.constant 0 : i32
    return %arg0, %c0_i32, %c0_i32_0, %c0_i32_1 : i32, i32, i32, i32
  }
}

</mosaic_0001>

<llo_original>
// kernel: tpu_custom_call.1
$region0: #{tpu_custom_call.1}
  #allocation0 [shape = 'u32[]', space=smem, size = 0x4, offset = 0x4, fixed_abs, tag = 'smem constant byte address 0x4 - core index']
  #allocation1 [shape = 'u32[72,128]{1,0:T(1,128)}', space=vmem, size = 0x9000, scoped, tag = 'internal scratch']
  %s0 = inlined_call_operand.vmem [shape: f32[12], index: 0, kind: input, shape index: {}]
  %s1 = inlined_call_operand.vmem [shape: f32[2,16,16,4], index: 1, kind: input, shape index: {}]
  %s2 = inlined_call_operand.vmem [shape: bf16[6,36,4], index: 2, kind: input, shape index: {}]
  %s3 = inlined_call_operand.vmem [shape: f32[2,16,16,4], index: 3, kind: output, shape index: {}]
  %s4 = sld [smem:[#allocation0]]
  $region49: #{tpu_custom_call.1} parent=0
    _
  %s6 = ssub.s32 1, %s4
  %s7 = scalar_select 0, %s6, %s4
  $region1: #{tpu_custom_call.1} parent=0
    #allocation2 [shape = 'u8[512]{0}', space=smem, size = 0x200, scoped, tag = 'input window, operand 0, single buffered']
    #allocation3 [shape = 's32[2]{0}', space=sflag, size = 0x8, scoped, tag = 'scoped memory for tpu_custom_call.1']
    %8 = vsyncpa [#allocation3], 0
    loop: start=0, step=1, limit=4
    $region2: #{tpu_custom_call.1} parent=1 // loop_pre_header
      _
    $region3: #{tpu_custom_call.1} parent=1 // loop_header
      %s10 = sphi 0, %s14
      %p11 = scmp.ge.s32.totalorder %s10, 4
      %s18 = sphi 0, %s18
      %s20 = sphi 0, %s18
      %s21 = sphi 0, %s20
      %s35 = sphi 0, %s21
      %s41 = sphi 0, %s43
      %s44 = sphi 0, %s41
      %s45 = sphi 0, %s44
      %s61 = sphi 0, %s45
      %s65 = sphi 0, %s65
      %s67 = sphi 0, %s65
      %s68 = sphi 0, %s67
      %s82 = sphi 0, %s68
      %s88 = sphi 0, %s90
      %s91 = sphi 0, %s88
      %s92 = sphi 0, %s91
      %s108 = sphi 0, %s92
    $region4: #{tpu_custom_call.1} parent=1 // loop_header_branch
      %13 = sbr.rel (%p11) target = $region8
    $region5: #{tpu_custom_call.1} parent=1 // loop_body
      %s15 = ssub.s32 %s10, 1
      %s16 = ssub.s32 %s10, 2
      %s17 = sadd.s32 %s10, 1
      %s19 = sadd.s32 %s18, 1
      %p22 = scmp.eq.s32.totalorder %s10, 1
      %p23 = scmp.ne.s32.totalorder %s18, %s20
      %p24 = scmp.eq.s32.totalorder %s10, 0
      %p25 = por %p23, %p24
      %p26 = scmp.ne.s32.totalorder %s18, %s20
      %p27 = scmp.eq.s32.totalorder %s15, 1
      %p28 = por %p26, %p27
      %p29 = scmp.ne.s32.totalorder %s20, %s21
      %p30 = scmp.eq.s32.totalorder %s15, 0
      %p31 = por %p29, %p30
      %p32 = scmp.ne.s32.totalorder %s20, %s21
      %p33 = scmp.eq.s32.totalorder %s16, 1
      %p34 = por %p32, %p33
      %p36 = scmp.ne.s32.totalorder %s21, %s35
      %p37 = scmp.eq.s32.totalorder %s16, 0
      %p38 = por %p36, %p37
      %s39 = ssub.s32 %s10, %s17
      %p40 = scmp.eq.s32.totalorder %s39, 0
      %s42 = sadd.s32 %s41, 1
      %s43 = scalar_select %p40, %s41, %s42
      %p46 = pneg %p40
      %p47 = scmp.eq.s32.totalorder %s10, 1
      %p48 = por %p46, %p47
      %p49 = scmp.ne.s32.totalorder %s41, %s44
      %p50 = scmp.eq.s32.totalorder %s10, 0
      %p51 = por %p49, %p50
      %p52 = scmp.ne.s32.totalorder %s41, %s44
      %p53 = scmp.eq.s32.totalorder %s15, 1
      %p54 = por %p52, %p53
      %p55 = scmp.ne.s32.totalorder %s44, %s45
      %p56 = scmp.eq.s32.totalorder %s15, 0
      %p57 = por %p55, %p56
      %p58 = scmp.ne.s32.totalorder %s44, %s45
      %p59 = scmp.eq.s32.totalorder %s16, 1
      %p60 = por %p58, %p59
      %p62 = scmp.ne.s32.totalorder %s45, %s61
      %p63 = scmp.eq.s32.totalorder %s16, 0
      %p64 = por %p62, %p63
      %s66 = sadd.s32 %s65, 1
      %p69 = scmp.eq.s32.totalorder %s10, 1
      %p70 = scmp.ne.s32.totalorder %s65, %s67
      %p71 = scmp.eq.s32.totalorder %s10, 0
      %p72 = por %p70, %p71
      %p73 = scmp.ne.s32.totalorder %s65, %s67
      %p74 = scmp.eq.s32.totalorder %s15, 1
      %p75 = por %p73, %p74
      %p76 = scmp.ne.s32.totalorder %s67, %s68
      %p77 = scmp.eq.s32.totalorder %s15, 0
      %p78 = por %p76, %p77
      %p79 = scmp.ne.s32.totalorder %s67, %s68
      %p80 = scmp.eq.s32.totalorder %s16, 1
      %p81 = por %p79, %p80
      %p83 = scmp.ne.s32.totalorder %s68, %s82
      %p84 = scmp.eq.s32.totalorder %s16, 0
      %p85 = por %p83, %p84
      %s86 = ssub.s32 %s10, %s17
      %p87 = scmp.eq.s32.totalorder %s86, 0
      %s89 = sadd.s32 %s88, 1
      %s90 = scalar_select %p87, %s88, %s89
      %p93 = pneg %p87
      %p94 = scmp.eq.s32.totalorder %s10, 1
      %p95 = por %p93, %p94
      %p96 = scmp.ne.s32.totalorder %s88, %s91
      %p97 = scmp.eq.s32.totalorder %s10, 0
      %p98 = por %p96, %p97
      %p99 = scmp.ne.s32.totalorder %s88, %s91
      %p100 = scmp.eq.s32.totalorder %s15, 1
      %p101 = por %p99, %p100
      %p102 = scmp.ne.s32.totalorder %s91, %s92
      %p103 = scmp.eq.s32.totalorder %s15, 0
      %p104 = por %p102, %p103
      %p105 = scmp.ne.s32.totalorder %s91, %s92
      %p106 = scmp.eq.s32.totalorder %s16, 1
      %p107 = por %p105, %p106
      %p109 = scmp.ne.s32.totalorder %s92, %s108
      %p110 = scmp.eq.s32.totalorder %s16, 0
      %p111 = por %p109, %p110
      %p112 = scmp.le.s32.totalorder 1, %s10
      %p113 = scmp.lt.s32.totalorder %s10, 3
      %p114 = pnand %p112, %p113
      %p115 = pneg %p114
      // Predicated region
      $region9: #{tpu_custom_call.1} parent=5 // pred_check
        _
      $region10: #{tpu_custom_call.1} parent=5 // pred_check_branch
        %117 = sbr.rel (%p114) target = $region12
      $region11: #{tpu_custom_call.1} parent=5 // pred_region
        %s118 = ssub.s32 %s10, 1
        // Predicated region
        $region13: #{tpu_custom_call.1} parent=11 // pred_check
          %p119 = pneg %p31
        $region14: #{tpu_custom_call.1} parent=11 // pred_check_branch
          %121 = sbr.rel (%p119) target = $region16
        $region15: #{tpu_custom_call.1} parent=11 // pred_region
          %123 = vsyncadd [#allocation3], 0
          %s125 = sshll.u32 %s0, 4
          %s126 = int_to_ptr.vmem [resolvable:$true] %s125
          %128 = dma.vmem_to_smem %s126, 16, [#allocation2], [#allocation3]
        $region16: #{tpu_custom_call.1} parent=11 // pred_fallthru
          _
        // Predicated region
        $region17: #{tpu_custom_call.1} parent=11 // pred_check
          %p129 = pneg %p78
        $region18: #{tpu_custom_call.1} parent=11 // pred_check_branch
          %131 = sbr.rel (%p129) target = $region20
        $region19: #{tpu_custom_call.1} parent=11 // pred_region
          _
        $region20: #{tpu_custom_call.1} parent=11 // pred_fallthru
          _
      $region12: #{tpu_custom_call.1} parent=5 // pred_fallthru
        _
      %p132 = scmp.lt.s32.totalorder %s10, 2
      // Predicated region
      $region21: #{tpu_custom_call.1} parent=5 // pred_check
        %p133 = pneg %p132
      $region22: #{tpu_custom_call.1} parent=5 // pred_check_branch
        %135 = sbr.rel (%p133) target = $region24
      $region23: #{tpu_custom_call.1} parent=5 // pred_region
        // Predicated region
        $region25: #{tpu_custom_call.1} parent=23 // pred_check
          %p136 = pneg %p51
        $region26: #{tpu_custom_call.1} parent=23 // pred_check_branch
          %138 = sbr.rel (%p136) target = $region28
        $region27: #{tpu_custom_call.1} parent=23 // pred_region
          %p139 = scmp.lt.s32.totalorder %s10, 1
          %s140 = scalar_select %p139, %s10, 1
          %s141 = smul.addr %s140, 32
          %s142 = smul.addr %s141, 8
          %s143 = scalar_lea.vmem %s1, %s142
        $region28: #{tpu_custom_call.1} parent=23 // pred_fallthru
          _
      $region24: #{tpu_custom_call.1} parent=5 // pred_fallthru
        _
      %p144 = scmp.le.s32.totalorder 1, %s10
      %p145 = scmp.lt.s32.totalorder %s10, 3
      %p146 = pnand %p144, %p145
      %p147 = pneg %p146
      // Predicated region
      $region29: #{tpu_custom_call.1} parent=5 // pred_check
        _
      $region30: #{tpu_custom_call.1} parent=5 // pred_check_branch
        %149 = sbr.rel (%p146) target = $region32
      $region31: #{tpu_custom_call.1} parent=5 // pred_region
        %s150 = ssub.s32 %s10, 1
        // Predicated region
        $region33: #{tpu_custom_call.1} parent=31 // pred_check
          %p151 = pneg %p31
        $region34: #{tpu_custom_call.1} parent=31 // pred_check_branch
          %153 = sbr.rel (%p151) target = $region36
        $region35: #{tpu_custom_call.1} parent=31 // pred_region
          %155 = dma.done [#allocation3], 16
        $region36: #{tpu_custom_call.1} parent=31 // pred_fallthru
          _
        %156 = sfence
        %p157 = pneg %p31
        %p158 = pneg %p28
        %p159 = scmp.lt.s32.totalorder %s15, 1
        %s160 = scalar_select %p159, %s15, 1
        %s161 = smul.addr %s160, 32
        %s162 = smul.addr %s161, 8
        %s163 = scalar_lea.vmem %s1, %s162
        %p164 = pneg %p57
        %p165 = pneg %p54
        %p166 = pneg %p78
        %p167 = pneg %p75
        %p168 = pneg %p104
        %p169 = pneg %p101
        %p170 = scmp.lt.s32.totalorder %s15, 1
        %s171 = scalar_select %p170, %s15, 1
        %s172 = smul.addr %s171, 32
        %s173 = smul.addr %s172, 8
        %s174 = scalar_lea.vmem %s3, %s173
        %p175 = scmp.lt.s32.totalorder %s15, 1
        %s176 = scalar_select %p175, %s15, 1
        %s177 = smul.addr %s176, 32
        %s178 = smul.addr %s177, 8
        %s179 = scalar_lea.vmem %s1, %s178
        %p180 = scmp.lt.s32.totalorder %s15, 1
        %s181 = scalar_select %p180, %s15, 1
        %s182 = smul.addr %s181, 32
        %s183 = smul.addr %s182, 8
        %s184 = scalar_lea.vmem %s3, %s183
        %v186 = vlaneseq
        %v187 = vshrl.u32 %v186, 7
        %v188 = vadd.s32 %v187, 8
        %v189 = vcvt.s32.f32 1
        %v190 = vcvt.s32.f32 0
        %v191 = vsub.f32 3.0, %v189
        %v192 = vsub.f32 3.0, %v190
        %v193 = vsub.f32 %v191, %v190
        %v194 = vsub.f32 %v192, %v190
        %v195 = vsub.f32 %v192, %v189
        %vm196 = vcmp.eq.s32.totalorder %v187, 0
        %vm197 = vcmp.eq.s32.totalorder %v188, 0
        %v198 = vsel %vm196, 1, 0
        %v199 = vsel %vm197, 1, 0
        %v200 = vcvt.s32.f32 %v198
        %v201 = vcvt.s32.f32 %v199
        %v202 = vsub.f32 3.0, %v200
        %v203 = vsub.f32 3.0, %v201
        %vm204 = vcmp.eq.s32.totalorder %v187, 15
        %vm205 = vcmp.eq.s32.totalorder %v188, 15
        %v206 = vsel %vm204, 1, 0
        %v207 = vsel %vm205, 1, 0
        %v208 = vcvt.s32.f32 %v206
        %v209 = vcvt.s32.f32 %v207
        %v210 = vsub.f32 %v202, %v208
        %v211 = vsub.f32 %v203, %v209
        %v212 = vmul.f32 %v193, %v210
        %v213 = vmul.f32 %v193, %v211
        %v214 = vmul.f32 %v194, %v210
        %v215 = vmul.f32 %v194, %v211
        %v216 = vmul.f32 %v195, %v210
        %v217 = vmul.f32 %v195, %v211
        %v218 = vrcp.pop %v212
        %v219 = vmul.f32 %v212, %v218
        %v220 = vsub.f32 1.0, %v219
        %v221 = vmul.f32 %v218, %v220
        %v222 = vadd.f32 %v218, %v221
        %vm223 = vweird.f32 %v212
        %vm224 = vweird.f32 %v218
        %vm225 = vmor %vm223, %vm224
        %v226 = vsel %vm225, %v218, %v222
        %v227 = vand.u32 2147483647, %v212
        %vm228 = vcmp.eq.f32.partialorder %v227, 8.507059e+37
        %v229 = vand.u32 %v212, 2147483648
        %v230 = vor.u32 1.1754944e-38, %v229
        %v231 = vsel %vm228, %v230, %v226
        %v232 = vmul.f32 1.0, %v231
        %v233 = vrcp.pop %v213
        %v234 = vmul.f32 %v213, %v233
        %v235 = vsub.f32 1.0, %v234
        %v236 = vmul.f32 %v233, %v235
        %v237 = vadd.f32 %v233, %v236
        %vm238 = vweird.f32 %v213
        %vm239 = vweird.f32 %v233
        %vm240 = vmor %vm238, %vm239
        %v241 = vsel %vm240, %v233, %v237
        %v242 = vand.u32 2147483647, %v213
        %vm243 = vcmp.eq.f32.partialorder %v242, 8.507059e+37
        %v244 = vand.u32 %v213, 2147483648
        %v245 = vor.u32 1.1754944e-38, %v244
        %v246 = vsel %vm243, %v245, %v241
        %v247 = vmul.f32 1.0, %v246
        %v248 = vrcp.pop %v214
        %v249 = vmul.f32 %v214, %v248
        %v250 = vsub.f32 1.0, %v249
        %v251 = vmul.f32 %v248, %v250
        %v252 = vadd.f32 %v248, %v251
        %vm253 = vweird.f32 %v214
        %vm254 = vweird.f32 %v248
        %vm255 = vmor %vm253, %vm254
        %v256 = vsel %vm255, %v248, %v252
        %v257 = vand.u32 2147483647, %v214
        %vm258 = vcmp.eq.f32.partialorder %v257, 8.507059e+37
        %v259 = vand.u32 %v214, 2147483648
        %v260 = vor.u32 1.1754944e-38, %v259
        %v261 = vsel %vm258, %v260, %v256
        %v262 = vmul.f32 1.0, %v261
        %v263 = vrcp.pop %v215
        %v264 = vmul.f32 %v215, %v263
        %v265 = vsub.f32 1.0, %v264
        %v266 = vmul.f32 %v263, %v265
        %v267 = vadd.f32 %v263, %v266
        %vm268 = vweird.f32 %v215
        %vm269 = vweird.f32 %v263
        %vm270 = vmor %vm268, %vm269
        %v271 = vsel %vm270, %v263, %v267
        %v272 = vand.u32 2147483647, %v215
        %vm273 = vcmp.eq.f32.partialorder %v272, 8.507059e+37
        %v274 = vand.u32 %v215, 2147483648
        %v275 = vor.u32 1.1754944e-38, %v274
        %v276 = vsel %vm273, %v275, %v271
        %v277 = vmul.f32 1.0, %v276
        %v278 = vrcp.pop %v216
        %v279 = vmul.f32 %v216, %v278
        %v280 = vsub.f32 1.0, %v279
        %v281 = vmul.f32 %v278, %v280
        %v282 = vadd.f32 %v278, %v281
        %vm283 = vweird.f32 %v216
        %vm284 = vweird.f32 %v278
        %vm285 = vmor %vm283, %vm284
        %v286 = vsel %vm285, %v278, %v282
        %v287 = vand.u32 2147483647, %v216
        %vm288 = vcmp.eq.f32.partialorder %v287, 8.507059e+37
        %v289 = vand.u32 %v216, 2147483648
        %v290 = vor.u32 1.1754944e-38, %v289
        %v291 = vsel %vm288, %v290, %v286
        %v292 = vmul.f32 1.0, %v291
        %v293 = vrcp.pop %v217
        %v294 = vmul.f32 %v217, %v293
        %v295 = vsub.f32 1.0, %v294
        %v296 = vmul.f32 %v293, %v295
        %v297 = vadd.f32 %v293, %v296
        %vm298 = vweird.f32 %v217
        %vm299 = vweird.f32 %v293
        %vm300 = vmor %vm298, %vm299
        %v301 = vsel %vm300, %v293, %v297
        %v302 = vand.u32 2147483647, %v217
        %vm303 = vcmp.eq.f32.partialorder %v302, 8.507059e+37
        %v304 = vand.u32 %v217, 2147483648
        %v305 = vor.u32 1.1754944e-38, %v304
        %v306 = vsel %vm303, %v305, %v301
        %v307 = vmul.f32 1.0, %v306
        %v308 = vld [vmem:[%s179] sm:$0xff]
        %v309 = vld [vmem:[%s179 + $0x8] sm:$0xff]
        %v310 = vld [vmem:[%s179 + $0x10] sm:$0xff]
        %v311 = vld [vmem:[%s179 + $0x18] sm:$0xff]
        %v312 = vld [vmem:[%s179 + $0x20] sm:$0xff]
        %v313 = vld [vmem:[%s179 + $0x28] sm:$0xff]
        %v314 = vld [vmem:[%s179 + $0x30] sm:$0xff]
        %v315 = vld [vmem:[%s179 + $0x38] sm:$0xff]
        %v316 = vld [vmem:[%s179 + $0x40] sm:$0xff]
        %v317 = vld [vmem:[%s179 + $0x48] sm:$0xff]
        %v318 = vld [vmem:[%s179 + $0x50] sm:$0xff]
        %v319 = vld [vmem:[%s179 + $0x58] sm:$0xff]
        %v320 = vld [vmem:[%s179 + $0x60] sm:$0xff]
        %v321 = vld [vmem:[%s179 + $0x68] sm:$0xff]
        %v322 = vld [vmem:[%s179 + $0x70] sm:$0xff]
        %v323 = vld [vmem:[%s179 + $0x78] sm:$0xff]
        %v324 = vld [vmem:[%s179 + $0x80] sm:$0xff]
        %v325 = vld [vmem:[%s179 + $0x88] sm:$0xff]
        %v326 = vld [vmem:[%s179 + $0x90] sm:$0xff]
        %v327 = vld [vmem:[%s179 + $0x98] sm:$0xff]
        %v328 = vld [vmem:[%s179 + $0xa0] sm:$0xff]
        %v329 = vld [vmem:[%s179 + $0xa8] sm:$0xff]
        %v330 = vld [vmem:[%s179 + $0xb0] sm:$0xff]
        %v331 = vld [vmem:[%s179 + $0xb8] sm:$0xff]
        %v332 = vld [vmem:[%s179 + $0xc0] sm:$0xff]
        %v333 = vld [vmem:[%s179 + $0xc8] sm:$0xff]
        %v334 = vld [vmem:[%s179 + $0xd0] sm:$0xff]
        %v335 = vld [vmem:[%s179 + $0xd8] sm:$0xff]
        %v336 = vld [vmem:[%s179 + $0xe0] sm:$0xff]
        %v337 = vld [vmem:[%s179 + $0xe8] sm:$0xff]
        %v338 = vld [vmem:[%s179 + $0xf0] sm:$0xff]
        %v339 = vld [vmem:[%s179 + $0xf8] sm:$0xff]
        %vm372 = vcmask 1040384
        %v373 = vrot.slane %v308, 7
        %v374 = vrot.slane %v309, 7
        %v375 = vsel %vm372, %v373, %v374
        %v376 = vrot.slane %v310, 7
        %v377 = vrot.slane %v311, 7
        %v378 = vsel %vm372, %v376, %v377
        %v379 = vrot.slane %v312, 7
        %v380 = vrot.slane %v313, 7
        %v381 = vsel %vm372, %v379, %v380
        %v382 = vrot.slane %v314, 7
        %v383 = vrot.slane %v315, 7
        %v384 = vsel %vm372, %v382, %v383
        %v385 = vrot.slane %v316, 7
        %v386 = vrot.slane %v317, 7
        %v387 = vsel %vm372, %v385, %v386
        %v388 = vrot.slane %v318, 7
        %v389 = vrot.slane %v319, 7
        %v390 = vsel %vm372, %v388, %v389
        %v391 = vrot.slane %v320, 7
        %v392 = vrot.slane %v321, 7
        %v393 = vsel %vm372, %v391, %v392
        %v394 = vrot.slane %v322, 7
        %v395 = vrot.slane %v323, 7
        %v396 = vsel %vm372, %v394, %v395
        %v397 = vrot.slane %v324, 7
        %v398 = vrot.slane %v325, 7
        %v399 = vsel %vm372, %v397, %v398
        %v400 = vrot.slane %v326, 7
        %v401 = vrot.slane %v327, 7
        %v402 = vsel %vm372, %v400, %v401
        %v403 = vrot.slane %v328, 7
        %v404 = vrot.slane %v329, 7
        %v405 = vsel %vm372, %v403, %v404
        %v406 = vrot.slane %v330, 7
        %v407 = vrot.slane %v331, 7
        %v408 = vsel %vm372, %v406, %v407
        %v409 = vrot.slane %v332, 7
        %v410 = vrot.slane %v333, 7
        %v411 = vsel %vm372, %v409, %v410
        %v412 = vrot.slane %v334, 7
        %v413 = vrot.slane %v335, 7
        %v414 = vsel %vm372, %v412, %v413
        %v415 = vrot.slane %v336, 7
        %v416 = vrot.slane %v337, 7
        %v417 = vsel %vm372, %v415, %v416
        %v418 = vrot.slane %v338, 7
        %v419 = vrot.slane %v339, 7
        %v420 = vsel %vm372, %v418, %v419
        %v469 = vsel %vm372, 0.0, %v373
        %v470 = vsel %vm372, 0.0, %v376
        %v471 = vsel %vm372, 0.0, %v379
        %v472 = vsel %vm372, 0.0, %v382
        %v473 = vsel %vm372, 0.0, %v385
        %v474 = vsel %vm372, 0.0, %v388
        %v475 = vsel %vm372, 0.0, %v391
        %v476 = vsel %vm372, 0.0, %v394
        %v477 = vsel %vm372, 0.0, %v397
        %v478 = vsel %vm372, 0.0, %v400
        %v479 = vsel %vm372, 0.0, %v403
        %v480 = vsel %vm372, 0.0, %v406
        %v481 = vsel %vm372, 0.0, %v409
        %v482 = vsel %vm372, 0.0, %v412
        %v483 = vsel %vm372, 0.0, %v415
        %v484 = vsel %vm372, 0.0, %v418
        %v485 = vsel %vm372, %v374, 0.0
        %v486 = vsel %vm372, %v377, 0.0
        %v487 = vsel %vm372, %v380, 0.0
        %v488 = vsel %vm372, %v383, 0.0
        %v489 = vsel %vm372, %v386, 0.0
        %v490 = vsel %vm372, %v389, 0.0
        %v491 = vsel %vm372, %v392, 0.0
        %v492 = vsel %vm372, %v395, 0.0
        %v493 = vsel %vm372, %v398, 0.0
        %v494 = vsel %vm372, %v401, 0.0
        %v495 = vsel %vm372, %v404, 0.0
        %v496 = vsel %vm372, %v407, 0.0
        %v497 = vsel %vm372, %v410, 0.0
        %v498 = vsel %vm372, %v413, 0.0
        %v499 = vsel %vm372, %v416, 0.0
        %v500 = vsel %vm372, %v419, 0.0
        %v501 = vmax.f32 %v469, 0.0
        %v502 = vmax.f32 %v375, 0.0
        %v503 = vmax.f32 %v485, 0.0
        %v504 = vmax.f32 %v470, 0.0
        %v505 = vmax.f32 %v378, 0.0
        %v506 = vmax.f32 %v486, 0.0
        %v507 = vmax.f32 %v471, 0.0
        %v508 = vmax.f32 %v381, 0.0
        %v509 = vmax.f32 %v487, 0.0
        %v510 = vmax.f32 %v472, 0.0
        %v511 = vmax.f32 %v384, 0.0
        %v512 = vmax.f32 %v488, 0.0
        %v513 = vmax.f32 %v473, 0.0
        %v514 = vmax.f32 %v387, 0.0
        %v515 = vmax.f32 %v489, 0.0
        %v516 = vmax.f32 %v474, 0.0
        %v517 = vmax.f32 %v390, 0.0
        %v518 = vmax.f32 %v490, 0.0
        %v519 = vmax.f32 %v475, 0.0
        %v520 = vmax.f32 %v393, 0.0
        %v521 = vmax.f32 %v491, 0.0
        %v522 = vmax.f32 %v476, 0.0
        %v523 = vmax.f32 %v396, 0.0
        %v524 = vmax.f32 %v492, 0.0
        %v525 = vmax.f32 %v477, 0.0
        %v526 = vmax.f32 %v399, 0.0
        %v527 = vmax.f32 %v493, 0.0
        %v528 = vmax.f32 %v478, 0.0
        %v529 = vmax.f32 %v402, 0.0
        %v530 = vmax.f32 %v494, 0.0
        %v531 = vmax.f32 %v479, 0.0
        %v532 = vmax.f32 %v405, 0.0
        %v533 = vmax.f32 %v495, 0.0
        %v534 = vmax.f32 %v480, 0.0
        %v535 = vmax.f32 %v408, 0.0
        %v536 = vmax.f32 %v496, 0.0
        %v537 = vmax.f32 %v481, 0.0
        %v538 = vmax.f32 %v411, 0.0
        %v539 = vmax.f32 %v497, 0.0
        %v540 = vmax.f32 %v482, 0.0
        %v541 = vmax.f32 %v414, 0.0
        %v542 = vmax.f32 %v498, 0.0
        %v543 = vmax.f32 %v483, 0.0
        %v544 = vmax.f32 %v417, 0.0
        %v545 = vmax.f32 %v499, 0.0
        %v546 = vmax.f32 %v484, 0.0
        %v547 = vmax.f32 %v420, 0.0
        %v548 = vmax.f32 %v500, 0.0
        %vm595 = vcmask 1046528
        %v596 = vrot.slane 0.0, 1
        %v597 = vsel %vm595, %v596, %v596
        %v598 = vrot.slane %v501, 1
        %v599 = vrot.slane %v502, 1
        %v600 = vsel %vm595, %v598, %v599
        %v601 = vrot.slane %v503, 1
        %v602 = vsel %vm595, %v599, %v601
        %v603 = vrot.slane %v504, 1
        %v604 = vrot.slane %v505, 1
        %v605 = vsel %vm595, %v603, %v604
        %v606 = vrot.slane %v506, 1
        %v607 = vsel %vm595, %v604, %v606
        %v608 = vrot.slane %v507, 1
        %v609 = vrot.slane %v508, 1
        %v610 = vsel %vm595, %v608, %v609
        %v611 = vrot.slane %v509, 1
        %v612 = vsel %vm595, %v609, %v611
        %v613 = vrot.slane %v510, 1
        %v614 = vrot.slane %v511, 1
        %v615 = vsel %vm595, %v613, %v614
        %v616 = vrot.slane %v512, 1
        %v617 = vsel %vm595, %v614, %v616
        %v618 = vrot.slane %v513, 1
        %v619 = vrot.slane %v514, 1
        %v620 = vsel %vm595, %v618, %v619
        %v621 = vrot.slane %v515, 1
        %v622 = vsel %vm595, %v619, %v621
        %v623 = vrot.slane %v516, 1
        %v624 = vrot.slane %v517, 1
        %v625 = vsel %vm595, %v623, %v624
        %v626 = vrot.slane %v518, 1
        %v627 = vsel %vm595, %v624, %v626
        %v628 = vrot.slane %v519, 1
        %v629 = vrot.slane %v520, 1
        %v630 = vsel %vm595, %v628, %v629
        %v631 = vrot.slane %v521, 1
        %v632 = vsel %vm595, %v629, %v631
        %v633 = vrot.slane %v522, 1
        %v634 = vrot.slane %v523, 1
        %v635 = vsel %vm595, %v633, %v634
        %v636 = vrot.slane %v524, 1
        %v637 = vsel %vm595, %v634, %v636
        %v638 = vrot.slane %v525, 1
        %v639 = vrot.slane %v526, 1
        %v640 = vsel %vm595, %v638, %v639
        %v641 = vrot.slane %v527, 1
        %v642 = vsel %vm595, %v639, %v641
        %v643 = vrot.slane %v528, 1
        %v644 = vrot.slane %v529, 1
        %v645 = vsel %vm595, %v643, %v644
        %v646 = vrot.slane %v530, 1
        %v647 = vsel %vm595, %v644, %v646
        %v648 = vrot.slane %v531, 1
        %v649 = vrot.slane %v532, 1
        %v650 = vsel %vm595, %v648, %v649
        %v651 = vrot.slane %v533, 1
        %v652 = vsel %vm595, %v649, %v651
        %v653 = vrot.slane %v534, 1
        %v654 = vrot.slane %v535, 1
        %v655 = vsel %vm595, %v653, %v654
        %v656 = vrot.slane %v536, 1
        %v657 = vsel %vm595, %v654, %v656
        %v658 = vrot.slane %v537, 1
        %v659 = vrot.slane %v538, 1
        %v660 = vsel %vm595, %v658, %v659
        %v661 = vrot.slane %v539, 1
        %v662 = vsel %vm595, %v659, %v661
        %v663 = vrot.slane %v540, 1
        %v664 = vrot.slane %v541, 1
        %v665 = vsel %vm595, %v663, %v664
        %v666 = vrot.slane %v542, 1
        %v667 = vsel %vm595, %v664, %v666
        %v668 = vrot.slane %v543, 1
        %v669 = vrot.slane %v544, 1
        %v670 = vsel %vm595, %v668, %v669
        %v671 = vrot.slane %v545, 1
        %v672 = vsel %vm595, %v669, %v671
        %vm673 = vcmask 1045504
        %v674 = vrot.slane 0.0, 2
        %v675 = vsel %vm673, %v674, %v674
        %v676 = vrot.slane %v501, 2
        %v677 = vrot.slane %v502, 2
        %v678 = vsel %vm673, %v676, %v677
        %v679 = vrot.slane %v503, 2
        %v680 = vsel %vm673, %v677, %v679
        %v681 = vrot.slane %v504, 2
        %v682 = vrot.slane %v505, 2
        %v683 = vsel %vm673, %v681, %v682
        %v684 = vrot.slane %v506, 2
        %v685 = vsel %vm673, %v682, %v684
        %v686 = vrot.slane %v507, 2
        %v687 = vrot.slane %v508, 2
        %v688 = vsel %vm673, %v686, %v687
        %v689 = vrot.slane %v509, 2
        %v690 = vsel %vm673, %v687, %v689
        %v691 = vrot.slane %v510, 2
        %v692 = vrot.slane %v511, 2
        %v693 = vsel %vm673, %v691, %v692
        %v694 = vrot.slane %v512, 2
        %v695 = vsel %vm673, %v692, %v694
        %v696 = vrot.slane %v513, 2
        %v697 = vrot.slane %v514, 2
        %v698 = vsel %vm673, %v696, %v697
        %v699 = vrot.slane %v515, 2
        %v700 = vsel %vm673, %v697, %v699
        %v701 = vrot.slane %v516, 2
        %v702 = vrot.slane %v517, 2
        %v703 = vsel %vm673, %v701, %v702
        %v704 = vrot.slane %v518, 2
        %v705 = vsel %vm673, %v702, %v704
        %v706 = vrot.slane %v519, 2
        %v707 = vrot.slane %v520, 2
        %v708 = vsel %vm673, %v706, %v707
        %v709 = vrot.slane %v521, 2
        %v710 = vsel %vm673, %v707, %v709
        %v711 = vrot.slane %v522, 2
        %v712 = vrot.slane %v523, 2
        %v713 = vsel %vm673, %v711, %v712
        %v714 = vrot.slane %v524, 2
        %v715 = vsel %vm673, %v712, %v714
        %v716 = vrot.slane %v525, 2
        %v717 = vrot.slane %v526, 2
        %v718 = vsel %vm673, %v716, %v717
        %v719 = vrot.slane %v527, 2
        %v720 = vsel %vm673, %v717, %v719
        %v721 = vrot.slane %v528, 2
        %v722 = vrot.slane %v529, 2
        %v723 = vsel %vm673, %v721, %v722
        %v724 = vrot.slane %v530, 2
        %v725 = vsel %vm673, %v722, %v724
        %v726 = vrot.slane %v531, 2
        %v727 = vrot.slane %v532, 2
        %v728 = vsel %vm673, %v726, %v727
        %v729 = vrot.slane %v533, 2
        %v730 = vsel %vm673, %v727, %v729
        %v731 = vrot.slane %v534, 2
        %v732 = vrot.slane %v535, 2
        %v733 = vsel %vm673, %v731, %v732
        %v734 = vrot.slane %v536, 2
        %v735 = vsel %vm673, %v732, %v734
        %v736 = vrot.slane %v537, 2
        %v737 = vrot.slane %v538, 2
        %v738 = vsel %vm673, %v736, %v737
        %v739 = vrot.slane %v539, 2
        %v740 = vsel %vm673, %v737, %v739
        %v741 = vrot.slane %v540, 2
        %v742 = vrot.slane %v541, 2
        %v743 = vsel %vm673, %v741, %v742
        %v744 = vrot.slane %v542, 2
        %v745 = vsel %vm673, %v742, %v744
        %v746 = vrot.slane %v543, 2
        %v747 = vrot.slane %v544, 2
        %v748 = vsel %vm673, %v746, %v747
        %v749 = vrot.slane %v545, 2
        %v750 = vsel %vm673, %v747, %v749
        %v754 = vrot.slane %v546, 1
        %v755 = vrot.slane %v547, 1
        %v756 = vsel %vm595, %v754, %v755
        %v757 = vrot.slane %v548, 1
        %v758 = vsel %vm595, %v755, %v757
        %v759 = vrot.slane %v546, 2
        %v760 = vrot.slane %v547, 2
        %v761 = vsel %vm673, %v759, %v760
        %v762 = vrot.slane %v548, 2
        %v763 = vsel %vm673, %v760, %v762
        %764 = vrot.lane.b32.xlu0 %v597, 4
        %v765 = vpop.permute.xlu0 %764
        %766 = vrot.lane.b32.xlu0 %v600, 4
        %v767 = vpop.permute.xlu0 %766
        %768 = vrot.lane.b32.xlu0 %v602, 4
        %v769 = vpop.permute.xlu0 %768
        %770 = vrot.lane.b32.xlu0 %v605, 4
        %v771 = vpop.permute.xlu0 %770
        %772 = vrot.lane.b32.xlu0 %v607, 4
        %v773 = vpop.permute.xlu0 %772
        %774 = vrot.lane.b32.xlu0 %v610, 4
        %v775 = vpop.permute.xlu0 %774
        %776 = vrot.lane.b32.xlu0 %v612, 4
        %v777 = vpop.permute.xlu0 %776
        %778 = vrot.lane.b32.xlu0 %v615, 4
        %v779 = vpop.permute.xlu0 %778
        %780 = vrot.lane.b32.xlu0 %v617, 4
        %v781 = vpop.permute.xlu0 %780
        %782 = vrot.lane.b32.xlu0 %v620, 4
        %v783 = vpop.permute.xlu0 %782
        %784 = vrot.lane.b32.xlu0 %v622, 4
        %v785 = vpop.permute.xlu0 %784
        %786 = vrot.lane.b32.xlu0 %v625, 4
        %v787 = vpop.permute.xlu0 %786
        %788 = vrot.lane.b32.xlu0 %v627, 4
        %v789 = vpop.permute.xlu0 %788
        %790 = vrot.lane.b32.xlu0 %v630, 4
        %v791 = vpop.permute.xlu0 %790
        %792 = vrot.lane.b32.xlu0 %v632, 4
        %v793 = vpop.permute.xlu0 %792
        %794 = vrot.lane.b32.xlu0 %v635, 4
        %v795 = vpop.permute.xlu0 %794
        %796 = vrot.lane.b32.xlu0 %v637, 4
        %v797 = vpop.permute.xlu0 %796
        %798 = vrot.lane.b32.xlu0 %v640, 4
        %v799 = vpop.permute.xlu0 %798
        %800 = vrot.lane.b32.xlu0 %v642, 4
        %v801 = vpop.permute.xlu0 %800
        %802 = vrot.lane.b32.xlu0 %v645, 4
        %v803 = vpop.permute.xlu0 %802
        %804 = vrot.lane.b32.xlu0 %v647, 4
        %v805 = vpop.permute.xlu0 %804
        %806 = vrot.lane.b32.xlu0 %v650, 4
        %v807 = vpop.permute.xlu0 %806
        %808 = vrot.lane.b32.xlu0 %v652, 4
        %v809 = vpop.permute.xlu0 %808
        %810 = vrot.lane.b32.xlu0 %v655, 4
        %v811 = vpop.permute.xlu0 %810
        %812 = vrot.lane.b32.xlu0 %v657, 4
        %v813 = vpop.permute.xlu0 %812
        %814 = vrot.lane.b32.xlu0 %v660, 4
        %v815 = vpop.permute.xlu0 %814
        %816 = vrot.lane.b32.xlu0 %v662, 4
        %v817 = vpop.permute.xlu0 %816
        %818 = vrot.lane.b32.xlu0 %v665, 4
        %v819 = vpop.permute.xlu0 %818
        %820 = vrot.lane.b32.xlu0 %v667, 4
        %v821 = vpop.permute.xlu0 %820
        %822 = vrot.lane.b32.xlu0 %v670, 4
        %v823 = vpop.permute.xlu0 %822
        %824 = vrot.lane.b32.xlu0 %v672, 4
        %v825 = vpop.permute.xlu0 %824
        %857 = vrot.lane.b32.xlu0 %v675, 8
        %v858 = vpop.permute.xlu0 %857
        %859 = vrot.lane.b32.xlu0 %v678, 8
        %v860 = vpop.permute.xlu0 %859
        %861 = vrot.lane.b32.xlu0 %v680, 8
        %v862 = vpop.permute.xlu0 %861
        %863 = vrot.lane.b32.xlu0 %v683, 8
        %v864 = vpop.permute.xlu0 %863
        %865 = vrot.lane.b32.xlu0 %v685, 8
        %v866 = vpop.permute.xlu0 %865
        %867 = vrot.lane.b32.xlu0 %v688, 8
        %v868 = vpop.permute.xlu0 %867
        %869 = vrot.lane.b32.xlu0 %v690, 8
        %v870 = vpop.permute.xlu0 %869
        %871 = vrot.lane.b32.xlu0 %v693, 8
        %v872 = vpop.permute.xlu0 %871
        %873 = vrot.lane.b32.xlu0 %v695, 8
        %v874 = vpop.permute.xlu0 %873
        %875 = vrot.lane.b32.xlu0 %v698, 8
        %v876 = vpop.permute.xlu0 %875
        %877 = vrot.lane.b32.xlu0 %v700, 8
        %v878 = vpop.permute.xlu0 %877
        %879 = vrot.lane.b32.xlu0 %v703, 8
        %v880 = vpop.permute.xlu0 %879
        %881 = vrot.lane.b32.xlu0 %v705, 8
        %v882 = vpop.permute.xlu0 %881
        %883 = vrot.lane.b32.xlu0 %v708, 8
        %v884 = vpop.permute.xlu0 %883
        %885 = vrot.lane.b32.xlu0 %v710, 8
        %v886 = vpop.permute.xlu0 %885
        %887 = vrot.lane.b32.xlu0 %v713, 8
        %v888 = vpop.permute.xlu0 %887
        %889 = vrot.lane.b32.xlu0 %v715, 8
        %v890 = vpop.permute.xlu0 %889
        %891 = vrot.lane.b32.xlu0 %v718, 8
        %v892 = vpop.permute.xlu0 %891
        %893 = vrot.lane.b32.xlu0 %v720, 8
        %v894 = vpop.permute.xlu0 %893
        %895 = vrot.lane.b32.xlu0 %v723, 8
        %v896 = vpop.permute.xlu0 %895
        %897 = vrot.lane.b32.xlu0 %v725, 8
        %v898 = vpop.permute.xlu0 %897
        %899 = vrot.lane.b32.xlu0 %v728, 8
        %v900 = vpop.permute.xlu0 %899
        %901 = vrot.lane.b32.xlu0 %v730, 8
        %v902 = vpop.permute.xlu0 %901
        %903 = vrot.lane.b32.xlu0 %v733, 8
        %v904 = vpop.permute.xlu0 %903
        %905 = vrot.lane.b32.xlu0 %v735, 8
        %v906 = vpop.permute.xlu0 %905
        %907 = vrot.lane.b32.xlu0 %v738, 8
        %v908 = vpop.permute.xlu0 %907
        %909 = vrot.lane.b32.xlu0 %v740, 8
        %v910 = vpop.permute.xlu0 %909
        %911 = vrot.lane.b32.xlu0 %v743, 8
        %v912 = vpop.permute.xlu0 %911
        %913 = vrot.lane.b32.xlu0 %v745, 8
        %v914 = vpop.permute.xlu0 %913
        %915 = vrot.lane.b32.xlu0 %v748, 8
        %v916 = vpop.permute.xlu0 %915
        %917 = vrot.lane.b32.xlu0 %v750, 8
        %v918 = vpop.permute.xlu0 %917
        %950 = vrot.lane.b32.xlu0 %v501, 12
        %v951 = vpop.permute.xlu0 %950
        %952 = vrot.lane.b32.xlu0 %v502, 12
        %v953 = vpop.permute.xlu0 %952
        %954 = vrot.lane.b32.xlu0 %v504, 12
        %v955 = vpop.permute.xlu0 %954
        %956 = vrot.lane.b32.xlu0 %v505, 12
        %v957 = vpop.permute.xlu0 %956
        %958 = vrot.lane.b32.xlu0 %v507, 12
        %v959 = vpop.permute.xlu0 %958
        %960 = vrot.lane.b32.xlu0 %v508, 12
        %v961 = vpop.permute.xlu0 %960
        %962 = vrot.lane.b32.xlu0 %v510, 12
        %v963 = vpop.permute.xlu0 %962
        %964 = vrot.lane.b32.xlu0 %v511, 12
        %v965 = vpop.permute.xlu0 %964
        %966 = vrot.lane.b32.xlu0 %v513, 12
        %v967 = vpop.permute.xlu0 %966
        %968 = vrot.lane.b32.xlu0 %v514, 12
        %v969 = vpop.permute.xlu0 %968
        %970 = vrot.lane.b32.xlu0 %v516, 12
        %v971 = vpop.permute.xlu0 %970
        %972 = vrot.lane.b32.xlu0 %v517, 12
        %v973 = vpop.permute.xlu0 %972
        %974 = vrot.lane.b32.xlu0 %v519, 12
        %v975 = vpop.permute.xlu0 %974
        %976 = vrot.lane.b32.xlu0 %v520, 12
        %v977 = vpop.permute.xlu0 %976
        %978 = vrot.lane.b32.xlu0 %v522, 12
        %v979 = vpop.permute.xlu0 %978
        %980 = vrot.lane.b32.xlu0 %v523, 12
        %v981 = vpop.permute.xlu0 %980
        %982 = vrot.lane.b32.xlu0 %v525, 12
        %v983 = vpop.permute.xlu0 %982
        %984 = vrot.lane.b32.xlu0 %v526, 12
        %v985 = vpop.permute.xlu0 %984
        %986 = vrot.lane.b32.xlu0 %v528, 12
        %v987 = vpop.permute.xlu0 %986
        %988 = vrot.lane.b32.xlu0 %v529, 12
        %v989 = vpop.permute.xlu0 %988
        %990 = vrot.lane.b32.xlu0 %v531, 12
        %v991 = vpop.permute.xlu0 %990
        %992 = vrot.lane.b32.xlu0 %v532, 12
        %v993 = vpop.permute.xlu0 %992
        %994 = vrot.lane.b32.xlu0 %v534, 12
        %v995 = vpop.permute.xlu0 %994
        %996 = vrot.lane.b32.xlu0 %v535, 12
        %v997 = vpop.permute.xlu0 %996
        %998 = vrot.lane.b32.xlu0 %v537, 12
        %v999 = vpop.permute.xlu0 %998
        %1000 = vrot.lane.b32.xlu0 %v538, 12
        %v1001 = vpop.permute.xlu0 %1000
        %1002 = vrot.lane.b32.xlu0 %v540, 12
        %v1003 = vpop.permute.xlu0 %1002
        %1004 = vrot.lane.b32.xlu0 %v541, 12
        %v1005 = vpop.permute.xlu0 %1004
        %1006 = vrot.lane.b32.xlu0 %v543, 12
        %v1007 = vpop.permute.xlu0 %1006
        %1008 = vrot.lane.b32.xlu0 %v544, 12
        %v1009 = vpop.permute.xlu0 %1008
        %1010 = vrot.lane.b32.xlu0 %v546, 12
        %v1011 = vpop.permute.xlu0 %1010
        %1012 = vrot.lane.b32.xlu0 %v547, 12
        %v1013 = vpop.permute.xlu0 %1012
        %1046 = vrot.lane.b32.xlu0 %v600, 16
        %v1047 = vpop.permute.xlu0 %1046
        %1048 = vrot.lane.b32.xlu0 %v602, 16
        %v1049 = vpop.permute.xlu0 %1048
        %1050 = vrot.lane.b32.xlu0 %v605, 16
        %v1051 = vpop.permute.xlu0 %1050
        %1052 = vrot.lane.b32.xlu0 %v607, 16
        %v1053 = vpop.permute.xlu0 %1052
        %1054 = vrot.lane.b32.xlu0 %v610, 16
        %v1055 = vpop.permute.xlu0 %1054
        %1056 = vrot.lane.b32.xlu0 %v612, 16
        %v1057 = vpop.permute.xlu0 %1056
        %1058 = vrot.lane.b32.xlu0 %v615, 16
        %v1059 = vpop.permute.xlu0 %1058
        %1060 = vrot.lane.b32.xlu0 %v617, 16
        %v1061 = vpop.permute.xlu0 %1060
        %1062 = vrot.lane.b32.xlu0 %v620, 16
        %v1063 = vpop.permute.xlu0 %1062
        %1064 = vrot.lane.b32.xlu0 %v622, 16
        %v1065 = vpop.permute.xlu0 %1064
        %1066 = vrot.lane.b32.xlu0 %v625, 16
        %v1067 = vpop.permute.xlu0 %1066
        %1068 = vrot.lane.b32.xlu0 %v627, 16
        %v1069 = vpop.permute.xlu0 %1068
        %1070 = vrot.lane.b32.xlu0 %v630, 16
        %v1071 = vpop.permute.xlu0 %1070
        %1072 = vrot.lane.b32.xlu0 %v632, 16
        %v1073 = vpop.permute.xlu0 %1072
        %1074 = vrot.lane.b32.xlu0 %v635, 16
        %v1075 = vpop.permute.xlu0 %1074
        %1076 = vrot.lane.b32.xlu0 %v637, 16
        %v1077 = vpop.permute.xlu0 %1076
        %1078 = vrot.lane.b32.xlu0 %v640, 16
        %v1079 = vpop.permute.xlu0 %1078
        %1080 = vrot.lane.b32.xlu0 %v642, 16
        %v1081 = vpop.permute.xlu0 %1080
        %1082 = vrot.lane.b32.xlu0 %v645, 16
        %v1083 = vpop.permute.xlu0 %1082
        %1084 = vrot.lane.b32.xlu0 %v647, 16
        %v1085 = vpop.permute.xlu0 %1084
        %1086 = vrot.lane.b32.xlu0 %v650, 16
        %v1087 = vpop.permute.xlu0 %1086
        %1088 = vrot.lane.b32.xlu0 %v652, 16
        %v1089 = vpop.permute.xlu0 %1088
        %1090 = vrot.lane.b32.xlu0 %v655, 16
        %v1091 = vpop.permute.xlu0 %1090
        %1092 = vrot.lane.b32.xlu0 %v657, 16
        %v1093 = vpop.permute.xlu0 %1092
        %1094 = vrot.lane.b32.xlu0 %v660, 16
        %v1095 = vpop.permute.xlu0 %1094
        %1096 = vrot.lane.b32.xlu0 %v662, 16
        %v1097 = vpop.permute.xlu0 %1096
        %1098 = vrot.lane.b32.xlu0 %v665, 16
        %v1099 = vpop.permute.xlu0 %1098
        %1100 = vrot.lane.b32.xlu0 %v667, 16
        %v1101 = vpop.permute.xlu0 %1100
        %1102 = vrot.lane.b32.xlu0 %v670, 16
        %v1103 = vpop.permute.xlu0 %1102
        %1104 = vrot.lane.b32.xlu0 %v672, 16
        %v1105 = vpop.permute.xlu0 %1104
        %1106 = vrot.lane.b32.xlu0 %v756, 16
        %v1107 = vpop.permute.xlu0 %1106
        %1108 = vrot.lane.b32.xlu0 %v758, 16
        %v1109 = vpop.permute.xlu0 %1108
        %1142 = vrot.lane.b32.xlu0 %v678, 20
        %v1143 = vpop.permute.xlu0 %1142
        %1144 = vrot.lane.b32.xlu0 %v680, 20
        %v1145 = vpop.permute.xlu0 %1144
        %1146 = vrot.lane.b32.xlu0 %v683, 20
        %v1147 = vpop.permute.xlu0 %1146
        %1148 = vrot.lane.b32.xlu0 %v685, 20
        %v1149 = vpop.permute.xlu0 %1148
        %1150 = vrot.lane.b32.xlu0 %v688, 20
        %v1151 = vpop.permute.xlu0 %1150
        %1152 = vrot.lane.b32.xlu0 %v690, 20
        %v1153 = vpop.permute.xlu0 %1152
        %1154 = vrot.lane.b32.xlu0 %v693, 20
        %v1155 = vpop.permute.xlu0 %1154
        %1156 = vrot.lane.b32.xlu0 %v695, 20
        %v1157 = vpop.permute.xlu0 %1156
        %1158 = vrot.lane.b32.xlu0 %v698, 20
        %v1159 = vpop.permute.xlu0 %1158
        %1160 = vrot.lane.b32.xlu0 %v700, 20
        %v1161 = vpop.permute.xlu0 %1160
        %1162 = vrot.lane.b32.xlu0 %v703, 20
        %v1163 = vpop.permute.xlu0 %1162
        %1164 = vrot.lane.b32.xlu0 %v705, 20
        %v1165 = vpop.permute.xlu0 %1164
        %1166 = vrot.lane.b32.xlu0 %v708, 20
        %v1167 = vpop.permute.xlu0 %1166
        %1168 = vrot.lane.b32.xlu0 %v710, 20
        %v1169 = vpop.permute.xlu0 %1168
        %1170 = vrot.lane.b32.xlu0 %v713, 20
        %v1171 = vpop.permute.xlu0 %1170
        %1172 = vrot.lane.b32.xlu0 %v715, 20
        %v1173 = vpop.permute.xlu0 %1172
        %1174 = vrot.lane.b32.xlu0 %v718, 20
        %v1175 = vpop.permute.xlu0 %1174
        %1176 = vrot.lane.b32.xlu0 %v720, 20
        %v1177 = vpop.permute.xlu0 %1176
        %1178 = vrot.lane.b32.xlu0 %v723, 20
        %v1179 = vpop.permute.xlu0 %1178
        %1180 = vrot.lane.b32.xlu0 %v725, 20
        %v1181 = vpop.permute.xlu0 %1180
        %1182 = vrot.lane.b32.xlu0 %v728, 20
        %v1183 = vpop.permute.xlu0 %1182
        %1184 = vrot.lane.b32.xlu0 %v730, 20
        %v1185 = vpop.permute.xlu0 %1184
        %1186 = vrot.lane.b32.xlu0 %v733, 20
        %v1187 = vpop.permute.xlu0 %1186
        %1188 = vrot.lane.b32.xlu0 %v735, 20
        %v1189 = vpop.permute.xlu0 %1188
        %1190 = vrot.lane.b32.xlu0 %v738, 20
        %v1191 = vpop.permute.xlu0 %1190
        %1192 = vrot.lane.b32.xlu0 %v740, 20
        %v1193 = vpop.permute.xlu0 %1192
        %1194 = vrot.lane.b32.xlu0 %v743, 20
        %v1195 = vpop.permute.xlu0 %1194
        %1196 = vrot.lane.b32.xlu0 %v745, 20
        %v1197 = vpop.permute.xlu0 %1196
        %1198 = vrot.lane.b32.xlu0 %v748, 20
        %v1199 = vpop.permute.xlu0 %1198
        %1200 = vrot.lane.b32.xlu0 %v750, 20
        %v1201 = vpop.permute.xlu0 %1200
        %1202 = vrot.lane.b32.xlu0 %v761, 20
        %v1203 = vpop.permute.xlu0 %1202
        %1204 = vrot.lane.b32.xlu0 %v763, 20
        %v1205 = vpop.permute.xlu0 %1204
        %1238 = vrot.lane.b32.xlu0 %v504, 24
        %v1239 = vpop.permute.xlu0 %1238
        %1240 = vrot.lane.b32.xlu0 %v505, 24
        %v1241 = vpop.permute.xlu0 %1240
        %1242 = vrot.lane.b32.xlu0 %v507, 24
        %v1243 = vpop.permute.xlu0 %1242
        %1244 = vrot.lane.b32.xlu0 %v508, 24
        %v1245 = vpop.permute.xlu0 %1244
        %1246 = vrot.lane.b32.xlu0 %v510, 24
        %v1247 = vpop.permute.xlu0 %1246
        %1248 = vrot.lane.b32.xlu0 %v511, 24
        %v1249 = vpop.permute.xlu0 %1248
        %1250 = vrot.lane.b32.xlu0 %v513, 24
        %v1251 = vpop.permute.xlu0 %1250
        %1252 = vrot.lane.b32.xlu0 %v514, 24
        %v1253 = vpop.permute.xlu0 %1252
        %1254 = vrot.lane.b32.xlu0 %v516, 24
        %v1255 = vpop.permute.xlu0 %1254
        %1256 = vrot.lane.b32.xlu0 %v517, 24
        %v1257 = vpop.permute.xlu0 %1256
        %1258 = vrot.lane.b32.xlu0 %v519, 24
        %v1259 = vpop.permute.xlu0 %1258
        %1260 = vrot.lane.b32.xlu0 %v520, 24
        %v1261 = vpop.permute.xlu0 %1260
        %1262 = vrot.lane.b32.xlu0 %v522, 24
        %v1263 = vpop.permute.xlu0 %1262
        %1264 = vrot.lane.b32.xlu0 %v523, 24
        %v1265 = vpop.permute.xlu0 %1264
        %1266 = vrot.lane.b32.xlu0 %v525, 24
        %v1267 = vpop.permute.xlu0 %1266
        %1268 = vrot.lane.b32.xlu0 %v526, 24
        %v1269 = vpop.permute.xlu0 %1268
        %1270 = vrot.lane.b32.xlu0 %v528, 24
        %v1271 = vpop.permute.xlu0 %1270
        %1272 = vrot.lane.b32.xlu0 %v529, 24
        %v1273 = vpop.permute.xlu0 %1272
        %1274 = vrot.lane.b32.xlu0 %v531, 24
        %v1275 = vpop.permute.xlu0 %1274
        %1276 = vrot.lane.b32.xlu0 %v532, 24
        %v1277 = vpop.permute.xlu0 %1276
        %1278 = vrot.lane.b32.xlu0 %v534, 24
        %v1279 = vpop.permute.xlu0 %1278
        %1280 = vrot.lane.b32.xlu0 %v535, 24
        %v1281 = vpop.permute.xlu0 %1280
        %1282 = vrot.lane.b32.xlu0 %v537, 24
        %v1283 = vpop.permute.xlu0 %1282
        %1284 = vrot.lane.b32.xlu0 %v538, 24
        %v1285 = vpop.permute.xlu0 %1284
        %1286 = vrot.lane.b32.xlu0 %v540, 24
        %v1287 = vpop.permute.xlu0 %1286
        %1288 = vrot.lane.b32.xlu0 %v541, 24
        %v1289 = vpop.permute.xlu0 %1288
        %1290 = vrot.lane.b32.xlu0 %v543, 24
        %v1291 = vpop.permute.xlu0 %1290
        %1292 = vrot.lane.b32.xlu0 %v544, 24
        %v1293 = vpop.permute.xlu0 %1292
        %1294 = vrot.lane.b32.xlu0 %v546, 24
        %v1295 = vpop.permute.xlu0 %1294
        %1296 = vrot.lane.b32.xlu0 %v547, 24
        %v1297 = vpop.permute.xlu0 %1296
        %1298 = vrot.lane.b32.xlu0 0.0, 24
        %v1299 = vpop.permute.xlu0 %1298
        %1331 = vrot.lane.b32.xlu0 %v605, 28
        %v1332 = vpop.permute.xlu0 %1331
        %1333 = vrot.lane.b32.xlu0 %v607, 28
        %v1334 = vpop.permute.xlu0 %1333
        %1335 = vrot.lane.b32.xlu0 %v610, 28
        %v1336 = vpop.permute.xlu0 %1335
        %1337 = vrot.lane.b32.xlu0 %v612, 28
        %v1338 = vpop.permute.xlu0 %1337
        %1339 = vrot.lane.b32.xlu0 %v615, 28
        %v1340 = vpop.permute.xlu0 %1339
        %1341 = vrot.lane.b32.xlu0 %v617, 28
        %v1342 = vpop.permute.xlu0 %1341
        %1343 = vrot.lane.b32.xlu0 %v620, 28
        %v1344 = vpop.permute.xlu0 %1343
        %1345 = vrot.lane.b32.xlu0 %v622, 28
        %v1346 = vpop.permute.xlu0 %1345
        %1347 = vrot.lane.b32.xlu0 %v625, 28
        %v1348 = vpop.permute.xlu0 %1347
        %1349 = vrot.lane.b32.xlu0 %v627, 28
        %v1350 = vpop.permute.xlu0 %1349
        %1351 = vrot.lane.b32.xlu0 %v630, 28
        %v1352 = vpop.permute.xlu0 %1351
        %1353 = vrot.lane.b32.xlu0 %v632, 28
        %v1354 = vpop.permute.xlu0 %1353
        %1355 = vrot.lane.b32.xlu0 %v635, 28
        %v1356 = vpop.permute.xlu0 %1355
        %1357 = vrot.lane.b32.xlu0 %v637, 28
        %v1358 = vpop.permute.xlu0 %1357
        %1359 = vrot.lane.b32.xlu0 %v640, 28
        %v1360 = vpop.permute.xlu0 %1359
        %1361 = vrot.lane.b32.xlu0 %v642, 28
        %v1362 = vpop.permute.xlu0 %1361
        %1363 = vrot.lane.b32.xlu0 %v645, 28
        %v1364 = vpop.permute.xlu0 %1363
        %1365 = vrot.lane.b32.xlu0 %v647, 28
        %v1366 = vpop.permute.xlu0 %1365
        %1367 = vrot.lane.b32.xlu0 %v650, 28
        %v1368 = vpop.permute.xlu0 %1367
        %1369 = vrot.lane.b32.xlu0 %v652, 28
        %v1370 = vpop.permute.xlu0 %1369
        %1371 = vrot.lane.b32.xlu0 %v655, 28
        %v1372 = vpop.permute.xlu0 %1371
        %1373 = vrot.lane.b32.xlu0 %v657, 28
        %v1374 = vpop.permute.xlu0 %1373
        %1375 = vrot.lane.b32.xlu0 %v660, 28
        %v1376 = vpop.permute.xlu0 %1375
        %1377 = vrot.lane.b32.xlu0 %v662, 28
        %v1378 = vpop.permute.xlu0 %1377
        %1379 = vrot.lane.b32.xlu0 %v665, 28
        %v1380 = vpop.permute.xlu0 %1379
        %1381 = vrot.lane.b32.xlu0 %v667, 28
        %v1382 = vpop.permute.xlu0 %1381
        %1383 = vrot.lane.b32.xlu0 %v670, 28
        %v1384 = vpop.permute.xlu0 %1383
        %1385 = vrot.lane.b32.xlu0 %v672, 28
        %v1386 = vpop.permute.xlu0 %1385
        %1387 = vrot.lane.b32.xlu0 %v756, 28
        %v1388 = vpop.permute.xlu0 %1387
        %1389 = vrot.lane.b32.xlu0 %v758, 28
        %v1390 = vpop.permute.xlu0 %1389
        %1391 = vrot.lane.b32.xlu0 %v597, 28
        %v1392 = vpop.permute.xlu0 %1391
        %1424 = vrot.lane.b32.xlu0 %v683, 32
        %v1425 = vpop.permute.xlu0 %1424
        %1426 = vrot.lane.b32.xlu0 %v685, 32
        %v1427 = vpop.permute.xlu0 %1426
        %1428 = vrot.lane.b32.xlu0 %v688, 32
        %v1429 = vpop.permute.xlu0 %1428
        %1430 = vrot.lane.b32.xlu0 %v690, 32
        %v1431 = vpop.permute.xlu0 %1430
        %1432 = vrot.lane.b32.xlu0 %v693, 32
        %v1433 = vpop.permute.xlu0 %1432
        %1434 = vrot.lane.b32.xlu0 %v695, 32
        %v1435 = vpop.permute.xlu0 %1434
        %1436 = vrot.lane.b32.xlu0 %v698, 32
        %v1437 = vpop.permute.xlu0 %1436
        %1438 = vrot.lane.b32.xlu0 %v700, 32
        %v1439 = vpop.permute.xlu0 %1438
        %1440 = vrot.lane.b32.xlu0 %v703, 32
        %v1441 = vpop.permute.xlu0 %1440
        %1442 = vrot.lane.b32.xlu0 %v705, 32
        %v1443 = vpop.permute.xlu0 %1442
        %1444 = vrot.lane.b32.xlu0 %v708, 32
        %v1445 = vpop.permute.xlu0 %1444
        %1446 = vrot.lane.b32.xlu0 %v710, 32
        %v1447 = vpop.permute.xlu0 %1446
        %1448 = vrot.lane.b32.xlu0 %v713, 32
        %v1449 = vpop.permute.xlu0 %1448
        %1450 = vrot.lane.b32.xlu0 %v715, 32
        %v1451 = vpop.permute.xlu0 %1450
        %1452 = vrot.lane.b32.xlu0 %v718, 32
        %v1453 = vpop.permute.xlu0 %1452
        %1454 = vrot.lane.b32.xlu0 %v720, 32
        %v1455 = vpop.permute.xlu0 %1454
        %1456 = vrot.lane.b32.xlu0 %v723, 32
        %v1457 = vpop.permute.xlu0 %1456
        %1458 = vrot.lane.b32.xlu0 %v725, 32
        %v1459 = vpop.permute.xlu0 %1458
        %1460 = vrot.lane.b32.xlu0 %v728, 32
        %v1461 = vpop.permute.xlu0 %1460
        %1462 = vrot.lane.b32.xlu0 %v730, 32
        %v1463 = vpop.permute.xlu0 %1462
        %1464 = vrot.lane.b32.xlu0 %v733, 32
        %v1465 = vpop.permute.xlu0 %1464
        %1466 = vrot.lane.b32.xlu0 %v735, 32
        %v1467 = vpop.permute.xlu0 %1466
        %1468 = vrot.lane.b32.xlu0 %v738, 32
        %v1469 = vpop.permute.xlu0 %1468
        %1470 = vrot.lane.b32.xlu0 %v740, 32
        %v1471 = vpop.permute.xlu0 %1470
        %1472 = vrot.lane.b32.xlu0 %v743, 32
        %v1473 = vpop.permute.xlu0 %1472
        %1474 = vrot.lane.b32.xlu0 %v745, 32
        %v1475 = vpop.permute.xlu0 %1474
        %1476 = vrot.lane.b32.xlu0 %v748, 32
        %v1477 = vpop.permute.xlu0 %1476
        %1478 = vrot.lane.b32.xlu0 %v750, 32
        %v1479 = vpop.permute.xlu0 %1478
        %1480 = vrot.lane.b32.xlu0 %v761, 32
        %v1481 = vpop.permute.xlu0 %1480
        %1482 = vrot.lane.b32.xlu0 %v763, 32
        %v1483 = vpop.permute.xlu0 %1482
        %1484 = vrot.lane.b32.xlu0 %v675, 32
        %v1485 = vpop.permute.xlu0 %1484
        %vm1517 = vcmask 31744
        %v1518 = vsel %vm1517, 0.0, %v765
        %v1519 = vsel %vm1517, %v501, %v767
        %v1520 = vsel %vm1517, %v502, %v769
        %v1521 = vsel %vm1517, %v504, %v771
        %v1522 = vsel %vm1517, %v505, %v773
        %v1523 = vsel %vm1517, %v507, %v775
        %v1524 = vsel %vm1517, %v508, %v777
        %v1525 = vsel %vm1517, %v510, %v779
        %v1526 = vsel %vm1517, %v511, %v781
        %v1527 = vsel %vm1517, %v513, %v783
        %v1528 = vsel %vm1517, %v514, %v785
        %v1529 = vsel %vm1517, %v516, %v787
        %v1530 = vsel %vm1517, %v517, %v789
        %v1531 = vsel %vm1517, %v519, %v791
        %v1532 = vsel %vm1517, %v520, %v793
        %v1533 = vsel %vm1517, %v522, %v795
        %v1534 = vsel %vm1517, %v523, %v797
        %v1535 = vsel %vm1517, %v525, %v799
        %v1536 = vsel %vm1517, %v526, %v801
        %v1537 = vsel %vm1517, %v528, %v803
        %v1538 = vsel %vm1517, %v529, %v805
        %v1539 = vsel %vm1517, %v531, %v807
        %v1540 = vsel %vm1517, %v532, %v809
        %v1541 = vsel %vm1517, %v534, %v811
        %v1542 = vsel %vm1517, %v535, %v813
        %v1543 = vsel %vm1517, %v537, %v815
        %v1544 = vsel %vm1517, %v538, %v817
        %v1545 = vsel %vm1517, %v540, %v819
        %v1546 = vsel %vm1517, %v541, %v821
        %v1547 = vsel %vm1517, %v543, %v823
        %v1548 = vsel %vm1517, %v544, %v825
        %vm1549 = vcmask 64512
        %v1550 = vsel %vm1549, %v1518, %v858
        %v1551 = vsel %vm1549, %v1519, %v860
        %v1552 = vsel %vm1549, %v1520, %v862
        %v1553 = vsel %vm1549, %v1521, %v864
        %v1554 = vsel %vm1549, %v1522, %v866
        %v1555 = vsel %vm1549, %v1523, %v868
        %v1556 = vsel %vm1549, %v1524, %v870
        %v1557 = vsel %vm1549, %v1525, %v872
        %v1558 = vsel %vm1549, %v1526, %v874
        %v1559 = vsel %vm1549, %v1527, %v876
        %v1560 = vsel %vm1549, %v1528, %v878
        %v1561 = vsel %vm1549, %v1529, %v880
        %v1562 = vsel %vm1549, %v1530, %v882
        %v1563 = vsel %vm1549, %v1531, %v884
        %v1564 = vsel %vm1549, %v1532, %v886
        %v1565 = vsel %vm1549, %v1533, %v888
        %v1566 = vsel %vm1549, %v1534, %v890
        %v1567 = vsel %vm1549, %v1535, %v892
        %v1568 = vsel %vm1549, %v1536, %v894
        %v1569 = vsel %vm1549, %v1537, %v896
        %v1570 = vsel %vm1549, %v1538, %v898
        %v1571 = vsel %vm1549, %v1539, %v900
        %v1572 = vsel %vm1549, %v1540, %v902
        %v1573 = vsel %vm1549, %v1541, %v904
        %v1574 = vsel %vm1549, %v1542, %v906
        %v1575 = vsel %vm1549, %v1543, %v908
        %v1576 = vsel %vm1549, %v1544, %v910
        %v1577 = vsel %vm1549, %v1545, %v912
        %v1578 = vsel %vm1549, %v1546, %v914
        %v1579 = vsel %vm1549, %v1547, %v916
        %v1580 = vsel %vm1549, %v1548, %v918
        %vm1581 = vcmask 97280
        %v1582 = vsel %vm1581, %v1550, %v951
        %v1583 = vsel %vm1581, %v1550, %v953
        %v1584 = vsel %vm1581, %v1551, %v955
        %v1585 = vsel %vm1581, %v1552, %v957
        %v1586 = vsel %vm1581, %v1553, %v959
        %v1587 = vsel %vm1581, %v1554, %v961
        %v1588 = vsel %vm1581, %v1555, %v963
        %v1589 = vsel %vm1581, %v1556, %v965
        %v1590 = vsel %vm1581, %v1557, %v967
        %v1591 = vsel %vm1581, %v1558, %v969
        %v1592 = vsel %vm1581, %v1559, %v971
        %v1593 = vsel %vm1581, %v1560, %v973
        %v1594 = vsel %vm1581, %v1561, %v975
        %v1595 = vsel %vm1581, %v1562, %v977
        %v1596 = vsel %vm1581, %v1563, %v979
        %v1597 = vsel %vm1581, %v1564, %v981
        %v1598 = vsel %vm1581, %v1565, %v983
        %v1599 = vsel %vm1581, %v1566, %v985
        %v1600 = vsel %vm1581, %v1567, %v987
        %v1601 = vsel %vm1581, %v1568, %v989
        %v1602 = vsel %vm1581, %v1569, %v991
        %v1603 = vsel %vm1581, %v1570, %v993
        %v1604 = vsel %vm1581, %v1571, %v995
        %v1605 = vsel %vm1581, %v1572, %v997
        %v1606 = vsel %vm1581, %v1573, %v999
        %v1607 = vsel %vm1581, %v1574, %v1001
        %v1608 = vsel %vm1581, %v1575, %v1003
        %v1609 = vsel %vm1581, %v1576, %v1005
        %v1610 = vsel %vm1581, %v1577, %v1007
        %v1611 = vsel %vm1581, %v1578, %v1009
        %v1612 = vsel %vm1581, %v1579, %v1011
        %v1613 = vsel %vm1581, %v1580, %v1013
        %vm1614 = vcmask 130048
        %v1615 = vsel %vm1614, %v1582, %v1047
        %v1616 = vsel %vm1614, %v1583, %v1049
        %v1617 = vsel %vm1614, %v1584, %v1051
        %v1618 = vsel %vm1614, %v1585, %v1053
        %v1619 = vsel %vm1614, %v1586, %v1055
        %v1620 = vsel %vm1614, %v1587, %v1057
        %v1621 = vsel %vm1614, %v1588, %v1059
        %v1622 = vsel %vm1614, %v1589, %v1061
        %v1623 = vsel %vm1614, %v1590, %v1063
        %v1624 = vsel %vm1614, %v1591, %v1065
        %v1625 = vsel %vm1614, %v1592, %v1067
        %v1626 = vsel %vm1614, %v1593, %v1069
        %v1627 = vsel %vm1614, %v1594, %v1071
        %v1628 = vsel %vm1614, %v1595, %v1073
        %v1629 = vsel %vm1614, %v1596, %v1075
        %v1630 = vsel %vm1614, %v1597, %v1077
        %v1631 = vsel %vm1614, %v1598, %v1079
        %v1632 = vsel %vm1614, %v1599, %v1081
        %v1633 = vsel %vm1614, %v1600, %v1083
        %v1634 = vsel %vm1614, %v1601, %v1085
        %v1635 = vsel %vm1614, %v1602, %v1087
        %v1636 = vsel %vm1614, %v1603, %v1089
        %v1637 = vsel %vm1614, %v1604, %v1091
        %v1638 = vsel %vm1614, %v1605, %v1093
        %v1639 = vsel %vm1614, %v1606, %v1095
        %v1640 = vsel %vm1614, %v1607, %v1097
        %v1641 = vsel %vm1614, %v1608, %v1099
        %v1642 = vsel %vm1614, %v1609, %v1101
        %v1643 = vsel %vm1614, %v1610, %v1103
        %v1644 = vsel %vm1614, %v1611, %v1105
        %v1645 = vsel %vm1614, %v1612, %v1107
        %v1646 = vsel %vm1614, %v1613, %v1109
        %vm1647 = vcmask 162816
        %v1648 = vsel %vm1647, %v1615, %v1143
        %v1649 = vsel %vm1647, %v1616, %v1145
        %v1650 = vsel %vm1647, %v1617, %v1147
        %v1651 = vsel %vm1647, %v1618, %v1149
        %v1652 = vsel %vm1647, %v1619, %v1151
        %v1653 = vsel %vm1647, %v1620, %v1153
        %v1654 = vsel %vm1647, %v1621, %v1155
        %v1655 = vsel %vm1647, %v1622, %v1157
        %v1656 = vsel %vm1647, %v1623, %v1159
        %v1657 = vsel %vm1647, %v1624, %v1161
        %v1658 = vsel %vm1647, %v1625, %v1163
        %v1659 = vsel %vm1647, %v1626, %v1165
        %v1660 = vsel %vm1647, %v1627, %v1167
        %v1661 = vsel %vm1647, %v1628, %v1169
        %v1662 = vsel %vm1647, %v1629, %v1171
        %v1663 = vsel %vm1647, %v1630, %v1173
        %v1664 = vsel %vm1647, %v1631, %v1175
        %v1665 = vsel %vm1647, %v1632, %v1177
        %v1666 = vsel %vm1647, %v1633, %v1179
        %v1667 = vsel %vm1647, %v1634, %v1181
        %v1668 = vsel %vm1647, %v1635, %v1183
        %v1669 = vsel %vm1647, %v1636, %v1185
        %v1670 = vsel %vm1647, %v1637, %v1187
        %v1671 = vsel %vm1647, %v1638, %v1189
        %v1672 = vsel %vm1647, %v1639, %v1191
        %v1673 = vsel %vm1647, %v1640, %v1193
        %v1674 = vsel %vm1647, %v1641, %v1195
        %v1675 = vsel %vm1647, %v1642, %v1197
        %v1676 = vsel %vm1647, %v1643, %v1199
        %v1677 = vsel %vm1647, %v1644, %v1201
        %v1678 = vsel %vm1647, %v1645, %v1203
        %v1679 = vsel %vm1647, %v1646, %v1205
        %vm1680 = vcmask 195584
        %v1681 = vsel %vm1680, %v1648, %v1239
        %v1682 = vsel %vm1680, %v1649, %v1241
        %v1683 = vsel %vm1680, %v1650, %v1243
        %v1684 = vsel %vm1680, %v1651, %v1245
        %v1685 = vsel %vm1680, %v1652, %v1247
        %v1686 = vsel %vm1680, %v1653, %v1249
        %v1687 = vsel %vm1680, %v1654, %v1251
        %v1688 = vsel %vm1680, %v1655, %v1253
        %v1689 = vsel %vm1680, %v1656, %v1255
        %v1690 = vsel %vm1680, %v1657, %v1257
        %v1691 = vsel %vm1680, %v1658, %v1259
        %v1692 = vsel %vm1680, %v1659, %v1261
        %v1693 = vsel %vm1680, %v1660, %v1263
        %v1694 = vsel %vm1680, %v1661, %v1265
        %v1695 = vsel %vm1680, %v1662, %v1267
        %v1696 = vsel %vm1680, %v1663, %v1269
        %v1697 = vsel %vm1680, %v1664, %v1271
        %v1698 = vsel %vm1680, %v1665, %v1273
        %v1699 = vsel %vm1680, %v1666, %v1275
        %v1700 = vsel %vm1680, %v1667, %v1277
        %v1701 = vsel %vm1680, %v1668, %v1279
        %v1702 = vsel %vm1680, %v1669, %v1281
        %v1703 = vsel %vm1680, %v1670, %v1283
        %v1704 = vsel %vm1680, %v1671, %v1285
        %v1705 = vsel %vm1680, %v1672, %v1287
        %v1706 = vsel %vm1680, %v1673, %v1289
        %v1707 = vsel %vm1680, %v1674, %v1291
        %v1708 = vsel %vm1680, %v1675, %v1293
        %v1709 = vsel %vm1680, %v1676, %v1295
        %v1710 = vsel %vm1680, %v1677, %v1297
        %v1711 = vsel %vm1680, %v1678, %v1299
        %v1712 = vsel %vm1680, %v1679, %v1299
        %vm1713 = vcmask 228352
        %v1714 = vsel %vm1713, %v1681, %v1332
        %v1715 = vsel %vm1713, %v1682, %v1334
        %v1716 = vsel %vm1713, %v1683, %v1336
        %v1717 = vsel %vm1713, %v1684, %v1338
        %v1718 = vsel %vm1713, %v1685, %v1340
        %v1719 = vsel %vm1713, %v1686, %v1342
        %v1720 = vsel %vm1713, %v1687, %v1344
        %v1721 = vsel %vm1713, %v1688, %v1346
        %v1722 = vsel %vm1713, %v1689, %v1348
        %v1723 = vsel %vm1713, %v1690, %v1350
        %v1724 = vsel %vm1713, %v1691, %v1352
        %v1725 = vsel %vm1713, %v1692, %v1354
        %v1726 = vsel %vm1713, %v1693, %v1356
        %v1727 = vsel %vm1713, %v1694, %v1358
        %v1728 = vsel %vm1713, %v1695, %v1360
        %v1729 = vsel %vm1713, %v1696, %v1362
        %v1730 = vsel %vm1713, %v1697, %v1364
        %v1731 = vsel %vm1713, %v1698, %v1366
        %v1732 = vsel %vm1713, %v1699, %v1368
        %v1733 = vsel %vm1713, %v1700, %v1370
        %v1734 = vsel %vm1713, %v1701, %v1372
        %v1735 = vsel %vm1713, %v1702, %v1374
        %v1736 = vsel %vm1713, %v1703, %v1376
        %v1737 = vsel %vm1713, %v1704, %v1378
        %v1738 = vsel %vm1713, %v1705, %v1380
        %v1739 = vsel %vm1713, %v1706, %v1382
        %v1740 = vsel %vm1713, %v1707, %v1384
        %v1741 = vsel %vm1713, %v1708, %v1386
        %v1742 = vsel %vm1713, %v1709, %v1388
        %v1743 = vsel %vm1713, %v1710, %v1390
        %v1744 = vsel %vm1713, %v1711, %v1392
        %v1745 = vsel %vm1713, %v1712, %v1392
        %vm1746 = vcmask 261120
        %v1747 = vsel %vm1746, %v1714, %v1425
        %v1748 = vsel %vm1746, %v1715, %v1427
        %v1749 = vsel %vm1746, %v1716, %v1429
        %v1750 = vsel %vm1746, %v1717, %v1431
        %v1751 = vsel %vm1746, %v1718, %v1433
        %v1752 = vsel %vm1746, %v1719, %v1435
        %v1753 = vsel %vm1746, %v1720, %v1437
        %v1754 = vsel %vm1746, %v1721, %v1439
        %v1755 = vsel %vm1746, %v1722, %v1441
        %v1756 = vsel %vm1746, %v1723, %v1443
        %v1757 = vsel %vm1746, %v1724, %v1445
        %v1758 = vsel %vm1746, %v1725, %v1447
        %v1759 = vsel %vm1746, %v1726, %v1449
        %v1760 = vsel %vm1746, %v1727, %v1451
        %v1761 = vsel %vm1746, %v1728, %v1453
        %v1762 = vsel %vm1746, %v1729, %v1455
        %v1763 = vsel %vm1746, %v1730, %v1457
        %v1764 = vsel %vm1746, %v1731, %v1459
        %v1765 = vsel %vm1746, %v1732, %v1461
        %v1766 = vsel %vm1746, %v1733, %v1463
        %v1767 = vsel %vm1746, %v1734, %v1465
        %v1768 = vsel %vm1746, %v1735, %v1467
        %v1769 = vsel %vm1746, %v1736, %v1469
        %v1770 = vsel %vm1746, %v1737, %v1471
        %v1771 = vsel %vm1746, %v1738, %v1473
        %v1772 = vsel %vm1746, %v1739, %v1475
        %v1773 = vsel %vm1746, %v1740, %v1477
        %v1774 = vsel %vm1746, %v1741, %v1479
        %v1775 = vsel %vm1746, %v1742, %v1481
        %v1776 = vsel %vm1746, %v1743, %v1483
        %v1777 = vsel %vm1746, %v1744, %v1485
        %v1778 = vsel %vm1746, %v1745, %v1485
        %v1779 = vpack.c.bf16 %v1748, %v1747
        %v1780 = vpack.c.bf16 %v1750, %v1749
        %v1781 = vpack.c.bf16 %v1752, %v1751
        %v1782 = vpack.c.bf16 %v1754, %v1753
        %v1783 = vpack.c.bf16 %v1756, %v1755
        %v1784 = vpack.c.bf16 %v1758, %v1757
        %v1785 = vpack.c.bf16 %v1760, %v1759
        %v1786 = vpack.c.bf16 %v1762, %v1761
        %v1787 = vpack.c.bf16 %v1764, %v1763
        %v1788 = vpack.c.bf16 %v1766, %v1765
        %v1789 = vpack.c.bf16 %v1768, %v1767
        %v1790 = vpack.c.bf16 %v1770, %v1769
        %v1791 = vpack.c.bf16 %v1772, %v1771
        %v1792 = vpack.c.bf16 %v1774, %v1773
        %v1793 = vpack.c.bf16 %v1776, %v1775
        %v1794 = vpack.c.bf16 %v1778, %v1777
        %v1827 = vrot.slane %v469, 1
        %v1828 = vrot.slane %v375, 1
        %v1829 = vsel %vm595, %v1827, %v1828
        %v1830 = vrot.slane %v485, 1
        %v1831 = vsel %vm595, %v1828, %v1830
        %v1832 = vrot.slane %v470, 1
        %v1833 = vrot.slane %v378, 1
        %v1834 = vsel %vm595, %v1832, %v1833
        %v1835 = vrot.slane %v486, 1
        %v1836 = vsel %vm595, %v1833, %v1835
        %v1837 = vrot.slane %v471, 1
        %v1838 = vrot.slane %v381, 1
        %v1839 = vsel %vm595, %v1837, %v1838
        %v1840 = vrot.slane %v487, 1
        %v1841 = vsel %vm595, %v1838, %v1840
        %v1842 = vrot.slane %v472, 1
        %v1843 = vrot.slane %v384, 1
        %v1844 = vsel %vm595, %v1842, %v1843
        %v1845 = vrot.slane %v488, 1
        %v1846 = vsel %vm595, %v1843, %v1845
        %v1847 = vrot.slane %v473, 1
        %v1848 = vrot.slane %v387, 1
        %v1849 = vsel %vm595, %v1847, %v1848
        %v1850 = vrot.slane %v489, 1
        %v1851 = vsel %vm595, %v1848, %v1850
        %v1852 = vrot.slane %v474, 1
        %v1853 = vrot.slane %v390, 1
        %v1854 = vsel %vm595, %v1852, %v1853
        %v1855 = vrot.slane %v490, 1
        %v1856 = vsel %vm595, %v1853, %v1855
        %v1857 = vrot.slane %v475, 1
        %v1858 = vrot.slane %v393, 1
        %v1859 = vsel %vm595, %v1857, %v1858
        %v1860 = vrot.slane %v491, 1
        %v1861 = vsel %vm595, %v1858, %v1860
        %v1862 = vrot.slane %v476, 1
        %v1863 = vrot.slane %v396, 1
        %v1864 = vsel %vm595, %v1862, %v1863
        %v1865 = vrot.slane %v492, 1
        %v1866 = vsel %vm595, %v1863, %v1865
        %v1867 = vrot.slane %v477, 1
        %v1868 = vrot.slane %v399, 1
        %v1869 = vsel %vm595, %v1867, %v1868
        %v1870 = vrot.slane %v493, 1
        %v1871 = vsel %vm595, %v1868, %v1870
        %v1872 = vrot.slane %v478, 1
        %v1873 = vrot.slane %v402, 1
        %v1874 = vsel %vm595, %v1872, %v1873
        %v1875 = vrot.slane %v494, 1
        %v1876 = vsel %vm595, %v1873, %v1875
        %v1877 = vrot.slane %v479, 1
        %v1878 = vrot.slane %v405, 1
        %v1879 = vsel %vm595, %v1877, %v1878
        %v1880 = vrot.slane %v495, 1
        %v1881 = vsel %vm595, %v1878, %v1880
        %v1882 = vrot.slane %v480, 1
        %v1883 = vrot.slane %v408, 1
        %v1884 = vsel %vm595, %v1882, %v1883
        %v1885 = vrot.slane %v496, 1
        %v1886 = vsel %vm595, %v1883, %v1885
        %v1887 = vrot.slane %v481, 1
        %v1888 = vrot.slane %v411, 1
        %v1889 = vsel %vm595, %v1887, %v1888
        %v1890 = vrot.slane %v497, 1
        %v1891 = vsel %vm595, %v1888, %v1890
        %v1892 = vrot.slane %v482, 1
        %v1893 = vrot.slane %v414, 1
        %v1894 = vsel %vm595, %v1892, %v1893
        %v1895 = vrot.slane %v498, 1
        %v1896 = vsel %vm595, %v1893, %v1895
        %v1897 = vrot.slane %v483, 1
        %v1898 = vrot.slane %v417, 1
        %v1899 = vsel %vm595, %v1897, %v1898
        %v1900 = vrot.slane %v499, 1
        %v1901 = vsel %vm595, %v1898, %v1900
        %v1902 = vrot.slane %v484, 1
        %v1903 = vrot.slane %v420, 1
        %v1904 = vsel %vm595, %v1902, %v1903
        %v1905 = vrot.slane %v500, 1
        %v1906 = vsel %vm595, %v1903, %v1905
        %v1940 = vadd.f32 %v597, 0.0
        %v1941 = vadd.f32 %v469, %v1829
        %v1942 = vadd.f32 %v375, %v1831
        %v1943 = vadd.f32 %v470, %v1834
        %v1944 = vadd.f32 %v378, %v1836
        %v1945 = vadd.f32 %v471, %v1839
        %v1946 = vadd.f32 %v381, %v1841
        %v1947 = vadd.f32 %v472, %v1844
        %v1948 = vadd.f32 %v384, %v1846
        %v1949 = vadd.f32 %v473, %v1849
        %v1950 = vadd.f32 %v387, %v1851
        %v1951 = vadd.f32 %v474, %v1854
        %v1952 = vadd.f32 %v390, %v1856
        %v1953 = vadd.f32 %v475, %v1859
        %v1954 = vadd.f32 %v393, %v1861
        %v1955 = vadd.f32 %v476, %v1864
        %v1956 = vadd.f32 %v396, %v1866
        %v1957 = vadd.f32 %v477, %v1869
        %v1958 = vadd.f32 %v399, %v1871
        %v1959 = vadd.f32 %v478, %v1874
        %v1960 = vadd.f32 %v402, %v1876
        %v1961 = vadd.f32 %v479, %v1879
        %v1962 = vadd.f32 %v405, %v1881
        %v1963 = vadd.f32 %v480, %v1884
        %v1964 = vadd.f32 %v408, %v1886
        %v1965 = vadd.f32 %v481, %v1889
        %v1966 = vadd.f32 %v411, %v1891
        %v1967 = vadd.f32 %v482, %v1894
        %v1968 = vadd.f32 %v414, %v1896
        %v1969 = vadd.f32 %v483, %v1899
        %v1970 = vadd.f32 %v417, %v1901
        %v1971 = vadd.f32 %v484, %v1904
        %v1972 = vadd.f32 %v420, %v1906
        %v1973 = vrot.slane %v469, 2
        %v1974 = vrot.slane %v375, 2
        %v1975 = vsel %vm673, %v1973, %v1974
        %v1976 = vrot.slane %v485, 2
        %v1977 = vsel %vm673, %v1974, %v1976
        %v1978 = vrot.slane %v470, 2
        %v1979 = vrot.slane %v378, 2
        %v1980 = vsel %vm673, %v1978, %v1979
        %v1981 = vrot.slane %v486, 2
        %v1982 = vsel %vm673, %v1979, %v1981
        %v1983 = vrot.slane %v471, 2
        %v1984 = vrot.slane %v381, 2
        %v1985 = vsel %vm673, %v1983, %v1984
        %v1986 = vrot.slane %v487, 2
        %v1987 = vsel %vm673, %v1984, %v1986
        %v1988 = vrot.slane %v472, 2
        %v1989 = vrot.slane %v384, 2
        %v1990 = vsel %vm673, %v1988, %v1989
        %v1991 = vrot.slane %v488, 2
        %v1992 = vsel %vm673, %v1989, %v1991
        %v1993 = vrot.slane %v473, 2
        %v1994 = vrot.slane %v387, 2
        %v1995 = vsel %vm673, %v1993, %v1994
        %v1996 = vrot.slane %v489, 2
        %v1997 = vsel %vm673, %v1994, %v1996
        %v1998 = vrot.slane %v474, 2
        %v1999 = vrot.slane %v390, 2
        %v2000 = vsel %vm673, %v1998, %v1999
        %v2001 = vrot.slane %v490, 2
        %v2002 = vsel %vm673, %v1999, %v2001
        %v2003 = vrot.slane %v475, 2
        %v2004 = vrot.slane %v393, 2
        %v2005 = vsel %vm673, %v2003, %v2004
        %v2006 = vrot.slane %v491, 2
        %v2007 = vsel %vm673, %v2004, %v2006
        %v2008 = vrot.slane %v476, 2
        %v2009 = vrot.slane %v396, 2
        %v2010 = vsel %vm673, %v2008, %v2009
        %v2011 = vrot.slane %v492, 2
        %v2012 = vsel %vm673, %v2009, %v2011
        %v2013 = vrot.slane %v477, 2
        %v2014 = vrot.slane %v399, 2
        %v2015 = vsel %vm673, %v2013, %v2014
        %v2016 = vrot.slane %v493, 2
        %v2017 = vsel %vm673, %v2014, %v2016
        %v2018 = vrot.slane %v478, 2
        %v2019 = vrot.slane %v402, 2
        %v2020 = vsel %vm673, %v2018, %v2019
        %v2021 = vrot.slane %v494, 2
        %v2022 = vsel %vm673, %v2019, %v2021
        %v2023 = vrot.slane %v479, 2
        %v2024 = vrot.slane %v405, 2
        %v2025 = vsel %vm673, %v2023, %v2024
        %v2026 = vrot.slane %v495, 2
        %v2027 = vsel %vm673, %v2024, %v2026
        %v2028 = vrot.slane %v480, 2
        %v2029 = vrot.slane %v408, 2
        %v2030 = vsel %vm673, %v2028, %v2029
        %v2031 = vrot.slane %v496, 2
        %v2032 = vsel %vm673, %v2029, %v2031
        %v2033 = vrot.slane %v481, 2
        %v2034 = vrot.slane %v411, 2
        %v2035 = vsel %vm673, %v2033, %v2034
        %v2036 = vrot.slane %v497, 2
        %v2037 = vsel %vm673, %v2034, %v2036
        %v2038 = vrot.slane %v482, 2
        %v2039 = vrot.slane %v414, 2
        %v2040 = vsel %vm673, %v2038, %v2039
        %v2041 = vrot.slane %v498, 2
        %v2042 = vsel %vm673, %v2039, %v2041
        %v2043 = vrot.slane %v483, 2
        %v2044 = vrot.slane %v417, 2
        %v2045 = vsel %vm673, %v2043, %v2044
        %v2046 = vrot.slane %v499, 2
        %v2047 = vsel %vm673, %v2044, %v2046
        %v2048 = vrot.slane %v484, 2
        %v2049 = vrot.slane %v420, 2
        %v2050 = vsel %vm673, %v2048, %v2049
        %v2051 = vrot.slane %v500, 2
        %v2052 = vsel %vm673, %v2049, %v2051
        %v2086 = vadd.f32 %v1940, %v675
        %v2087 = vadd.f32 %v1941, %v1975
        %v2088 = vadd.f32 %v1942, %v1977
        %v2089 = vadd.f32 %v1943, %v1980
        %v2090 = vadd.f32 %v1944, %v1982
        %v2091 = vadd.f32 %v1945, %v1985
        %v2092 = vadd.f32 %v1946, %v1987
        %v2093 = vadd.f32 %v1947, %v1990
        %v2094 = vadd.f32 %v1948, %v1992
        %v2095 = vadd.f32 %v1949, %v1995
        %v2096 = vadd.f32 %v1950, %v1997
        %v2097 = vadd.f32 %v1951, %v2000
        %v2098 = vadd.f32 %v1952, %v2002
        %v2099 = vadd.f32 %v1953, %v2005
        %v2100 = vadd.f32 %v1954, %v2007
        %v2101 = vadd.f32 %v1955, %v2010
        %v2102 = vadd.f32 %v1956, %v2012
        %v2103 = vadd.f32 %v1957, %v2015
        %v2104 = vadd.f32 %v1958, %v2017
        %v2105 = vadd.f32 %v1959, %v2020
        %v2106 = vadd.f32 %v1960, %v2022
        %v2107 = vadd.f32 %v1961, %v2025
        %v2108 = vadd.f32 %v1962, %v2027
        %v2109 = vadd.f32 %v1963, %v2030
        %v2110 = vadd.f32 %v1964, %v2032
        %v2111 = vadd.f32 %v1965, %v2035
        %v2112 = vadd.f32 %v1966, %v2037
        %v2113 = vadd.f32 %v1967, %v2040
        %v2114 = vadd.f32 %v1968, %v2042
        %v2115 = vadd.f32 %v1969, %v2045
        %v2116 = vadd.f32 %v1970, %v2047
        %v2117 = vadd.f32 %v1971, %v2050
        %v2118 = vadd.f32 %v1972, %v2052
        %v2119 = vadd.f32 %v2086, %v2087
        %v2120 = vadd.f32 %v2086, %v2088
        %v2121 = vadd.f32 %v2087, %v2089
        %v2122 = vadd.f32 %v2088, %v2090
        %v2123 = vadd.f32 %v2089, %v2091
        %v2124 = vadd.f32 %v2090, %v2092
        %v2125 = vadd.f32 %v2091, %v2093
        %v2126 = vadd.f32 %v2092, %v2094
        %v2127 = vadd.f32 %v2093, %v2095
        %v2128 = vadd.f32 %v2094, %v2096
        %v2129 = vadd.f32 %v2095, %v2097
        %v2130 = vadd.f32 %v2096, %v2098
        %v2131 = vadd.f32 %v2097, %v2099
        %v2132 = vadd.f32 %v2098, %v2100
        %v2133 = vadd.f32 %v2099, %v2101
        %v2134 = vadd.f32 %v2100, %v2102
        %v2135 = vadd.f32 %v2101, %v2103
        %v2136 = vadd.f32 %v2102, %v2104
        %v2137 = vadd.f32 %v2103, %v2105
        %v2138 = vadd.f32 %v2104, %v2106
        %v2139 = vadd.f32 %v2105, %v2107
        %v2140 = vadd.f32 %v2106, %v2108
        %v2141 = vadd.f32 %v2107, %v2109
        %v2142 = vadd.f32 %v2108, %v2110
        %v2143 = vadd.f32 %v2109, %v2111
        %v2144 = vadd.f32 %v2110, %v2112
        %v2145 = vadd.f32 %v2111, %v2113
        %v2146 = vadd.f32 %v2112, %v2114
        %v2147 = vadd.f32 %v2113, %v2115
        %v2148 = vadd.f32 %v2114, %v2116
        %v2149 = vadd.f32 %v2115, %v2117
        %v2150 = vadd.f32 %v2116, %v2118
        %v2151 = vadd.f32 %v2119, %v2089
        %v2152 = vadd.f32 %v2120, %v2090
        %v2153 = vadd.f32 %v2121, %v2091
        %v2154 = vadd.f32 %v2122, %v2092
        %v2155 = vadd.f32 %v2123, %v2093
        %v2156 = vadd.f32 %v2124, %v2094
        %v2157 = vadd.f32 %v2125, %v2095
        %v2158 = vadd.f32 %v2126, %v2096
        %v2159 = vadd.f32 %v2127, %v2097
        %v2160 = vadd.f32 %v2128, %v2098
        %v2161 = vadd.f32 %v2129, %v2099
        %v2162 = vadd.f32 %v2130, %v2100
        %v2163 = vadd.f32 %v2131, %v2101
        %v2164 = vadd.f32 %v2132, %v2102
        %v2165 = vadd.f32 %v2133, %v2103
        %v2166 = vadd.f32 %v2134, %v2104
        %v2167 = vadd.f32 %v2135, %v2105
        %v2168 = vadd.f32 %v2136, %v2106
        %v2169 = vadd.f32 %v2137, %v2107
        %v2170 = vadd.f32 %v2138, %v2108
        %v2171 = vadd.f32 %v2139, %v2109
        %v2172 = vadd.f32 %v2140, %v2110
        %v2173 = vadd.f32 %v2141, %v2111
        %v2174 = vadd.f32 %v2142, %v2112
        %v2175 = vadd.f32 %v2143, %v2113
        %v2176 = vadd.f32 %v2144, %v2114
        %v2177 = vadd.f32 %v2145, %v2115
        %v2178 = vadd.f32 %v2146, %v2116
        %v2179 = vadd.f32 %v2147, %v2117
        %v2180 = vadd.f32 %v2148, %v2118
        %v2181 = vadd.f32 %v2149, %v2086
        %v2182 = vadd.f32 %v2150, %v2086
        %v2183 = vmul.f32 %v2151, %v232
        %v2184 = vmul.f32 %v2152, %v247
        %v2185 = vmul.f32 %v2153, %v262
        %v2186 = vmul.f32 %v2154, %v277
        %v2187 = vmul.f32 %v2155, %v262
        %v2188 = vmul.f32 %v2156, %v277
        %v2189 = vmul.f32 %v2157, %v262
        %v2190 = vmul.f32 %v2158, %v277
        %v2191 = vmul.f32 %v2159, %v262
        %v2192 = vmul.f32 %v2160, %v277
        %v2193 = vmul.f32 %v2161, %v262
        %v2194 = vmul.f32 %v2162, %v277
        %v2195 = vmul.f32 %v2163, %v262
        %v2196 = vmul.f32 %v2164, %v277
        %v2197 = vmul.f32 %v2165, %v262
        %v2198 = vmul.f32 %v2166, %v277
        %v2199 = vmul.f32 %v2167, %v262
        %v2200 = vmul.f32 %v2168, %v277
        %v2201 = vmul.f32 %v2169, %v262
        %v2202 = vmul.f32 %v2170, %v277
        %v2203 = vmul.f32 %v2171, %v262
        %v2204 = vmul.f32 %v2172, %v277
        %v2205 = vmul.f32 %v2173, %v262
        %v2206 = vmul.f32 %v2174, %v277
        %v2207 = vmul.f32 %v2175, %v262
        %v2208 = vmul.f32 %v2176, %v277
        %v2209 = vmul.f32 %v2177, %v262
        %v2210 = vmul.f32 %v2178, %v277
        %v2211 = vmul.f32 %v2179, %v262
        %v2212 = vmul.f32 %v2180, %v277
        %v2213 = vmul.f32 %v2181, %v292
        %v2214 = vmul.f32 %v2182, %v307
        %v2215 = vld [vmem:[%s2] sm:$0xf]
        %v2216 = vld [vmem:[%s2 + $0x4] sm:$0xf]
        %v2217 = vld [vmem:[%s2 + $0x8] sm:$0xf]
        %v2218 = vld [vmem:[%s2 + $0xc] sm:$0xf]
        %v2219 = vld [vmem:[%s2 + $0x10] sm:$0x3]
        %v2225 = vunpack.c.l.b16 %v2215
        %v2226 = vunpack.c.l.b16 %v2216
        %v2227 = vunpack.c.l.b16 %v2217
        %v2228 = vunpack.c.l.b16 %v2218
        %v2229 = vunpack.c.l.b16 %v2219
        %v2230 = vpack.c.b16 %v2226, %v2225
        %v2231 = vpack.c.b16 %v2228, %v2227
        %v2232 = vpack.c.b16 %v2229, %v2229
        %vm2235 = vcmask 293888
        %v2237 = vsel %vm2235, %v1779, 0
        %v2240 = vsel %vm2235, %v1780, 0
        %v2243 = vsel %vm2235, %v1781, 0
        %v2246 = vsel %vm2235, %v1782, 0
        %v2249 = vsel %vm2235, %v1783, 0
        %v2252 = vsel %vm2235, %v1784, 0
        %v2255 = vsel %vm2235, %v1785, 0
        %v2258 = vsel %vm2235, %v1786, 0
        %v2261 = vsel %vm2235, %v1787, 0
        %v2264 = vsel %vm2235, %v1788, 0
        %v2267 = vsel %vm2235, %v1789, 0
        %v2270 = vsel %vm2235, %v1790, 0
        %v2273 = vsel %vm2235, %v1791, 0
        %v2276 = vsel %vm2235, %v1792, 0
        %v2279 = vsel %vm2235, %v1793, 0
        %v2282 = vsel %vm2235, %v1794, 0
        %vm2284 = vcmask 1041408
        %v2286 = vsel %vm2284, %v2232, 0
        %2288 = vmatpush.bf16.msra.mxu0 0
        %2289 = vmatpush.bf16.msra.mxu0 0
        %2290 = vmatpush.bf16.msra.mxu0 0
        %2291 = vmatpush.bf16.msra.mxu0 0
        %2292 = vmatpush.bf16.msra.mxu0 0
        %2293 = vmatpush.bf16.msra.mxu0 %v2286
        %2294 = vmatpush.bf16.msra.mxu0 %v2231
        %2295 = vmatpush.bf16.msra.mxu0 %v2230
        %2296 = vmatmul.bf16.gmra.mxu0 %v2237
        %v2297 = vpop.f32.mrf.mxu0
        %v2298 = vadd.f32 0.0, %v2297
        %v2299 = vpop.f32.mrf.mxu0
        %v2300 = vadd.f32 0.0, %v2299
        %2301 = vmatmul.bf16.gmra.mxu0 %v2240
        %v2302 = vpop.f32.mrf.mxu0
        %v2303 = vadd.f32 0.0, %v2302
        %v2304 = vpop.f32.mrf.mxu0
        %v2305 = vadd.f32 0.0, %v2304
        %2306 = vmatmul.bf16.gmra.mxu0 %v2243
        %v2307 = vpop.f32.mrf.mxu0
        %v2308 = vadd.f32 0.0, %v2307
        %v2309 = vpop.f32.mrf.mxu0
        %v2310 = vadd.f32 0.0, %v2309
        %2311 = vmatmul.bf16.gmra.mxu0 %v2246
        %v2312 = vpop.f32.mrf.mxu0
        %v2313 = vadd.f32 0.0, %v2312
        %v2314 = vpop.f32.mrf.mxu0
        %v2315 = vadd.f32 0.0, %v2314
        %2316 = vmatmul.bf16.gmra.mxu0 %v2249
        %v2317 = vpop.f32.mrf.mxu0
        %v2318 = vadd.f32 0.0, %v2317
        %v2319 = vpop.f32.mrf.mxu0
        %v2320 = vadd.f32 0.0, %v2319
        %2321 = vmatmul.bf16.gmra.mxu0 %v2252
        %v2322 = vpop.f32.mrf.mxu0
        %v2323 = vadd.f32 0.0, %v2322
        %v2324 = vpop.f32.mrf.mxu0
        %v2325 = vadd.f32 0.0, %v2324
        %2326 = vmatmul.bf16.gmra.mxu0 %v2255
        %v2327 = vpop.f32.mrf.mxu0
        %v2328 = vadd.f32 0.0, %v2327
        %v2329 = vpop.f32.mrf.mxu0
        %v2330 = vadd.f32 0.0, %v2329
        %2331 = vmatmul.bf16.gmra.mxu0 %v2258
        %v2332 = vpop.f32.mrf.mxu0
        %v2333 = vadd.f32 0.0, %v2332
        %v2334 = vpop.f32.mrf.mxu0
        %v2335 = vadd.f32 0.0, %v2334
        %2336 = vmatmul.bf16.gmra.mxu0 %v2261
        %v2337 = vpop.f32.mrf.mxu0
        %v2338 = vadd.f32 0.0, %v2337
        %v2339 = vpop.f32.mrf.mxu0
        %v2340 = vadd.f32 0.0, %v2339
        %2341 = vmatmul.bf16.gmra.mxu0 %v2264
        %v2342 = vpop.f32.mrf.mxu0
        %v2343 = vadd.f32 0.0, %v2342
        %v2344 = vpop.f32.mrf.mxu0
        %v2345 = vadd.f32 0.0, %v2344
        %2346 = vmatmul.bf16.gmra.mxu0 %v2267
        %v2347 = vpop.f32.mrf.mxu0
        %v2348 = vadd.f32 0.0, %v2347
        %v2349 = vpop.f32.mrf.mxu0
        %v2350 = vadd.f32 0.0, %v2349
        %2351 = vmatmul.bf16.gmra.mxu0 %v2270
        %v2352 = vpop.f32.mrf.mxu0
        %v2353 = vadd.f32 0.0, %v2352
        %v2354 = vpop.f32.mrf.mxu0
        %v2355 = vadd.f32 0.0, %v2354
        %2356 = vmatmul.bf16.gmra.mxu0 %v2273
        %v2357 = vpop.f32.mrf.mxu0
        %v2358 = vadd.f32 0.0, %v2357
        %v2359 = vpop.f32.mrf.mxu0
        %v2360 = vadd.f32 0.0, %v2359
        %2361 = vmatmul.bf16.gmra.mxu0 %v2276
        %v2362 = vpop.f32.mrf.mxu0
        %v2363 = vadd.f32 0.0, %v2362
        %v2364 = vpop.f32.mrf.mxu0
        %v2365 = vadd.f32 0.0, %v2364
        %2366 = vmatmul.bf16.gmra.mxu0 %v2279
        %v2367 = vpop.f32.mrf.mxu0
        %v2368 = vadd.f32 0.0, %v2367
        %v2369 = vpop.f32.mrf.mxu0
        %v2370 = vadd.f32 0.0, %v2369
        %2371 = vmatmul.bf16.gmra.mxu0 %v2282
        %v2372 = vpop.f32.mrf.mxu0
        %v2373 = vadd.f32 0.0, %v2372
        %v2374 = vpop.f32.mrf.mxu0
        %v2375 = vadd.f32 0.0, %v2374
        %2376 = vdwg.mxu0
        %s2377 = sld [smem:[#allocation2]]
        %v2378 = vstv %s2377
        %v2379 = vmul.f32 %v2378, %v308
        %v2380 = vmul.f32 %v2378, %v309
        %v2381 = vmul.f32 %v2378, %v310
        %v2382 = vmul.f32 %v2378, %v311
        %v2383 = vmul.f32 %v2378, %v312
        %v2384 = vmul.f32 %v2378, %v313
        %v2385 = vmul.f32 %v2378, %v314
        %v2386 = vmul.f32 %v2378, %v315
        %v2387 = vmul.f32 %v2378, %v316
        %v2388 = vmul.f32 %v2378, %v317
        %v2389 = vmul.f32 %v2378, %v318
        %v2390 = vmul.f32 %v2378, %v319
        %v2391 = vmul.f32 %v2378, %v320
        %v2392 = vmul.f32 %v2378, %v321
        %v2393 = vmul.f32 %v2378, %v322
        %v2394 = vmul.f32 %v2378, %v323
        %v2395 = vmul.f32 %v2378, %v324
        %v2396 = vmul.f32 %v2378, %v325
        %v2397 = vmul.f32 %v2378, %v326
        %v2398 = vmul.f32 %v2378, %v327
        %v2399 = vmul.f32 %v2378, %v328
        %v2400 = vmul.f32 %v2378, %v329
        %v2401 = vmul.f32 %v2378, %v330
        %v2402 = vmul.f32 %v2378, %v331
        %v2403 = vmul.f32 %v2378, %v332
        %v2404 = vmul.f32 %v2378, %v333
        %v2405 = vmul.f32 %v2378, %v334
        %v2406 = vmul.f32 %v2378, %v335
        %v2407 = vmul.f32 %v2378, %v336
        %v2408 = vmul.f32 %v2378, %v337
        %v2409 = vmul.f32 %v2378, %v338
        %v2410 = vmul.f32 %v2378, %v339
        %v2411 = vadd.f32 %v2298, %v2379
        %v2412 = vadd.f32 %v2300, %v2380
        %v2413 = vadd.f32 %v2303, %v2381
        %v2414 = vadd.f32 %v2305, %v2382
        %v2415 = vadd.f32 %v2308, %v2383
        %v2416 = vadd.f32 %v2310, %v2384
        %v2417 = vadd.f32 %v2313, %v2385
        %v2418 = vadd.f32 %v2315, %v2386
        %v2419 = vadd.f32 %v2318, %v2387
        %v2420 = vadd.f32 %v2320, %v2388
        %v2421 = vadd.f32 %v2323, %v2389
        %v2422 = vadd.f32 %v2325, %v2390
        %v2423 = vadd.f32 %v2328, %v2391
        %v2424 = vadd.f32 %v2330, %v2392
        %v2425 = vadd.f32 %v2333, %v2393
        %v2426 = vadd.f32 %v2335, %v2394
        %v2427 = vadd.f32 %v2338, %v2395
        %v2428 = vadd.f32 %v2340, %v2396
        %v2429 = vadd.f32 %v2343, %v2397
        %v2430 = vadd.f32 %v2345, %v2398
        %v2431 = vadd.f32 %v2348, %v2399
        %v2432 = vadd.f32 %v2350, %v2400
        %v2433 = vadd.f32 %v2353, %v2401
        %v2434 = vadd.f32 %v2355, %v2402
        %v2435 = vadd.f32 %v2358, %v2403
        %v2436 = vadd.f32 %v2360, %v2404
        %v2437 = vadd.f32 %v2363, %v2405
        %v2438 = vadd.f32 %v2365, %v2406
        %v2439 = vadd.f32 %v2368, %v2407
        %v2440 = vadd.f32 %v2370, %v2408
        %v2441 = vadd.f32 %v2373, %v2409
        %v2442 = vadd.f32 %v2375, %v2410
        %s2443 = sld [smem:[#allocation2 + $0x1]]
        %v2444 = vstv %s2443
        %v2445 = vmul.f32 %v2444, %v2183
        %v2446 = vmul.f32 %v2444, %v2184
        %v2447 = vmul.f32 %v2444, %v2185
        %v2448 = vmul.f32 %v2444, %v2186
        %v2449 = vmul.f32 %v2444, %v2187
        %v2450 = vmul.f32 %v2444, %v2188
        %v2451 = vmul.f32 %v2444, %v2189
        %v2452 = vmul.f32 %v2444, %v2190
        %v2453 = vmul.f32 %v2444, %v2191
        %v2454 = vmul.f32 %v2444, %v2192
        %v2455 = vmul.f32 %v2444, %v2193
        %v2456 = vmul.f32 %v2444, %v2194
        %v2457 = vmul.f32 %v2444, %v2195
        %v2458 = vmul.f32 %v2444, %v2196
        %v2459 = vmul.f32 %v2444, %v2197
        %v2460 = vmul.f32 %v2444, %v2198
        %v2461 = vmul.f32 %v2444, %v2199
        %v2462 = vmul.f32 %v2444, %v2200
        %v2463 = vmul.f32 %v2444, %v2201
        %v2464 = vmul.f32 %v2444, %v2202
        %v2465 = vmul.f32 %v2444, %v2203
        %v2466 = vmul.f32 %v2444, %v2204
        %v2467 = vmul.f32 %v2444, %v2205
        %v2468 = vmul.f32 %v2444, %v2206
        %v2469 = vmul.f32 %v2444, %v2207
        %v2470 = vmul.f32 %v2444, %v2208
        %v2471 = vmul.f32 %v2444, %v2209
        %v2472 = vmul.f32 %v2444, %v2210
        %v2473 = vmul.f32 %v2444, %v2211
        %v2474 = vmul.f32 %v2444, %v2212
        %v2475 = vmul.f32 %v2444, %v2213
        %v2476 = vmul.f32 %v2444, %v2214
        %v2477 = vadd.f32 %v2411, %v2445
        %v2478 = vadd.f32 %v2412, %v2446
        %v2479 = vadd.f32 %v2413, %v2447
        %v2480 = vadd.f32 %v2414, %v2448
        %v2481 = vadd.f32 %v2415, %v2449
        %v2482 = vadd.f32 %v2416, %v2450
        %v2483 = vadd.f32 %v2417, %v2451
        %v2484 = vadd.f32 %v2418, %v2452
        %v2485 = vadd.f32 %v2419, %v2453
        %v2486 = vadd.f32 %v2420, %v2454
        %v2487 = vadd.f32 %v2421, %v2455
        %v2488 = vadd.f32 %v2422, %v2456
        %v2489 = vadd.f32 %v2423, %v2457
        %v2490 = vadd.f32 %v2424, %v2458
        %v2491 = vadd.f32 %v2425, %v2459
        %v2492 = vadd.f32 %v2426, %v2460
        %v2493 = vadd.f32 %v2427, %v2461
        %v2494 = vadd.f32 %v2428, %v2462
        %v2495 = vadd.f32 %v2429, %v2463
        %v2496 = vadd.f32 %v2430, %v2464
        %v2497 = vadd.f32 %v2431, %v2465
        %v2498 = vadd.f32 %v2432, %v2466
        %v2499 = vadd.f32 %v2433, %v2467
        %v2500 = vadd.f32 %v2434, %v2468
        %v2501 = vadd.f32 %v2435, %v2469
        %v2502 = vadd.f32 %v2436, %v2470
        %v2503 = vadd.f32 %v2437, %v2471
        %v2504 = vadd.f32 %v2438, %v2472
        %v2505 = vadd.f32 %v2439, %v2473
        %v2506 = vadd.f32 %v2440, %v2474
        %v2507 = vadd.f32 %v2441, %v2475
        %v2508 = vadd.f32 %v2442, %v2476
        %v2541 = vrot.slane %v2477, 7
        %v2542 = vrot.slane %v2478, 7
        %v2543 = vsel %vm372, %v2541, %v2542
        %v2544 = vrot.slane %v2479, 7
        %v2545 = vrot.slane %v2480, 7
        %v2546 = vsel %vm372, %v2544, %v2545
        %v2547 = vrot.slane %v2481, 7
        %v2548 = vrot.slane %v2482, 7
        %v2549 = vsel %vm372, %v2547, %v2548
        %v2550 = vrot.slane %v2483, 7
        %v2551 = vrot.slane %v2484, 7
        %v2552 = vsel %vm372, %v2550, %v2551
        %v2553 = vrot.slane %v2485, 7
        %v2554 = vrot.slane %v2486, 7
        %v2555 = vsel %vm372, %v2553, %v2554
        %v2556 = vrot.slane %v2487, 7
        %v2557 = vrot.slane %v2488, 7
        %v2558 = vsel %vm372, %v2556, %v2557
        %v2559 = vrot.slane %v2489, 7
        %v2560 = vrot.slane %v2490, 7
        %v2561 = vsel %vm372, %v2559, %v2560
        %v2562 = vrot.slane %v2491, 7
        %v2563 = vrot.slane %v2492, 7
        %v2564 = vsel %vm372, %v2562, %v2563
        %v2565 = vrot.slane %v2493, 7
        %v2566 = vrot.slane %v2494, 7
        %v2567 = vsel %vm372, %v2565, %v2566
        %v2568 = vrot.slane %v2495, 7
        %v2569 = vrot.slane %v2496, 7
        %v2570 = vsel %vm372, %v2568, %v2569
        %v2571 = vrot.slane %v2497, 7
        %v2572 = vrot.slane %v2498, 7
        %v2573 = vsel %vm372, %v2571, %v2572
        %v2574 = vrot.slane %v2499, 7
        %v2575 = vrot.slane %v2500, 7
        %v2576 = vsel %vm372, %v2574, %v2575
        %v2577 = vrot.slane %v2501, 7
        %v2578 = vrot.slane %v2502, 7
        %v2579 = vsel %vm372, %v2577, %v2578
        %v2580 = vrot.slane %v2503, 7
        %v2581 = vrot.slane %v2504, 7
        %v2582 = vsel %vm372, %v2580, %v2581
        %v2583 = vrot.slane %v2505, 7
        %v2584 = vrot.slane %v2506, 7
        %v2585 = vsel %vm372, %v2583, %v2584
        %v2586 = vrot.slane %v2507, 7
        %v2587 = vrot.slane %v2508, 7
        %v2588 = vsel %vm372, %v2586, %v2587
        %v2637 = vsel %vm372, 0.0, %v2541
        %v2638 = vsel %vm372, 0.0, %v2544
        %v2639 = vsel %vm372, 0.0, %v2547
        %v2640 = vsel %vm372, 0.0, %v2550
        %v2641 = vsel %vm372, 0.0, %v2553
        %v2642 = vsel %vm372, 0.0, %v2556
        %v2643 = vsel %vm372, 0.0, %v2559
        %v2644 = vsel %vm372, 0.0, %v2562
        %v2645 = vsel %vm372, 0.0, %v2565
        %v2646 = vsel %vm372, 0.0, %v2568
        %v2647 = vsel %vm372, 0.0, %v2571
        %v2648 = vsel %vm372, 0.0, %v2574
        %v2649 = vsel %vm372, 0.0, %v2577
        %v2650 = vsel %vm372, 0.0, %v2580
        %v2651 = vsel %vm372, 0.0, %v2583
        %v2652 = vsel %vm372, 0.0, %v2586
        %v2653 = vsel %vm372, %v2542, 0.0
        %v2654 = vsel %vm372, %v2545, 0.0
        %v2655 = vsel %vm372, %v2548, 0.0
        %v2656 = vsel %vm372, %v2551, 0.0
        %v2657 = vsel %vm372, %v2554, 0.0
        %v2658 = vsel %vm372, %v2557, 0.0
        %v2659 = vsel %vm372, %v2560, 0.0
        %v2660 = vsel %vm372, %v2563, 0.0
        %v2661 = vsel %vm372, %v2566, 0.0
        %v2662 = vsel %vm372, %v2569, 0.0
        %v2663 = vsel %vm372, %v2572, 0.0
        %v2664 = vsel %vm372, %v2575, 0.0
        %v2665 = vsel %vm372, %v2578, 0.0
        %v2666 = vsel %vm372, %v2581, 0.0
        %v2667 = vsel %vm372, %v2584, 0.0
        %v2668 = vsel %vm372, %v2587, 0.0
        %v2669 = vmax.f32 %v2637, 0.0
        %v2670 = vmax.f32 %v2543, 0.0
        %v2671 = vmax.f32 %v2653, 0.0
        %v2672 = vmax.f32 %v2638, 0.0
        %v2673 = vmax.f32 %v2546, 0.0
        %v2674 = vmax.f32 %v2654, 0.0
        %v2675 = vmax.f32 %v2639, 0.0
        %v2676 = vmax.f32 %v2549, 0.0
        %v2677 = vmax.f32 %v2655, 0.0
        %v2678 = vmax.f32 %v2640, 0.0
        %v2679 = vmax.f32 %v2552, 0.0
        %v2680 = vmax.f32 %v2656, 0.0
        %v2681 = vmax.f32 %v2641, 0.0
        %v2682 = vmax.f32 %v2555, 0.0
        %v2683 = vmax.f32 %v2657, 0.0
        %v2684 = vmax.f32 %v2642, 0.0
        %v2685 = vmax.f32 %v2558, 0.0
        %v2686 = vmax.f32 %v2658, 0.0
        %v2687 = vmax.f32 %v2643, 0.0
        %v2688 = vmax.f32 %v2561, 0.0
        %v2689 = vmax.f32 %v2659, 0.0
        %v2690 = vmax.f32 %v2644, 0.0
        %v2691 = vmax.f32 %v2564, 0.0
        %v2692 = vmax.f32 %v2660, 0.0
        %v2693 = vmax.f32 %v2645, 0.0
        %v2694 = vmax.f32 %v2567, 0.0
        %v2695 = vmax.f32 %v2661, 0.0
        %v2696 = vmax.f32 %v2646, 0.0
        %v2697 = vmax.f32 %v2570, 0.0
        %v2698 = vmax.f32 %v2662, 0.0
        %v2699 = vmax.f32 %v2647, 0.0
        %v2700 = vmax.f32 %v2573, 0.0
        %v2701 = vmax.f32 %v2663, 0.0
        %v2702 = vmax.f32 %v2648, 0.0
        %v2703 = vmax.f32 %v2576, 0.0
        %v2704 = vmax.f32 %v2664, 0.0
        %v2705 = vmax.f32 %v2649, 0.0
        %v2706 = vmax.f32 %v2579, 0.0
        %v2707 = vmax.f32 %v2665, 0.0
        %v2708 = vmax.f32 %v2650, 0.0
        %v2709 = vmax.f32 %v2582, 0.0
        %v2710 = vmax.f32 %v2666, 0.0
        %v2711 = vmax.f32 %v2651, 0.0
        %v2712 = vmax.f32 %v2585, 0.0
        %v2713 = vmax.f32 %v2667, 0.0
        %v2714 = vmax.f32 %v2652, 0.0
        %v2715 = vmax.f32 %v2588, 0.0
        %v2716 = vmax.f32 %v2668, 0.0
        %v2762 = vrot.slane %v2669, 1
        %v2763 = vrot.slane %v2670, 1
        %v2764 = vsel %vm595, %v2762, %v2763
        %v2765 = vrot.slane %v2671, 1
        %v2766 = vsel %vm595, %v2763, %v2765
        %v2767 = vrot.slane %v2672, 1
        %v2768 = vrot.slane %v2673, 1
        %v2769 = vsel %vm595, %v2767, %v2768
        %v2770 = vrot.slane %v2674, 1
        %v2771 = vsel %vm595, %v2768, %v2770
        %v2772 = vrot.slane %v2675, 1
        %v2773 = vrot.slane %v2676, 1
        %v2774 = vsel %vm595, %v2772, %v2773
        %v2775 = vrot.slane %v2677, 1
        %v2776 = vsel %vm595, %v2773, %v2775
        %v2777 = vrot.slane %v2678, 1
        %v2778 = vrot.slane %v2679, 1
        %v2779 = vsel %vm595, %v2777, %v2778
        %v2780 = vrot.slane %v2680, 1
        %v2781 = vsel %vm595, %v2778, %v2780
        %v2782 = vrot.slane %v2681, 1
        %v2783 = vrot.slane %v2682, 1
        %v2784 = vsel %vm595, %v2782, %v2783
        %v2785 = vrot.slane %v2683, 1
        %v2786 = vsel %vm595, %v2783, %v2785
        %v2787 = vrot.slane %v2684, 1
        %v2788 = vrot.slane %v2685, 1
        %v2789 = vsel %vm595, %v2787, %v2788
        %v2790 = vrot.slane %v2686, 1
        %v2791 = vsel %vm595, %v2788, %v2790
        %v2792 = vrot.slane %v2687, 1
        %v2793 = vrot.slane %v2688, 1
        %v2794 = vsel %vm595, %v2792, %v2793
        %v2795 = vrot.slane %v2689, 1
        %v2796 = vsel %vm595, %v2793, %v2795
        %v2797 = vrot.slane %v2690, 1
        %v2798 = vrot.slane %v2691, 1
        %v2799 = vsel %vm595, %v2797, %v2798
        %v2800 = vrot.slane %v2692, 1
        %v2801 = vsel %vm595, %v2798, %v2800
        %v2802 = vrot.slane %v2693, 1
        %v2803 = vrot.slane %v2694, 1
        %v2804 = vsel %vm595, %v2802, %v2803
        %v2805 = vrot.slane %v2695, 1
        %v2806 = vsel %vm595, %v2803, %v2805
        %v2807 = vrot.slane %v2696, 1
        %v2808 = vrot.slane %v2697, 1
        %v2809 = vsel %vm595, %v2807, %v2808
        %v2810 = vrot.slane %v2698, 1
        %v2811 = vsel %vm595, %v2808, %v2810
        %v2812 = vrot.slane %v2699, 1
        %v2813 = vrot.slane %v2700, 1
        %v2814 = vsel %vm595, %v2812, %v2813
        %v2815 = vrot.slane %v2701, 1
        %v2816 = vsel %vm595, %v2813, %v2815
        %v2817 = vrot.slane %v2702, 1
        %v2818 = vrot.slane %v2703, 1
        %v2819 = vsel %vm595, %v2817, %v2818
        %v2820 = vrot.slane %v2704, 1
        %v2821 = vsel %vm595, %v2818, %v2820
        %v2822 = vrot.slane %v2705, 1
        %v2823 = vrot.slane %v2706, 1
        %v2824 = vsel %vm595, %v2822, %v2823
        %v2825 = vrot.slane %v2707, 1
        %v2826 = vsel %vm595, %v2823, %v2825
        %v2827 = vrot.slane %v2708, 1
        %v2828 = vrot.slane %v2709, 1
        %v2829 = vsel %vm595, %v2827, %v2828
        %v2830 = vrot.slane %v2710, 1
        %v2831 = vsel %vm595, %v2828, %v2830
        %v2832 = vrot.slane %v2711, 1
        %v2833 = vrot.slane %v2712, 1
        %v2834 = vsel %vm595, %v2832, %v2833
        %v2835 = vrot.slane %v2713, 1
        %v2836 = vsel %vm595, %v2833, %v2835
        %v2837 = vrot.slane %v2669, 2
        %v2838 = vrot.slane %v2670, 2
        %v2839 = vsel %vm673, %v2837, %v2838
        %v2840 = vrot.slane %v2671, 2
        %v2841 = vsel %vm673, %v2838, %v2840
        %v2842 = vrot.slane %v2672, 2
        %v2843 = vrot.slane %v2673, 2
        %v2844 = vsel %vm673, %v2842, %v2843
        %v2845 = vrot.slane %v2674, 2
        %v2846 = vsel %vm673, %v2843, %v2845
        %v2847 = vrot.slane %v2675, 2
        %v2848 = vrot.slane %v2676, 2
        %v2849 = vsel %vm673, %v2847, %v2848
        %v2850 = vrot.slane %v2677, 2
        %v2851 = vsel %vm673, %v2848, %v2850
        %v2852 = vrot.slane %v2678, 2
        %v2853 = vrot.slane %v2679, 2
        %v2854 = vsel %vm673, %v2852, %v2853
        %v2855 = vrot.slane %v2680, 2
        %v2856 = vsel %vm673, %v2853, %v2855
        %v2857 = vrot.slane %v2681, 2
        %v2858 = vrot.slane %v2682, 2
        %v2859 = vsel %vm673, %v2857, %v2858
        %v2860 = vrot.slane %v2683, 2
        %v2861 = vsel %vm673, %v2858, %v2860
        %v2862 = vrot.slane %v2684, 2
        %v2863 = vrot.slane %v2685, 2
        %v2864 = vsel %vm673, %v2862, %v2863
        %v2865 = vrot.slane %v2686, 2
        %v2866 = vsel %vm673, %v2863, %v2865
        %v2867 = vrot.slane %v2687, 2
        %v2868 = vrot.slane %v2688, 2
        %v2869 = vsel %vm673, %v2867, %v2868
        %v2870 = vrot.slane %v2689, 2
        %v2871 = vsel %vm673, %v2868, %v2870
        %v2872 = vrot.slane %v2690, 2
        %v2873 = vrot.slane %v2691, 2
        %v2874 = vsel %vm673, %v2872, %v2873
        %v2875 = vrot.slane %v2692, 2
        %v2876 = vsel %vm673, %v2873, %v2875
        %v2877 = vrot.slane %v2693, 2
        %v2878 = vrot.slane %v2694, 2
        %v2879 = vsel %vm673, %v2877, %v2878
        %v2880 = vrot.slane %v2695, 2
        %v2881 = vsel %vm673, %v2878, %v2880
        %v2882 = vrot.slane %v2696, 2
        %v2883 = vrot.slane %v2697, 2
        %v2884 = vsel %vm673, %v2882, %v2883
        %v2885 = vrot.slane %v2698, 2
        %v2886 = vsel %vm673, %v2883, %v2885
        %v2887 = vrot.slane %v2699, 2
        %v2888 = vrot.slane %v2700, 2
        %v2889 = vsel %vm673, %v2887, %v2888
        %v2890 = vrot.slane %v2701, 2
        %v2891 = vsel %vm673, %v2888, %v2890
        %v2892 = vrot.slane %v2702, 2
        %v2893 = vrot.slane %v2703, 2
        %v2894 = vsel %vm673, %v2892, %v2893
        %v2895 = vrot.slane %v2704, 2
        %v2896 = vsel %vm673, %v2893, %v2895
        %v2897 = vrot.slane %v2705, 2
        %v2898 = vrot.slane %v2706, 2
        %v2899 = vsel %vm673, %v2897, %v2898
        %v2900 = vrot.slane %v2707, 2
        %v2901 = vsel %vm673, %v2898, %v2900
        %v2902 = vrot.slane %v2708, 2
        %v2903 = vrot.slane %v2709, 2
        %v2904 = vsel %vm673, %v2902, %v2903
        %v2905 = vrot.slane %v2710, 2
        %v2906 = vsel %vm673, %v2903, %v2905
        %v2907 = vrot.slane %v2711, 2
        %v2908 = vrot.slane %v2712, 2
        %v2909 = vsel %vm673, %v2907, %v2908
        %v2910 = vrot.slane %v2713, 2
        %v2911 = vsel %vm673, %v2908, %v2910
        %v2915 = vrot.slane %v2714, 1
        %v2916 = vrot.slane %v2715, 1
        %v2917 = vsel %vm595, %v2915, %v2916
        %v2918 = vrot.slane %v2716, 1
        %v2919 = vsel %vm595, %v2916, %v2918
        %v2920 = vrot.slane %v2714, 2
        %v2921 = vrot.slane %v2715, 2
        %v2922 = vsel %vm673, %v2920, %v2921
        %v2923 = vrot.slane %v2716, 2
        %v2924 = vsel %vm673, %v2921, %v2923
        %2925 = vrot.lane.b32.xlu0 %v2764, 4
        %v2926 = vpop.permute.xlu0 %2925
        %2927 = vrot.lane.b32.xlu0 %v2766, 4
        %v2928 = vpop.permute.xlu0 %2927
        %2929 = vrot.lane.b32.xlu0 %v2769, 4
        %v2930 = vpop.permute.xlu0 %2929
        %2931 = vrot.lane.b32.xlu0 %v2771, 4
        %v2932 = vpop.permute.xlu0 %2931
        %2933 = vrot.lane.b32.xlu0 %v2774, 4
        %v2934 = vpop.permute.xlu0 %2933
        %2935 = vrot.lane.b32.xlu0 %v2776, 4
        %v2936 = vpop.permute.xlu0 %2935
        %2937 = vrot.lane.b32.xlu0 %v2779, 4
        %v2938 = vpop.permute.xlu0 %2937
        %2939 = vrot.lane.b32.xlu0 %v2781, 4
        %v2940 = vpop.permute.xlu0 %2939
        %2941 = vrot.lane.b32.xlu0 %v2784, 4
        %v2942 = vpop.permute.xlu0 %2941
        %2943 = vrot.lane.b32.xlu0 %v2786, 4
        %v2944 = vpop.permute.xlu0 %2943
        %2945 = vrot.lane.b32.xlu0 %v2789, 4
        %v2946 = vpop.permute.xlu0 %2945
        %2947 = vrot.lane.b32.xlu0 %v2791, 4
        %v2948 = vpop.permute.xlu0 %2947
        %2949 = vrot.lane.b32.xlu0 %v2794, 4
        %v2950 = vpop.permute.xlu0 %2949
        %2951 = vrot.lane.b32.xlu0 %v2796, 4
        %v2952 = vpop.permute.xlu0 %2951
        %2953 = vrot.lane.b32.xlu0 %v2799, 4
        %v2954 = vpop.permute.xlu0 %2953
        %2955 = vrot.lane.b32.xlu0 %v2801, 4
        %v2956 = vpop.permute.xlu0 %2955
        %2957 = vrot.lane.b32.xlu0 %v2804, 4
        %v2958 = vpop.permute.xlu0 %2957
        %2959 = vrot.lane.b32.xlu0 %v2806, 4
        %v2960 = vpop.permute.xlu0 %2959
        %2961 = vrot.lane.b32.xlu0 %v2809, 4
        %v2962 = vpop.permute.xlu0 %2961
        %2963 = vrot.lane.b32.xlu0 %v2811, 4
        %v2964 = vpop.permute.xlu0 %2963
        %2965 = vrot.lane.b32.xlu0 %v2814, 4
        %v2966 = vpop.permute.xlu0 %2965
        %2967 = vrot.lane.b32.xlu0 %v2816, 4
        %v2968 = vpop.permute.xlu0 %2967
        %2969 = vrot.lane.b32.xlu0 %v2819, 4
        %v2970 = vpop.permute.xlu0 %2969
        %2971 = vrot.lane.b32.xlu0 %v2821, 4
        %v2972 = vpop.permute.xlu0 %2971
        %2973 = vrot.lane.b32.xlu0 %v2824, 4
        %v2974 = vpop.permute.xlu0 %2973
        %2975 = vrot.lane.b32.xlu0 %v2826, 4
        %v2976 = vpop.permute.xlu0 %2975
        %2977 = vrot.lane.b32.xlu0 %v2829, 4
        %v2978 = vpop.permute.xlu0 %2977
        %2979 = vrot.lane.b32.xlu0 %v2831, 4
        %v2980 = vpop.permute.xlu0 %2979
        %2981 = vrot.lane.b32.xlu0 %v2834, 4
        %v2982 = vpop.permute.xlu0 %2981
        %2983 = vrot.lane.b32.xlu0 %v2836, 4
        %v2984 = vpop.permute.xlu0 %2983
        %3015 = vrot.lane.b32.xlu0 %v2839, 8
        %v3016 = vpop.permute.xlu0 %3015
        %3017 = vrot.lane.b32.xlu0 %v2841, 8
        %v3018 = vpop.permute.xlu0 %3017
        %3019 = vrot.lane.b32.xlu0 %v2844, 8
        %v3020 = vpop.permute.xlu0 %3019
        %3021 = vrot.lane.b32.xlu0 %v2846, 8
        %v3022 = vpop.permute.xlu0 %3021
        %3023 = vrot.lane.b32.xlu0 %v2849, 8
        %v3024 = vpop.permute.xlu0 %3023
        %3025 = vrot.lane.b32.xlu0 %v2851, 8
        %v3026 = vpop.permute.xlu0 %3025
        %3027 = vrot.lane.b32.xlu0 %v2854, 8
        %v3028 = vpop.permute.xlu0 %3027
        %3029 = vrot.lane.b32.xlu0 %v2856, 8
        %v3030 = vpop.permute.xlu0 %3029
        %3031 = vrot.lane.b32.xlu0 %v2859, 8
        %v3032 = vpop.permute.xlu0 %3031
        %3033 = vrot.lane.b32.xlu0 %v2861, 8
        %v3034 = vpop.permute.xlu0 %3033
        %3035 = vrot.lane.b32.xlu0 %v2864, 8
        %v3036 = vpop.permute.xlu0 %3035
        %3037 = vrot.lane.b32.xlu0 %v2866, 8
        %v3038 = vpop.permute.xlu0 %3037
        %3039 = vrot.lane.b32.xlu0 %v2869, 8
        %v3040 = vpop.permute.xlu0 %3039
        %3041 = vrot.lane.b32.xlu0 %v2871, 8
        %v3042 = vpop.permute.xlu0 %3041
        %3043 = vrot.lane.b32.xlu0 %v2874, 8
        %v3044 = vpop.permute.xlu0 %3043
        %3045 = vrot.lane.b32.xlu0 %v2876, 8
        %v3046 = vpop.permute.xlu0 %3045
        %3047 = vrot.lane.b32.xlu0 %v2879, 8
        %v3048 = vpop.permute.xlu0 %3047
        %3049 = vrot.lane.b32.xlu0 %v2881, 8
        %v3050 = vpop.permute.xlu0 %3049
        %3051 = vrot.lane.b32.xlu0 %v2884, 8
        %v3052 = vpop.permute.xlu0 %3051
        %3053 = vrot.lane.b32.xlu0 %v2886, 8
        %v3054 = vpop.permute.xlu0 %3053
        %3055 = vrot.lane.b32.xlu0 %v2889, 8
        %v3056 = vpop.permute.xlu0 %3055
        %3057 = vrot.lane.b32.xlu0 %v2891, 8
        %v3058 = vpop.permute.xlu0 %3057
        %3059 = vrot.lane.b32.xlu0 %v2894, 8
        %v3060 = vpop.permute.xlu0 %3059
        %3061 = vrot.lane.b32.xlu0 %v2896, 8
        %v3062 = vpop.permute.xlu0 %3061
        %3063 = vrot.lane.b32.xlu0 %v2899, 8
        %v3064 = vpop.permute.xlu0 %3063
        %3065 = vrot.lane.b32.xlu0 %v2901, 8
        %v3066 = vpop.permute.xlu0 %3065
        %3067 = vrot.lane.b32.xlu0 %v2904, 8
        %v3068 = vpop.permute.xlu0 %3067
        %3069 = vrot.lane.b32.xlu0 %v2906, 8
        %v3070 = vpop.permute.xlu0 %3069
        %3071 = vrot.lane.b32.xlu0 %v2909, 8
        %v3072 = vpop.permute.xlu0 %3071
        %3073 = vrot.lane.b32.xlu0 %v2911, 8
        %v3074 = vpop.permute.xlu0 %3073
        %3105 = vrot.lane.b32.xlu0 %v2669, 12
        %v3106 = vpop.permute.xlu0 %3105
        %3107 = vrot.lane.b32.xlu0 %v2670, 12
        %v3108 = vpop.permute.xlu0 %3107
        %3109 = vrot.lane.b32.xlu0 %v2672, 12
        %v3110 = vpop.permute.xlu0 %3109
        %3111 = vrot.lane.b32.xlu0 %v2673, 12
        %v3112 = vpop.permute.xlu0 %3111
        %3113 = vrot.lane.b32.xlu0 %v2675, 12
        %v3114 = vpop.permute.xlu0 %3113
        %3115 = vrot.lane.b32.xlu0 %v2676, 12
        %v3116 = vpop.permute.xlu0 %3115
        %3117 = vrot.lane.b32.xlu0 %v2678, 12
        %v3118 = vpop.permute.xlu0 %3117
        %3119 = vrot.lane.b32.xlu0 %v2679, 12
        %v3120 = vpop.permute.xlu0 %3119
        %3121 = vrot.lane.b32.xlu0 %v2681, 12
        %v3122 = vpop.permute.xlu0 %3121
        %3123 = vrot.lane.b32.xlu0 %v2682, 12
        %v3124 = vpop.permute.xlu0 %3123
        %3125 = vrot.lane.b32.xlu0 %v2684, 12
        %v3126 = vpop.permute.xlu0 %3125
        %3127 = vrot.lane.b32.xlu0 %v2685, 12
        %v3128 = vpop.permute.xlu0 %3127
        %3129 = vrot.lane.b32.xlu0 %v2687, 12
        %v3130 = vpop.permute.xlu0 %3129
        %3131 = vrot.lane.b32.xlu0 %v2688, 12
        %v3132 = vpop.permute.xlu0 %3131
        %3133 = vrot.lane.b32.xlu0 %v2690, 12
        %v3134 = vpop.permute.xlu0 %3133
        %3135 = vrot.lane.b32.xlu0 %v2691, 12
        %v3136 = vpop.permute.xlu0 %3135
        %3137 = vrot.lane.b32.xlu0 %v2693, 12
        %v3138 = vpop.permute.xlu0 %3137
        %3139 = vrot.lane.b32.xlu0 %v2694, 12
        %v3140 = vpop.permute.xlu0 %3139
        %3141 = vrot.lane.b32.xlu0 %v2696, 12
        %v3142 = vpop.permute.xlu0 %3141
        %3143 = vrot.lane.b32.xlu0 %v2697, 12
        %v3144 = vpop.permute.xlu0 %3143
        %3145 = vrot.lane.b32.xlu0 %v2699, 12
        %v3146 = vpop.permute.xlu0 %3145
        %3147 = vrot.lane.b32.xlu0 %v2700, 12
        %v3148 = vpop.permute.xlu0 %3147
        %3149 = vrot.lane.b32.xlu0 %v2702, 12
        %v3150 = vpop.permute.xlu0 %3149
        %3151 = vrot.lane.b32.xlu0 %v2703, 12
        %v3152 = vpop.permute.xlu0 %3151
        %3153 = vrot.lane.b32.xlu0 %v2705, 12
        %v3154 = vpop.permute.xlu0 %3153
        %3155 = vrot.lane.b32.xlu0 %v2706, 12
        %v3156 = vpop.permute.xlu0 %3155
        %3157 = vrot.lane.b32.xlu0 %v2708, 12
        %v3158 = vpop.permute.xlu0 %3157
        %3159 = vrot.lane.b32.xlu0 %v2709, 12
        %v3160 = vpop.permute.xlu0 %3159
        %3161 = vrot.lane.b32.xlu0 %v2711, 12
        %v3162 = vpop.permute.xlu0 %3161
        %3163 = vrot.lane.b32.xlu0 %v2712, 12
        %v3164 = vpop.permute.xlu0 %3163
        %3165 = vrot.lane.b32.xlu0 %v2714, 12
        %v3166 = vpop.permute.xlu0 %3165
        %3167 = vrot.lane.b32.xlu0 %v2715, 12
        %v3168 = vpop.permute.xlu0 %3167
        %3201 = vrot.lane.b32.xlu0 %v2764, 16
        %v3202 = vpop.permute.xlu0 %3201
        %3203 = vrot.lane.b32.xlu0 %v2766, 16
        %v3204 = vpop.permute.xlu0 %3203
        %3205 = vrot.lane.b32.xlu0 %v2769, 16
        %v3206 = vpop.permute.xlu0 %3205
        %3207 = vrot.lane.b32.xlu0 %v2771, 16
        %v3208 = vpop.permute.xlu0 %3207
        %3209 = vrot.lane.b32.xlu0 %v2774, 16
        %v3210 = vpop.permute.xlu0 %3209
        %3211 = vrot.lane.b32.xlu0 %v2776, 16
        %v3212 = vpop.permute.xlu0 %3211
        %3213 = vrot.lane.b32.xlu0 %v2779, 16
        %v3214 = vpop.permute.xlu0 %3213
        %3215 = vrot.lane.b32.xlu0 %v2781, 16
        %v3216 = vpop.permute.xlu0 %3215
        %3217 = vrot.lane.b32.xlu0 %v2784, 16
        %v3218 = vpop.permute.xlu0 %3217
        %3219 = vrot.lane.b32.xlu0 %v2786, 16
        %v3220 = vpop.permute.xlu0 %3219
        %3221 = vrot.lane.b32.xlu0 %v2789, 16
        %v3222 = vpop.permute.xlu0 %3221
        %3223 = vrot.lane.b32.xlu0 %v2791, 16
        %v3224 = vpop.permute.xlu0 %3223
        %3225 = vrot.lane.b32.xlu0 %v2794, 16
        %v3226 = vpop.permute.xlu0 %3225
        %3227 = vrot.lane.b32.xlu0 %v2796, 16
        %v3228 = vpop.permute.xlu0 %3227
        %3229 = vrot.lane.b32.xlu0 %v2799, 16
        %v3230 = vpop.permute.xlu0 %3229
        %3231 = vrot.lane.b32.xlu0 %v2801, 16
        %v3232 = vpop.permute.xlu0 %3231
        %3233 = vrot.lane.b32.xlu0 %v2804, 16
        %v3234 = vpop.permute.xlu0 %3233
        %3235 = vrot.lane.b32.xlu0 %v2806, 16
        %v3236 = vpop.permute.xlu0 %3235
        %3237 = vrot.lane.b32.xlu0 %v2809, 16
        %v3238 = vpop.permute.xlu0 %3237
        %3239 = vrot.lane.b32.xlu0 %v2811, 16
        %v3240 = vpop.permute.xlu0 %3239
        %3241 = vrot.lane.b32.xlu0 %v2814, 16
        %v3242 = vpop.permute.xlu0 %3241
        %3243 = vrot.lane.b32.xlu0 %v2816, 16
        %v3244 = vpop.permute.xlu0 %3243
        %3245 = vrot.lane.b32.xlu0 %v2819, 16
        %v3246 = vpop.permute.xlu0 %3245
        %3247 = vrot.lane.b32.xlu0 %v2821, 16
        %v3248 = vpop.permute.xlu0 %3247
        %3249 = vrot.lane.b32.xlu0 %v2824, 16
        %v3250 = vpop.permute.xlu0 %3249
        %3251 = vrot.lane.b32.xlu0 %v2826, 16
        %v3252 = vpop.permute.xlu0 %3251
        %3253 = vrot.lane.b32.xlu0 %v2829, 16
        %v3254 = vpop.permute.xlu0 %3253
        %3255 = vrot.lane.b32.xlu0 %v2831, 16
        %v3256 = vpop.permute.xlu0 %3255
        %3257 = vrot.lane.b32.xlu0 %v2834, 16
        %v3258 = vpop.permute.xlu0 %3257
        %3259 = vrot.lane.b32.xlu0 %v2836, 16
        %v3260 = vpop.permute.xlu0 %3259
        %3261 = vrot.lane.b32.xlu0 %v2917, 16
        %v3262 = vpop.permute.xlu0 %3261
        %3263 = vrot.lane.b32.xlu0 %v2919, 16
        %v3264 = vpop.permute.xlu0 %3263
        %3297 = vrot.lane.b32.xlu0 %v2839, 20
        %v3298 = vpop.permute.xlu0 %3297
        %3299 = vrot.lane.b32.xlu0 %v2841, 20
        %v3300 = vpop.permute.xlu0 %3299
        %3301 = vrot.lane.b32.xlu0 %v2844, 20
        %v3302 = vpop.permute.xlu0 %3301
        %3303 = vrot.lane.b32.xlu0 %v2846, 20
        %v3304 = vpop.permute.xlu0 %3303
        %3305 = vrot.lane.b32.xlu0 %v2849, 20
        %v3306 = vpop.permute.xlu0 %3305
        %3307 = vrot.lane.b32.xlu0 %v2851, 20
        %v3308 = vpop.permute.xlu0 %3307
        %3309 = vrot.lane.b32.xlu0 %v2854, 20
        %v3310 = vpop.permute.xlu0 %3309
        %3311 = vrot.lane.b32.xlu0 %v2856, 20
        %v3312 = vpop.permute.xlu0 %3311
        %3313 = vrot.lane.b32.xlu0 %v2859, 20
        %v3314 = vpop.permute.xlu0 %3313
        %3315 = vrot.lane.b32.xlu0 %v2861, 20
        %v3316 = vpop.permute.xlu0 %3315
        %3317 = vrot.lane.b32.xlu0 %v2864, 20
        %v3318 = vpop.permute.xlu0 %3317
        %3319 = vrot.lane.b32.xlu0 %v2866, 20
        %v3320 = vpop.permute.xlu0 %3319
        %3321 = vrot.lane.b32.xlu0 %v2869, 20
        %v3322 = vpop.permute.xlu0 %3321
        %3323 = vrot.lane.b32.xlu0 %v2871, 20
        %v3324 = vpop.permute.xlu0 %3323
        %3325 = vrot.lane.b32.xlu0 %v2874, 20
        %v3326 = vpop.permute.xlu0 %3325
        %3327 = vrot.lane.b32.xlu0 %v2876, 20
        %v3328 = vpop.permute.xlu0 %3327
        %3329 = vrot.lane.b32.xlu0 %v2879, 20
        %v3330 = vpop.permute.xlu0 %3329
        %3331 = vrot.lane.b32.xlu0 %v2881, 20
        %v3332 = vpop.permute.xlu0 %3331
        %3333 = vrot.lane.b32.xlu0 %v2884, 20
        %v3334 = vpop.permute.xlu0 %3333
        %3335 = vrot.lane.b32.xlu0 %v2886, 20
        %v3336 = vpop.permute.xlu0 %3335
        %3337 = vrot.lane.b32.xlu0 %v2889, 20
        %v3338 = vpop.permute.xlu0 %3337
        %3339 = vrot.lane.b32.xlu0 %v2891, 20
        %v3340 = vpop.permute.xlu0 %3339
        %3341 = vrot.lane.b32.xlu0 %v2894, 20
        %v3342 = vpop.permute.xlu0 %3341
        %3343 = vrot.lane.b32.xlu0 %v2896, 20
        %v3344 = vpop.permute.xlu0 %3343
        %3345 = vrot.lane.b32.xlu0 %v2899, 20
        %v3346 = vpop.permute.xlu0 %3345
        %3347 = vrot.lane.b32.xlu0 %v2901, 20
        %v3348 = vpop.permute.xlu0 %3347
        %3349 = vrot.lane.b32.xlu0 %v2904, 20
        %v3350 = vpop.permute.xlu0 %3349
        %3351 = vrot.lane.b32.xlu0 %v2906, 20
        %v3352 = vpop.permute.xlu0 %3351
        %3353 = vrot.lane.b32.xlu0 %v2909, 20
        %v3354 = vpop.permute.xlu0 %3353
        %3355 = vrot.lane.b32.xlu0 %v2911, 20
        %v3356 = vpop.permute.xlu0 %3355
        %3357 = vrot.lane.b32.xlu0 %v2922, 20
        %v3358 = vpop.permute.xlu0 %3357
        %3359 = vrot.lane.b32.xlu0 %v2924, 20
        %v3360 = vpop.permute.xlu0 %3359
        %3393 = vrot.lane.b32.xlu0 %v2672, 24
        %v3394 = vpop.permute.xlu0 %3393
        %3395 = vrot.lane.b32.xlu0 %v2673, 24
        %v3396 = vpop.permute.xlu0 %3395
        %3397 = vrot.lane.b32.xlu0 %v2675, 24
        %v3398 = vpop.permute.xlu0 %3397
        %3399 = vrot.lane.b32.xlu0 %v2676, 24
        %v3400 = vpop.permute.xlu0 %3399
        %3401 = vrot.lane.b32.xlu0 %v2678, 24
        %v3402 = vpop.permute.xlu0 %3401
        %3403 = vrot.lane.b32.xlu0 %v2679, 24
        %v3404 = vpop.permute.xlu0 %3403
        %3405 = vrot.lane.b32.xlu0 %v2681, 24
        %v3406 = vpop.permute.xlu0 %3405
        %3407 = vrot.lane.b32.xlu0 %v2682, 24
        %v3408 = vpop.permute.xlu0 %3407
        %3409 = vrot.lane.b32.xlu0 %v2684, 24
        %v3410 = vpop.permute.xlu0 %3409
        %3411 = vrot.lane.b32.xlu0 %v2685, 24
        %v3412 = vpop.permute.xlu0 %3411
        %3413 = vrot.lane.b32.xlu0 %v2687, 24
        %v3414 = vpop.permute.xlu0 %3413
        %3415 = vrot.lane.b32.xlu0 %v2688, 24
        %v3416 = vpop.permute.xlu0 %3415
        %3417 = vrot.lane.b32.xlu0 %v2690, 24
        %v3418 = vpop.permute.xlu0 %3417
        %3419 = vrot.lane.b32.xlu0 %v2691, 24
        %v3420 = vpop.permute.xlu0 %3419
        %3421 = vrot.lane.b32.xlu0 %v2693, 24
        %v3422 = vpop.permute.xlu0 %3421
        %3423 = vrot.lane.b32.xlu0 %v2694, 24
        %v3424 = vpop.permute.xlu0 %3423
        %3425 = vrot.lane.b32.xlu0 %v2696, 24
        %v3426 = vpop.permute.xlu0 %3425
        %3427 = vrot.lane.b32.xlu0 %v2697, 24
        %v3428 = vpop.permute.xlu0 %3427
        %3429 = vrot.lane.b32.xlu0 %v2699, 24
        %v3430 = vpop.permute.xlu0 %3429
        %3431 = vrot.lane.b32.xlu0 %v2700, 24
        %v3432 = vpop.permute.xlu0 %3431
        %3433 = vrot.lane.b32.xlu0 %v2702, 24
        %v3434 = vpop.permute.xlu0 %3433
        %3435 = vrot.lane.b32.xlu0 %v2703, 24
        %v3436 = vpop.permute.xlu0 %3435
        %3437 = vrot.lane.b32.xlu0 %v2705, 24
        %v3438 = vpop.permute.xlu0 %3437
        %3439 = vrot.lane.b32.xlu0 %v2706, 24
        %v3440 = vpop.permute.xlu0 %3439
        %3441 = vrot.lane.b32.xlu0 %v2708, 24
        %v3442 = vpop.permute.xlu0 %3441
        %3443 = vrot.lane.b32.xlu0 %v2709, 24
        %v3444 = vpop.permute.xlu0 %3443
        %3445 = vrot.lane.b32.xlu0 %v2711, 24
        %v3446 = vpop.permute.xlu0 %3445
        %3447 = vrot.lane.b32.xlu0 %v2712, 24
        %v3448 = vpop.permute.xlu0 %3447
        %3449 = vrot.lane.b32.xlu0 %v2714, 24
        %v3450 = vpop.permute.xlu0 %3449
        %3451 = vrot.lane.b32.xlu0 %v2715, 24
        %v3452 = vpop.permute.xlu0 %3451
        %3483 = vrot.lane.b32.xlu0 %v2769, 28
        %v3484 = vpop.permute.xlu0 %3483
        %3485 = vrot.lane.b32.xlu0 %v2771, 28
        %v3486 = vpop.permute.xlu0 %3485
        %3487 = vrot.lane.b32.xlu0 %v2774, 28
        %v3488 = vpop.permute.xlu0 %3487
        %3489 = vrot.lane.b32.xlu0 %v2776, 28
        %v3490 = vpop.permute.xlu0 %3489
        %3491 = vrot.lane.b32.xlu0 %v2779, 28
        %v3492 = vpop.permute.xlu0 %3491
        %3493 = vrot.lane.b32.xlu0 %v2781, 28
        %v3494 = vpop.permute.xlu0 %3493
        %3495 = vrot.lane.b32.xlu0 %v2784, 28
        %v3496 = vpop.permute.xlu0 %3495
        %3497 = vrot.lane.b32.xlu0 %v2786, 28
        %v3498 = vpop.permute.xlu0 %3497
        %3499 = vrot.lane.b32.xlu0 %v2789, 28
        %v3500 = vpop.permute.xlu0 %3499
        %3501 = vrot.lane.b32.xlu0 %v2791, 28
        %v3502 = vpop.permute.xlu0 %3501
        %3503 = vrot.lane.b32.xlu0 %v2794, 28
        %v3504 = vpop.permute.xlu0 %3503
        %3505 = vrot.lane.b32.xlu0 %v2796, 28
        %v3506 = vpop.permute.xlu0 %3505
        %3507 = vrot.lane.b32.xlu0 %v2799, 28
        %v3508 = vpop.permute.xlu0 %3507
        %3509 = vrot.lane.b32.xlu0 %v2801, 28
        %v3510 = vpop.permute.xlu0 %3509
        %3511 = vrot.lane.b32.xlu0 %v2804, 28
        %v3512 = vpop.permute.xlu0 %3511
        %3513 = vrot.lane.b32.xlu0 %v2806, 28
        %v3514 = vpop.permute.xlu0 %3513
        %3515 = vrot.lane.b32.xlu0 %v2809, 28
        %v3516 = vpop.permute.xlu0 %3515
        %3517 = vrot.lane.b32.xlu0 %v2811, 28
        %v3518 = vpop.permute.xlu0 %3517
        %3519 = vrot.lane.b32.xlu0 %v2814, 28
        %v3520 = vpop.permute.xlu0 %3519
        %3521 = vrot.lane.b32.xlu0 %v2816, 28
        %v3522 = vpop.permute.xlu0 %3521
        %3523 = vrot.lane.b32.xlu0 %v2819, 28
        %v3524 = vpop.permute.xlu0 %3523
        %3525 = vrot.lane.b32.xlu0 %v2821, 28
        %v3526 = vpop.permute.xlu0 %3525
        %3527 = vrot.lane.b32.xlu0 %v2824, 28
        %v3528 = vpop.permute.xlu0 %3527
        %3529 = vrot.lane.b32.xlu0 %v2826, 28
        %v3530 = vpop.permute.xlu0 %3529
        %3531 = vrot.lane.b32.xlu0 %v2829, 28
        %v3532 = vpop.permute.xlu0 %3531
        %3533 = vrot.lane.b32.xlu0 %v2831, 28
        %v3534 = vpop.permute.xlu0 %3533
        %3535 = vrot.lane.b32.xlu0 %v2834, 28
        %v3536 = vpop.permute.xlu0 %3535
        %3537 = vrot.lane.b32.xlu0 %v2836, 28
        %v3538 = vpop.permute.xlu0 %3537
        %3539 = vrot.lane.b32.xlu0 %v2917, 28
        %v3540 = vpop.permute.xlu0 %3539
        %3541 = vrot.lane.b32.xlu0 %v2919, 28
        %v3542 = vpop.permute.xlu0 %3541
        %3573 = vrot.lane.b32.xlu0 %v2844, 32
        %v3574 = vpop.permute.xlu0 %3573
        %3575 = vrot.lane.b32.xlu0 %v2846, 32
        %v3576 = vpop.permute.xlu0 %3575
        %3577 = vrot.lane.b32.xlu0 %v2849, 32
        %v3578 = vpop.permute.xlu0 %3577
        %3579 = vrot.lane.b32.xlu0 %v2851, 32
        %v3580 = vpop.permute.xlu0 %3579
        %3581 = vrot.lane.b32.xlu0 %v2854, 32
        %v3582 = vpop.permute.xlu0 %3581
        %3583 = vrot.lane.b32.xlu0 %v2856, 32
        %v3584 = vpop.permute.xlu0 %3583
        %3585 = vrot.lane.b32.xlu0 %v2859, 32
        %v3586 = vpop.permute.xlu0 %3585
        %3587 = vrot.lane.b32.xlu0 %v2861, 32
        %v3588 = vpop.permute.xlu0 %3587
        %3589 = vrot.lane.b32.xlu0 %v2864, 32
        %v3590 = vpop.permute.xlu0 %3589
        %3591 = vrot.lane.b32.xlu0 %v2866, 32
        %v3592 = vpop.permute.xlu0 %3591
        %3593 = vrot.lane.b32.xlu0 %v2869, 32
        %v3594 = vpop.permute.xlu0 %3593
        %3595 = vrot.lane.b32.xlu0 %v2871, 32
        %v3596 = vpop.permute.xlu0 %3595
        %3597 = vrot.lane.b32.xlu0 %v2874, 32
        %v3598 = vpop.permute.xlu0 %3597
        %3599 = vrot.lane.b32.xlu0 %v2876, 32
        %v3600 = vpop.permute.xlu0 %3599
        %3601 = vrot.lane.b32.xlu0 %v2879, 32
        %v3602 = vpop.permute.xlu0 %3601
        %3603 = vrot.lane.b32.xlu0 %v2881, 32
        %v3604 = vpop.permute.xlu0 %3603
        %3605 = vrot.lane.b32.xlu0 %v2884, 32
        %v3606 = vpop.permute.xlu0 %3605
        %3607 = vrot.lane.b32.xlu0 %v2886, 32
        %v3608 = vpop.permute.xlu0 %3607
        %3609 = vrot.lane.b32.xlu0 %v2889, 32
        %v3610 = vpop.permute.xlu0 %3609
        %3611 = vrot.lane.b32.xlu0 %v2891, 32
        %v3612 = vpop.permute.xlu0 %3611
        %3613 = vrot.lane.b32.xlu0 %v2894, 32
        %v3614 = vpop.permute.xlu0 %3613
        %3615 = vrot.lane.b32.xlu0 %v2896, 32
        %v3616 = vpop.permute.xlu0 %3615
        %3617 = vrot.lane.b32.xlu0 %v2899, 32
        %v3618 = vpop.permute.xlu0 %3617
        %3619 = vrot.lane.b32.xlu0 %v2901, 32
        %v3620 = vpop.permute.xlu0 %3619
        %3621 = vrot.lane.b32.xlu0 %v2904, 32
        %v3622 = vpop.permute.xlu0 %3621
        %3623 = vrot.lane.b32.xlu0 %v2906, 32
        %v3624 = vpop.permute.xlu0 %3623
        %3625 = vrot.lane.b32.xlu0 %v2909, 32
        %v3626 = vpop.permute.xlu0 %3625
        %3627 = vrot.lane.b32.xlu0 %v2911, 32
        %v3628 = vpop.permute.xlu0 %3627
        %3629 = vrot.lane.b32.xlu0 %v2922, 32
        %v3630 = vpop.permute.xlu0 %3629
        %3631 = vrot.lane.b32.xlu0 %v2924, 32
        %v3632 = vpop.permute.xlu0 %3631
        %v3663 = vsel %vm1517, %v2669, %v2926
        %v3664 = vsel %vm1517, %v2670, %v2928
        %v3665 = vsel %vm1517, %v2672, %v2930
        %v3666 = vsel %vm1517, %v2673, %v2932
        %v3667 = vsel %vm1517, %v2675, %v2934
        %v3668 = vsel %vm1517, %v2676, %v2936
        %v3669 = vsel %vm1517, %v2678, %v2938
        %v3670 = vsel %vm1517, %v2679, %v2940
        %v3671 = vsel %vm1517, %v2681, %v2942
        %v3672 = vsel %vm1517, %v2682, %v2944
        %v3673 = vsel %vm1517, %v2684, %v2946
        %v3674 = vsel %vm1517, %v2685, %v2948
        %v3675 = vsel %vm1517, %v2687, %v2950
        %v3676 = vsel %vm1517, %v2688, %v2952
        %v3677 = vsel %vm1517, %v2690, %v2954
        %v3678 = vsel %vm1517, %v2691, %v2956
        %v3679 = vsel %vm1517, %v2693, %v2958
        %v3680 = vsel %vm1517, %v2694, %v2960
        %v3681 = vsel %vm1517, %v2696, %v2962
        %v3682 = vsel %vm1517, %v2697, %v2964
        %v3683 = vsel %vm1517, %v2699, %v2966
        %v3684 = vsel %vm1517, %v2700, %v2968
        %v3685 = vsel %vm1517, %v2702, %v2970
        %v3686 = vsel %vm1517, %v2703, %v2972
        %v3687 = vsel %vm1517, %v2705, %v2974
        %v3688 = vsel %vm1517, %v2706, %v2976
        %v3689 = vsel %vm1517, %v2708, %v2978
        %v3690 = vsel %vm1517, %v2709, %v2980
        %v3691 = vsel %vm1517, %v2711, %v2982
        %v3692 = vsel %vm1517, %v2712, %v2984
        %v3693 = vsel %vm1549, %v3663, %v3016
        %v3694 = vsel %vm1549, %v3664, %v3018
        %v3695 = vsel %vm1549, %v3665, %v3020
        %v3696 = vsel %vm1549, %v3666, %v3022
        %v3697 = vsel %vm1549, %v3667, %v3024
        %v3698 = vsel %vm1549, %v3668, %v3026
        %v3699 = vsel %vm1549, %v3669, %v3028
        %v3700 = vsel %vm1549, %v3670, %v3030
        %v3701 = vsel %vm1549, %v3671, %v3032
        %v3702 = vsel %vm1549, %v3672, %v3034
        %v3703 = vsel %vm1549, %v3673, %v3036
        %v3704 = vsel %vm1549, %v3674, %v3038
        %v3705 = vsel %vm1549, %v3675, %v3040
        %v3706 = vsel %vm1549, %v3676, %v3042
        %v3707 = vsel %vm1549, %v3677, %v3044
        %v3708 = vsel %vm1549, %v3678, %v3046
        %v3709 = vsel %vm1549, %v3679, %v3048
        %v3710 = vsel %vm1549, %v3680, %v3050
        %v3711 = vsel %vm1549, %v3681, %v3052
        %v3712 = vsel %vm1549, %v3682, %v3054
        %v3713 = vsel %vm1549, %v3683, %v3056
        %v3714 = vsel %vm1549, %v3684, %v3058
        %v3715 = vsel %vm1549, %v3685, %v3060
        %v3716 = vsel %vm1549, %v3686, %v3062
        %v3717 = vsel %vm1549, %v3687, %v3064
        %v3718 = vsel %vm1549, %v3688, %v3066
        %v3719 = vsel %vm1549, %v3689, %v3068
        %v3720 = vsel %vm1549, %v3690, %v3070
        %v3721 = vsel %vm1549, %v3691, %v3072
        %v3722 = vsel %vm1549, %v3692, %v3074
        %v3723 = vsel %vm1581, %v1550, %v3106
        %v3724 = vsel %vm1581, %v1550, %v3108
        %v3725 = vsel %vm1581, %v3693, %v3110
        %v3726 = vsel %vm1581, %v3694, %v3112
        %v3727 = vsel %vm1581, %v3695, %v3114
        %v3728 = vsel %vm1581, %v3696, %v3116
        %v3729 = vsel %vm1581, %v3697, %v3118
        %v3730 = vsel %vm1581, %v3698, %v3120
        %v3731 = vsel %vm1581, %v3699, %v3122
        %v3732 = vsel %vm1581, %v3700, %v3124
        %v3733 = vsel %vm1581, %v3701, %v3126
        %v3734 = vsel %vm1581, %v3702, %v3128
        %v3735 = vsel %vm1581, %v3703, %v3130
        %v3736 = vsel %vm1581, %v3704, %v3132
        %v3737 = vsel %vm1581, %v3705, %v3134
        %v3738 = vsel %vm1581, %v3706, %v3136
        %v3739 = vsel %vm1581, %v3707, %v3138
        %v3740 = vsel %vm1581, %v3708, %v3140
        %v3741 = vsel %vm1581, %v3709, %v3142
        %v3742 = vsel %vm1581, %v3710, %v3144
        %v3743 = vsel %vm1581, %v3711, %v3146
        %v3744 = vsel %vm1581, %v3712, %v3148
        %v3745 = vsel %vm1581, %v3713, %v3150
        %v3746 = vsel %vm1581, %v3714, %v3152
        %v3747 = vsel %vm1581, %v3715, %v3154
        %v3748 = vsel %vm1581, %v3716, %v3156
        %v3749 = vsel %vm1581, %v3717, %v3158
        %v3750 = vsel %vm1581, %v3718, %v3160
        %v3751 = vsel %vm1581, %v3719, %v3162
        %v3752 = vsel %vm1581, %v3720, %v3164
        %v3753 = vsel %vm1581, %v3721, %v3166
        %v3754 = vsel %vm1581, %v3722, %v3168
        %v3755 = vsel %vm1614, %v3723, %v3202
        %v3756 = vsel %vm1614, %v3724, %v3204
        %v3757 = vsel %vm1614, %v3725, %v3206
        %v3758 = vsel %vm1614, %v3726, %v3208
        %v3759 = vsel %vm1614, %v3727, %v3210
        %v3760 = vsel %vm1614, %v3728, %v3212
        %v3761 = vsel %vm1614, %v3729, %v3214
        %v3762 = vsel %vm1614, %v3730, %v3216
        %v3763 = vsel %vm1614, %v3731, %v3218
        %v3764 = vsel %vm1614, %v3732, %v3220
        %v3765 = vsel %vm1614, %v3733, %v3222
        %v3766 = vsel %vm1614, %v3734, %v3224
        %v3767 = vsel %vm1614, %v3735, %v3226
        %v3768 = vsel %vm1614, %v3736, %v3228
        %v3769 = vsel %vm1614, %v3737, %v3230
        %v3770 = vsel %vm1614, %v3738, %v3232
        %v3771 = vsel %vm1614, %v3739, %v3234
        %v3772 = vsel %vm1614, %v3740, %v3236
        %v3773 = vsel %vm1614, %v3741, %v3238
        %v3774 = vsel %vm1614, %v3742, %v3240
        %v3775 = vsel %vm1614, %v3743, %v3242
        %v3776 = vsel %vm1614, %v3744, %v3244
        %v3777 = vsel %vm1614, %v3745, %v3246
        %v3778 = vsel %vm1614, %v3746, %v3248
        %v3779 = vsel %vm1614, %v3747, %v3250
        %v3780 = vsel %vm1614, %v3748, %v3252
        %v3781 = vsel %vm1614, %v3749, %v3254
        %v3782 = vsel %vm1614, %v3750, %v3256
        %v3783 = vsel %vm1614, %v3751, %v3258
        %v3784 = vsel %vm1614, %v3752, %v3260
        %v3785 = vsel %vm1614, %v3753, %v3262
        %v3786 = vsel %vm1614, %v3754, %v3264
        %v3787 = vsel %vm1647, %v3755, %v3298
        %v3788 = vsel %vm1647, %v3756, %v3300
        %v3789 = vsel %vm1647, %v3757, %v3302
        %v3790 = vsel %vm1647, %v3758, %v3304
        %v3791 = vsel %vm1647, %v3759, %v3306
        %v3792 = vsel %vm1647, %v3760, %v3308
        %v3793 = vsel %vm1647, %v3761, %v3310
        %v3794 = vsel %vm1647, %v3762, %v3312
        %v3795 = vsel %vm1647, %v3763, %v3314
        %v3796 = vsel %vm1647, %v3764, %v3316
        %v3797 = vsel %vm1647, %v3765, %v3318
        %v3798 = vsel %vm1647, %v3766, %v3320
        %v3799 = vsel %vm1647, %v3767, %v3322
        %v3800 = vsel %vm1647, %v3768, %v3324
        %v3801 = vsel %vm1647, %v3769, %v3326
        %v3802 = vsel %vm1647, %v3770, %v3328
        %v3803 = vsel %vm1647, %v3771, %v3330
        %v3804 = vsel %vm1647, %v3772, %v3332
        %v3805 = vsel %vm1647, %v3773, %v3334
        %v3806 = vsel %vm1647, %v3774, %v3336
        %v3807 = vsel %vm1647, %v3775, %v3338
        %v3808 = vsel %vm1647, %v3776, %v3340
        %v3809 = vsel %vm1647, %v3777, %v3342
        %v3810 = vsel %vm1647, %v3778, %v3344
        %v3811 = vsel %vm1647, %v3779, %v3346
        %v3812 = vsel %vm1647, %v3780, %v3348
        %v3813 = vsel %vm1647, %v3781, %v3350
        %v3814 = vsel %vm1647, %v3782, %v3352
        %v3815 = vsel %vm1647, %v3783, %v3354
        %v3816 = vsel %vm1647, %v3784, %v3356
        %v3817 = vsel %vm1647, %v3785, %v3358
        %v3818 = vsel %vm1647, %v3786, %v3360
        %v3819 = vsel %vm1680, %v3787, %v3394
        %v3820 = vsel %vm1680, %v3788, %v3396
        %v3821 = vsel %vm1680, %v3789, %v3398
        %v3822 = vsel %vm1680, %v3790, %v3400
        %v3823 = vsel %vm1680, %v3791, %v3402
        %v3824 = vsel %vm1680, %v3792, %v3404
        %v3825 = vsel %vm1680, %v3793, %v3406
        %v3826 = vsel %vm1680, %v3794, %v3408
        %v3827 = vsel %vm1680, %v3795, %v3410
        %v3828 = vsel %vm1680, %v3796, %v3412
        %v3829 = vsel %vm1680, %v3797, %v3414
        %v3830 = vsel %vm1680, %v3798, %v3416
        %v3831 = vsel %vm1680, %v3799, %v3418
        %v3832 = vsel %vm1680, %v3800, %v3420
        %v3833 = vsel %vm1680, %v3801, %v3422
        %v3834 = vsel %vm1680, %v3802, %v3424
        %v3835 = vsel %vm1680, %v3803, %v3426
        %v3836 = vsel %vm1680, %v3804, %v3428
        %v3837 = vsel %vm1680, %v3805, %v3430
        %v3838 = vsel %vm1680, %v3806, %v3432
        %v3839 = vsel %vm1680, %v3807, %v3434
        %v3840 = vsel %vm1680, %v3808, %v3436
        %v3841 = vsel %vm1680, %v3809, %v3438
        %v3842 = vsel %vm1680, %v3810, %v3440
        %v3843 = vsel %vm1680, %v3811, %v3442
        %v3844 = vsel %vm1680, %v3812, %v3444
        %v3845 = vsel %vm1680, %v3813, %v3446
        %v3846 = vsel %vm1680, %v3814, %v3448
        %v3847 = vsel %vm1680, %v3815, %v3450
        %v3848 = vsel %vm1680, %v3816, %v3452
        %v3849 = vsel %vm1680, %v3817, %v1299
        %v3850 = vsel %vm1680, %v3818, %v1299
        %v3851 = vsel %vm1713, %v3819, %v3484
        %v3852 = vsel %vm1713, %v3820, %v3486
        %v3853 = vsel %vm1713, %v3821, %v3488
        %v3854 = vsel %vm1713, %v3822, %v3490
        %v3855 = vsel %vm1713, %v3823, %v3492
        %v3856 = vsel %vm1713, %v3824, %v3494
        %v3857 = vsel %vm1713, %v3825, %v3496
        %v3858 = vsel %vm1713, %v3826, %v3498
        %v3859 = vsel %vm1713, %v3827, %v3500
        %v3860 = vsel %vm1713, %v3828, %v3502
        %v3861 = vsel %vm1713, %v3829, %v3504
        %v3862 = vsel %vm1713, %v3830, %v3506
        %v3863 = vsel %vm1713, %v3831, %v3508
        %v3864 = vsel %vm1713, %v3832, %v3510
        %v3865 = vsel %vm1713, %v3833, %v3512
        %v3866 = vsel %vm1713, %v3834, %v3514
        %v3867 = vsel %vm1713, %v3835, %v3516
        %v3868 = vsel %vm1713, %v3836, %v3518
        %v3869 = vsel %vm1713, %v3837, %v3520
        %v3870 = vsel %vm1713, %v3838, %v3522
        %v3871 = vsel %vm1713, %v3839, %v3524
        %v3872 = vsel %vm1713, %v3840, %v3526
        %v3873 = vsel %vm1713, %v3841, %v3528
        %v3874 = vsel %vm1713, %v3842, %v3530
        %v3875 = vsel %vm1713, %v3843, %v3532
        %v3876 = vsel %vm1713, %v3844, %v3534
        %v3877 = vsel %vm1713, %v3845, %v3536
        %v3878 = vsel %vm1713, %v3846, %v3538
        %v3879 = vsel %vm1713, %v3847, %v3540
        %v3880 = vsel %vm1713, %v3848, %v3542
        %v3881 = vsel %vm1713, %v3849, %v1392
        %v3882 = vsel %vm1713, %v3850, %v1392
        %v3883 = vsel %vm1746, %v3851, %v3574
        %v3884 = vsel %vm1746, %v3852, %v3576
        %v3885 = vsel %vm1746, %v3853, %v3578
        %v3886 = vsel %vm1746, %v3854, %v3580
        %v3887 = vsel %vm1746, %v3855, %v3582
        %v3888 = vsel %vm1746, %v3856, %v3584
        %v3889 = vsel %vm1746, %v3857, %v3586
        %v3890 = vsel %vm1746, %v3858, %v3588
        %v3891 = vsel %vm1746, %v3859, %v3590
        %v3892 = vsel %vm1746, %v3860, %v3592
        %v3893 = vsel %vm1746, %v3861, %v3594
        %v3894 = vsel %vm1746, %v3862, %v3596
        %v3895 = vsel %vm1746, %v3863, %v3598
        %v3896 = vsel %vm1746, %v3864, %v3600
        %v3897 = vsel %vm1746, %v3865, %v3602
        %v3898 = vsel %vm1746, %v3866, %v3604
        %v3899 = vsel %vm1746, %v3867, %v3606
        %v3900 = vsel %vm1746, %v3868, %v3608
        %v3901 = vsel %vm1746, %v3869, %v3610
        %v3902 = vsel %vm1746, %v3870, %v3612
        %v3903 = vsel %vm1746, %v3871, %v3614
        %v3904 = vsel %vm1746, %v3872, %v3616
        %v3905 = vsel %vm1746, %v3873, %v3618
        %v3906 = vsel %vm1746, %v3874, %v3620
        %v3907 = vsel %vm1746, %v3875, %v3622
        %v3908 = vsel %vm1746, %v3876, %v3624
        %v3909 = vsel %vm1746, %v3877, %v3626
        %v3910 = vsel %vm1746, %v3878, %v3628
        %v3911 = vsel %vm1746, %v3879, %v3630
        %v3912 = vsel %vm1746, %v3880, %v3632
        %v3913 = vsel %vm1746, %v3881, %v1485
        %v3914 = vsel %vm1746, %v3882, %v1485
        %v3915 = vpack.c.bf16 %v3884, %v3883
        %v3916 = vpack.c.bf16 %v3886, %v3885
        %v3917 = vpack.c.bf16 %v3888, %v3887
        %v3918 = vpack.c.bf16 %v3890, %v3889
        %v3919 = vpack.c.bf16 %v3892, %v3891
        %v3920 = vpack.c.bf16 %v3894, %v3893
        %v3921 = vpack.c.bf16 %v3896, %v3895
        %v3922 = vpack.c.bf16 %v3898, %v3897
        %v3923 = vpack.c.bf16 %v3900, %v3899
        %v3924 = vpack.c.bf16 %v3902, %v3901
        %v3925 = vpack.c.bf16 %v3904, %v3903
        %v3926 = vpack.c.bf16 %v3906, %v3905
        %v3927 = vpack.c.bf16 %v3908, %v3907
        %v3928 = vpack.c.bf16 %v3910, %v3909
        %v3929 = vpack.c.bf16 %v3912, %v3911
        %v3930 = vpack.c.bf16 %v3914, %v3913
        %v3963 = vrot.slane %v2637, 1
        %v3964 = vrot.slane %v2543, 1
        %v3965 = vsel %vm595, %v3963, %v3964
        %v3966 = vrot.slane %v2653, 1
        %v3967 = vsel %vm595, %v3964, %v3966
        %v3968 = vrot.slane %v2638, 1
        %v3969 = vrot.slane %v2546, 1
        %v3970 = vsel %vm595, %v3968, %v3969
        %v3971 = vrot.slane %v2654, 1
        %v3972 = vsel %vm595, %v3969, %v3971
        %v3973 = vrot.slane %v2639, 1
        %v3974 = vrot.slane %v2549, 1
        %v3975 = vsel %vm595, %v3973, %v3974
        %v3976 = vrot.slane %v2655, 1
        %v3977 = vsel %vm595, %v3974, %v3976
        %v3978 = vrot.slane %v2640, 1
        %v3979 = vrot.slane %v2552, 1
        %v3980 = vsel %vm595, %v3978, %v3979
        %v3981 = vrot.slane %v2656, 1
        %v3982 = vsel %vm595, %v3979, %v3981
        %v3983 = vrot.slane %v2641, 1
        %v3984 = vrot.slane %v2555, 1
        %v3985 = vsel %vm595, %v3983, %v3984
        %v3986 = vrot.slane %v2657, 1
        %v3987 = vsel %vm595, %v3984, %v3986
        %v3988 = vrot.slane %v2642, 1
        %v3989 = vrot.slane %v2558, 1
        %v3990 = vsel %vm595, %v3988, %v3989
        %v3991 = vrot.slane %v2658, 1
        %v3992 = vsel %vm595, %v3989, %v3991
        %v3993 = vrot.slane %v2643, 1
        %v3994 = vrot.slane %v2561, 1
        %v3995 = vsel %vm595, %v3993, %v3994
        %v3996 = vrot.slane %v2659, 1
        %v3997 = vsel %vm595, %v3994, %v3996
        %v3998 = vrot.slane %v2644, 1
        %v3999 = vrot.slane %v2564, 1
        %v4000 = vsel %vm595, %v3998, %v3999
        %v4001 = vrot.slane %v2660, 1
        %v4002 = vsel %vm595, %v3999, %v4001
        %v4003 = vrot.slane %v2645, 1
        %v4004 = vrot.slane %v2567, 1
        %v4005 = vsel %vm595, %v4003, %v4004
        %v4006 = vrot.slane %v2661, 1
        %v4007 = vsel %vm595, %v4004, %v4006
        %v4008 = vrot.slane %v2646, 1
        %v4009 = vrot.slane %v2570, 1
        %v4010 = vsel %vm595, %v4008, %v4009
        %v4011 = vrot.slane %v2662, 1
        %v4012 = vsel %vm595, %v4009, %v4011
        %v4013 = vrot.slane %v2647, 1
        %v4014 = vrot.slane %v2573, 1
        %v4015 = vsel %vm595, %v4013, %v4014
        %v4016 = vrot.slane %v2663, 1
        %v4017 = vsel %vm595, %v4014, %v4016
        %v4018 = vrot.slane %v2648, 1
        %v4019 = vrot.slane %v2576, 1
        %v4020 = vsel %vm595, %v4018, %v4019
        %v4021 = vrot.slane %v2664, 1
        %v4022 = vsel %vm595, %v4019, %v4021
        %v4023 = vrot.slane %v2649, 1
        %v4024 = vrot.slane %v2579, 1
        %v4025 = vsel %vm595, %v4023, %v4024
        %v4026 = vrot.slane %v2665, 1
        %v4027 = vsel %vm595, %v4024, %v4026
        %v4028 = vrot.slane %v2650, 1
        %v4029 = vrot.slane %v2582, 1
        %v4030 = vsel %vm595, %v4028, %v4029
        %v4031 = vrot.slane %v2666, 1
        %v4032 = vsel %vm595, %v4029, %v4031
        %v4033 = vrot.slane %v2651, 1
        %v4034 = vrot.slane %v2585, 1
        %v4035 = vsel %vm595, %v4033, %v4034
        %v4036 = vrot.slane %v2667, 1
        %v4037 = vsel %vm595, %v4034, %v4036
        %v4038 = vrot.slane %v2652, 1
        %v4039 = vrot.slane %v2588, 1
        %v4040 = vsel %vm595, %v4038, %v4039
        %v4041 = vrot.slane %v2668, 1
        %v4042 = vsel %vm595, %v4039, %v4041
        %v4075 = vadd.f32 %v2637, %v3965
        %v4076 = vadd.f32 %v2543, %v3967
        %v4077 = vadd.f32 %v2638, %v3970
        %v4078 = vadd.f32 %v2546, %v3972
        %v4079 = vadd.f32 %v2639, %v3975
        %v4080 = vadd.f32 %v2549, %v3977
        %v4081 = vadd.f32 %v2640, %v3980
        %v4082 = vadd.f32 %v2552, %v3982
        %v4083 = vadd.f32 %v2641, %v3985
        %v4084 = vadd.f32 %v2555, %v3987
        %v4085 = vadd.f32 %v2642, %v3990
        %v4086 = vadd.f32 %v2558, %v3992
        %v4087 = vadd.f32 %v2643, %v3995
        %v4088 = vadd.f32 %v2561, %v3997
        %v4089 = vadd.f32 %v2644, %v4000
        %v4090 = vadd.f32 %v2564, %v4002
        %v4091 = vadd.f32 %v2645, %v4005
        %v4092 = vadd.f32 %v2567, %v4007
        %v4093 = vadd.f32 %v2646, %v4010
        %v4094 = vadd.f32 %v2570, %v4012
        %v4095 = vadd.f32 %v2647, %v4015
        %v4096 = vadd.f32 %v2573, %v4017
        %v4097 = vadd.f32 %v2648, %v4020
        %v4098 = vadd.f32 %v2576, %v4022
        %v4099 = vadd.f32 %v2649, %v4025
        %v4100 = vadd.f32 %v2579, %v4027
        %v4101 = vadd.f32 %v2650, %v4030
        %v4102 = vadd.f32 %v2582, %v4032
        %v4103 = vadd.f32 %v2651, %v4035
        %v4104 = vadd.f32 %v2585, %v4037
        %v4105 = vadd.f32 %v2652, %v4040
        %v4106 = vadd.f32 %v2588, %v4042
        %v4107 = vrot.slane %v2637, 2
        %v4108 = vrot.slane %v2543, 2
        %v4109 = vsel %vm673, %v4107, %v4108
        %v4110 = vrot.slane %v2653, 2
        %v4111 = vsel %vm673, %v4108, %v4110
        %v4112 = vrot.slane %v2638, 2
        %v4113 = vrot.slane %v2546, 2
        %v4114 = vsel %vm673, %v4112, %v4113
        %v4115 = vrot.slane %v2654, 2
        %v4116 = vsel %vm673, %v4113, %v4115
        %v4117 = vrot.slane %v2639, 2
        %v4118 = vrot.slane %v2549, 2
        %v4119 = vsel %vm673, %v4117, %v4118
        %v4120 = vrot.slane %v2655, 2
        %v4121 = vsel %vm673, %v4118, %v4120
        %v4122 = vrot.slane %v2640, 2
        %v4123 = vrot.slane %v2552, 2
        %v4124 = vsel %vm673, %v4122, %v4123
        %v4125 = vrot.slane %v2656, 2
        %v4126 = vsel %vm673, %v4123, %v4125
        %v4127 = vrot.slane %v2641, 2
        %v4128 = vrot.slane %v2555, 2
        %v4129 = vsel %vm673, %v4127, %v4128
        %v4130 = vrot.slane %v2657, 2
        %v4131 = vsel %vm673, %v4128, %v4130
        %v4132 = vrot.slane %v2642, 2
        %v4133 = vrot.slane %v2558, 2
        %v4134 = vsel %vm673, %v4132, %v4133
        %v4135 = vrot.slane %v2658, 2
        %v4136 = vsel %vm673, %v4133, %v4135
        %v4137 = vrot.slane %v2643, 2
        %v4138 = vrot.slane %v2561, 2
        %v4139 = vsel %vm673, %v4137, %v4138
        %v4140 = vrot.slane %v2659, 2
        %v4141 = vsel %vm673, %v4138, %v4140
        %v4142 = vrot.slane %v2644, 2
        %v4143 = vrot.slane %v2564, 2
        %v4144 = vsel %vm673, %v4142, %v4143
        %v4145 = vrot.slane %v2660, 2
        %v4146 = vsel %vm673, %v4143, %v4145
        %v4147 = vrot.slane %v2645, 2
        %v4148 = vrot.slane %v2567, 2
        %v4149 = vsel %vm673, %v4147, %v4148
        %v4150 = vrot.slane %v2661, 2
        %v4151 = vsel %vm673, %v4148, %v4150
        %v4152 = vrot.slane %v2646, 2
        %v4153 = vrot.slane %v2570, 2
        %v4154 = vsel %vm673, %v4152, %v4153
        %v4155 = vrot.slane %v2662, 2
        %v4156 = vsel %vm673, %v4153, %v4155
        %v4157 = vrot.slane %v2647, 2
        %v4158 = vrot.slane %v2573, 2
        %v4159 = vsel %vm673, %v4157, %v4158
        %v4160 = vrot.slane %v2663, 2
        %v4161 = vsel %vm673, %v4158, %v4160
        %v4162 = vrot.slane %v2648, 2
        %v4163 = vrot.slane %v2576, 2
        %v4164 = vsel %vm673, %v4162, %v4163
        %v4165 = vrot.slane %v2664, 2
        %v4166 = vsel %vm673, %v4163, %v4165
        %v4167 = vrot.slane %v2649, 2
        %v4168 = vrot.slane %v2579, 2
        %v4169 = vsel %vm673, %v4167, %v4168
        %v4170 = vrot.slane %v2665, 2
        %v4171 = vsel %vm673, %v4168, %v4170
        %v4172 = vrot.slane %v2650, 2
        %v4173 = vrot.slane %v2582, 2
        %v4174 = vsel %vm673, %v4172, %v4173
        %v4175 = vrot.slane %v2666, 2
        %v4176 = vsel %vm673, %v4173, %v4175
        %v4177 = vrot.slane %v2651, 2
        %v4178 = vrot.slane %v2585, 2
        %v4179 = vsel %vm673, %v4177, %v4178
        %v4180 = vrot.slane %v2667, 2
        %v4181 = vsel %vm673, %v4178, %v4180
        %v4182 = vrot.slane %v2652, 2
        %v4183 = vrot.slane %v2588, 2
        %v4184 = vsel %vm673, %v4182, %v4183
        %v4185 = vrot.slane %v2668, 2
        %v4186 = vsel %vm673, %v4183, %v4185
        %v4219 = vadd.f32 %v4075, %v4109
        %v4220 = vadd.f32 %v4076, %v4111
        %v4221 = vadd.f32 %v4077, %v4114
        %v4222 = vadd.f32 %v4078, %v4116
        %v4223 = vadd.f32 %v4079, %v4119
        %v4224 = vadd.f32 %v4080, %v4121
        %v4225 = vadd.f32 %v4081, %v4124
        %v4226 = vadd.f32 %v4082, %v4126
        %v4227 = vadd.f32 %v4083, %v4129
        %v4228 = vadd.f32 %v4084, %v4131
        %v4229 = vadd.f32 %v4085, %v4134
        %v4230 = vadd.f32 %v4086, %v4136
        %v4231 = vadd.f32 %v4087, %v4139
        %v4232 = vadd.f32 %v4088, %v4141
        %v4233 = vadd.f32 %v4089, %v4144
        %v4234 = vadd.f32 %v4090, %v4146
        %v4235 = vadd.f32 %v4091, %v4149
        %v4236 = vadd.f32 %v4092, %v4151
        %v4237 = vadd.f32 %v4093, %v4154
        %v4238 = vadd.f32 %v4094, %v4156
        %v4239 = vadd.f32 %v4095, %v4159
        %v4240 = vadd.f32 %v4096, %v4161
        %v4241 = vadd.f32 %v4097, %v4164
        %v4242 = vadd.f32 %v4098, %v4166
        %v4243 = vadd.f32 %v4099, %v4169
        %v4244 = vadd.f32 %v4100, %v4171
        %v4245 = vadd.f32 %v4101, %v4174
        %v4246 = vadd.f32 %v4102, %v4176
        %v4247 = vadd.f32 %v4103, %v4179
        %v4248 = vadd.f32 %v4104, %v4181
        %v4249 = vadd.f32 %v4105, %v4184
        %v4250 = vadd.f32 %v4106, %v4186
        %v4251 = vadd.f32 %v2086, %v4219
        %v4252 = vadd.f32 %v2086, %v4220
        %v4253 = vadd.f32 %v4219, %v4221
        %v4254 = vadd.f32 %v4220, %v4222
        %v4255 = vadd.f32 %v4221, %v4223
        %v4256 = vadd.f32 %v4222, %v4224
        %v4257 = vadd.f32 %v4223, %v4225
        %v4258 = vadd.f32 %v4224, %v4226
        %v4259 = vadd.f32 %v4225, %v4227
        %v4260 = vadd.f32 %v4226, %v4228
        %v4261 = vadd.f32 %v4227, %v4229
        %v4262 = vadd.f32 %v4228, %v4230
        %v4263 = vadd.f32 %v4229, %v4231
        %v4264 = vadd.f32 %v4230, %v4232
        %v4265 = vadd.f32 %v4231, %v4233
        %v4266 = vadd.f32 %v4232, %v4234
        %v4267 = vadd.f32 %v4233, %v4235
        %v4268 = vadd.f32 %v4234, %v4236
        %v4269 = vadd.f32 %v4235, %v4237
        %v4270 = vadd.f32 %v4236, %v4238
        %v4271 = vadd.f32 %v4237, %v4239
        %v4272 = vadd.f32 %v4238, %v4240
        %v4273 = vadd.f32 %v4239, %v4241
        %v4274 = vadd.f32 %v4240, %v4242
        %v4275 = vadd.f32 %v4241, %v4243
        %v4276 = vadd.f32 %v4242, %v4244
        %v4277 = vadd.f32 %v4243, %v4245
        %v4278 = vadd.f32 %v4244, %v4246
        %v4279 = vadd.f32 %v4245, %v4247
        %v4280 = vadd.f32 %v4246, %v4248
        %v4281 = vadd.f32 %v4247, %v4249
        %v4282 = vadd.f32 %v4248, %v4250
        %v4283 = vadd.f32 %v4251, %v4221
        %v4284 = vadd.f32 %v4252, %v4222
        %v4285 = vadd.f32 %v4253, %v4223
        %v4286 = vadd.f32 %v4254, %v4224
        %v4287 = vadd.f32 %v4255, %v4225
        %v4288 = vadd.f32 %v4256, %v4226
        %v4289 = vadd.f32 %v4257, %v4227
        %v4290 = vadd.f32 %v4258, %v4228
        %v4291 = vadd.f32 %v4259, %v4229
        %v4292 = vadd.f32 %v4260, %v4230
        %v4293 = vadd.f32 %v4261, %v4231
        %v4294 = vadd.f32 %v4262, %v4232
        %v4295 = vadd.f32 %v4263, %v4233
        %v4296 = vadd.f32 %v4264, %v4234
        %v4297 = vadd.f32 %v4265, %v4235
        %v4298 = vadd.f32 %v4266, %v4236
        %v4299 = vadd.f32 %v4267, %v4237
        %v4300 = vadd.f32 %v4268, %v4238
        %v4301 = vadd.f32 %v4269, %v4239
        %v4302 = vadd.f32 %v4270, %v4240
        %v4303 = vadd.f32 %v4271, %v4241
        %v4304 = vadd.f32 %v4272, %v4242
        %v4305 = vadd.f32 %v4273, %v4243
        %v4306 = vadd.f32 %v4274, %v4244
        %v4307 = vadd.f32 %v4275, %v4245
        %v4308 = vadd.f32 %v4276, %v4246
        %v4309 = vadd.f32 %v4277, %v4247
        %v4310 = vadd.f32 %v4278, %v4248
        %v4311 = vadd.f32 %v4279, %v4249
        %v4312 = vadd.f32 %v4280, %v4250
        %v4313 = vadd.f32 %v4281, %v2086
        %v4314 = vadd.f32 %v4282, %v2086
        %v4315 = vmul.f32 %v4283, %v232
        %v4316 = vmul.f32 %v4284, %v247
        %v4317 = vmul.f32 %v4285, %v262
        %v4318 = vmul.f32 %v4286, %v277
        %v4319 = vmul.f32 %v4287, %v262
        %v4320 = vmul.f32 %v4288, %v277
        %v4321 = vmul.f32 %v4289, %v262
        %v4322 = vmul.f32 %v4290, %v277
        %v4323 = vmul.f32 %v4291, %v262
        %v4324 = vmul.f32 %v4292, %v277
        %v4325 = vmul.f32 %v4293, %v262
        %v4326 = vmul.f32 %v4294, %v277
        %v4327 = vmul.f32 %v4295, %v262
        %v4328 = vmul.f32 %v4296, %v277
        %v4329 = vmul.f32 %v4297, %v262
        %v4330 = vmul.f32 %v4298, %v277
        %v4331 = vmul.f32 %v4299, %v262
        %v4332 = vmul.f32 %v4300, %v277
        %v4333 = vmul.f32 %v4301, %v262
        %v4334 = vmul.f32 %v4302, %v277
        %v4335 = vmul.f32 %v4303, %v262
        %v4336 = vmul.f32 %v4304, %v277
        %v4337 = vmul.f32 %v4305, %v262
        %v4338 = vmul.f32 %v4306, %v277
        %v4339 = vmul.f32 %v4307, %v262
        %v4340 = vmul.f32 %v4308, %v277
        %v4341 = vmul.f32 %v4309, %v262
        %v4342 = vmul.f32 %v4310, %v277
        %v4343 = vmul.f32 %v4311, %v262
        %v4344 = vmul.f32 %v4312, %v277
        %v4345 = vmul.f32 %v4313, %v292
        %v4346 = vmul.f32 %v4314, %v307
        %s4347 = scalar_lea.vmem %s2, 20
        %v4348 = vld [vmem:[%s4347] sm:$0xf]
        %v4349 = vld [vmem:[%s4347 + $0x4] sm:$0xf]
        %v4350 = vld [vmem:[%s4347 + $0x8] sm:$0xf]
        %v4351 = vld [vmem:[%s4347 + $0xc] sm:$0xf]
        %v4352 = vld [vmem:[%s4347 + $0x10] sm:$0x3]
        %v4358 = vunpack.c.l.b16 %v4348
        %v4359 = vunpack.c.l.b16 %v4349
        %v4360 = vunpack.c.l.b16 %v4350
        %v4361 = vunpack.c.l.b16 %v4351
        %v4362 = vunpack.c.l.b16 %v4352
        %v4363 = vpack.c.b16 %v4359, %v4358
        %v4364 = vpack.c.b16 %v4361, %v4360
        %v4365 = vpack.c.b16 %v4362, %v4362
        %v4369 = vsel %vm2284, %v4365, 0
        %4371 = vmatpush.bf16.msra.mxu0 0
        %4372 = vmatpush.bf16.msra.mxu0 0
        %4373 = vmatpush.bf16.msra.mxu0 0
        %4374 = vmatpush.bf16.msra.mxu0 0
        %4375 = vmatpush.bf16.msra.mxu0 0
        %4376 = vmatpush.bf16.msra.mxu0 %v4369
        %4377 = vmatpush.bf16.msra.mxu0 %v4364
        %4378 = vmatpush.bf16.msra.mxu0 %v4363
        %4379 = vmatmul.bf16.gmra.mxu0 %v2237
        %v4380 = vpop.f32.mrf.mxu0
        %v4381 = vadd.f32 0.0, %v4380
        %v4382 = vpop.f32.mrf.mxu0
        %v4383 = vadd.f32 0.0, %v4382
        %4384 = vmatmul.bf16.gmra.mxu0 %v2240
        %v4385 = vpop.f32.mrf.mxu0
        %v4386 = vadd.f32 0.0, %v4385
        %v4387 = vpop.f32.mrf.mxu0
        %v4388 = vadd.f32 0.0, %v4387
        %4389 = vmatmul.bf16.gmra.mxu0 %v2243
        %v4390 = vpop.f32.mrf.mxu0
        %v4391 = vadd.f32 0.0, %v4390
        %v4392 = vpop.f32.mrf.mxu0
        %v4393 = vadd.f32 0.0, %v4392
        %4394 = vmatmul.bf16.gmra.mxu0 %v2246
        %v4395 = vpop.f32.mrf.mxu0
        %v4396 = vadd.f32 0.0, %v4395
        %v4397 = vpop.f32.mrf.mxu0
        %v4398 = vadd.f32 0.0, %v4397
        %4399 = vmatmul.bf16.gmra.mxu0 %v2249
        %v4400 = vpop.f32.mrf.mxu0
        %v4401 = vadd.f32 0.0, %v4400
        %v4402 = vpop.f32.mrf.mxu0
        %v4403 = vadd.f32 0.0, %v4402
        %4404 = vmatmul.bf16.gmra.mxu0 %v2252
        %v4405 = vpop.f32.mrf.mxu0
        %v4406 = vadd.f32 0.0, %v4405
        %v4407 = vpop.f32.mrf.mxu0
        %v4408 = vadd.f32 0.0, %v4407
        %4409 = vmatmul.bf16.gmra.mxu0 %v2255
        %v4410 = vpop.f32.mrf.mxu0
        %v4411 = vadd.f32 0.0, %v4410
        %v4412 = vpop.f32.mrf.mxu0
        %v4413 = vadd.f32 0.0, %v4412
        %4414 = vmatmul.bf16.gmra.mxu0 %v2258
        %v4415 = vpop.f32.mrf.mxu0
        %v4416 = vadd.f32 0.0, %v4415
        %v4417 = vpop.f32.mrf.mxu0
        %v4418 = vadd.f32 0.0, %v4417
        %4419 = vmatmul.bf16.gmra.mxu0 %v2261
        %v4420 = vpop.f32.mrf.mxu0
        %v4421 = vadd.f32 0.0, %v4420
        %v4422 = vpop.f32.mrf.mxu0
        %v4423 = vadd.f32 0.0, %v4422
        %4424 = vmatmul.bf16.gmra.mxu0 %v2264
        %v4425 = vpop.f32.mrf.mxu0
        %v4426 = vadd.f32 0.0, %v4425
        %v4427 = vpop.f32.mrf.mxu0
        %v4428 = vadd.f32 0.0, %v4427
        %4429 = vmatmul.bf16.gmra.mxu0 %v2267
        %v4430 = vpop.f32.mrf.mxu0
        %v4431 = vadd.f32 0.0, %v4430
        %v4432 = vpop.f32.mrf.mxu0
        %v4433 = vadd.f32 0.0, %v4432
        %4434 = vmatmul.bf16.gmra.mxu0 %v2270
        %v4435 = vpop.f32.mrf.mxu0
        %v4436 = vadd.f32 0.0, %v4435
        %v4437 = vpop.f32.mrf.mxu0
        %v4438 = vadd.f32 0.0, %v4437
        %4439 = vmatmul.bf16.gmra.mxu0 %v2273
        %v4440 = vpop.f32.mrf.mxu0
        %v4441 = vadd.f32 0.0, %v4440
        %v4442 = vpop.f32.mrf.mxu0
        %v4443 = vadd.f32 0.0, %v4442
        %4444 = vmatmul.bf16.gmra.mxu0 %v2276
        %v4445 = vpop.f32.mrf.mxu0
        %v4446 = vadd.f32 0.0, %v4445
        %v4447 = vpop.f32.mrf.mxu0
        %v4448 = vadd.f32 0.0, %v4447
        %4449 = vmatmul.bf16.gmra.mxu0 %v2279
        %v4450 = vpop.f32.mrf.mxu0
        %v4451 = vadd.f32 0.0, %v4450
        %v4452 = vpop.f32.mrf.mxu0
        %v4453 = vadd.f32 0.0, %v4452
        %4454 = vmatmul.bf16.gmra.mxu0 %v2282
        %v4455 = vpop.f32.mrf.mxu0
        %v4456 = vadd.f32 0.0, %v4455
        %v4457 = vpop.f32.mrf.mxu0
        %v4458 = vadd.f32 0.0, %v4457
        %4459 = vdwg.mxu0
        %s4460 = sld [smem:[#allocation2 + $0x2]]
        %v4461 = vstv %s4460
        %v4462 = vmul.f32 %v4461, %v308
        %v4463 = vmul.f32 %v4461, %v309
        %v4464 = vmul.f32 %v4461, %v310
        %v4465 = vmul.f32 %v4461, %v311
        %v4466 = vmul.f32 %v4461, %v312
        %v4467 = vmul.f32 %v4461, %v313
        %v4468 = vmul.f32 %v4461, %v314
        %v4469 = vmul.f32 %v4461, %v315
        %v4470 = vmul.f32 %v4461, %v316
        %v4471 = vmul.f32 %v4461, %v317
        %v4472 = vmul.f32 %v4461, %v318
        %v4473 = vmul.f32 %v4461, %v319
        %v4474 = vmul.f32 %v4461, %v320
        %v4475 = vmul.f32 %v4461, %v321
        %v4476 = vmul.f32 %v4461, %v322
        %v4477 = vmul.f32 %v4461, %v323
        %v4478 = vmul.f32 %v4461, %v324
        %v4479 = vmul.f32 %v4461, %v325
        %v4480 = vmul.f32 %v4461, %v326
        %v4481 = vmul.f32 %v4461, %v327
        %v4482 = vmul.f32 %v4461, %v328
        %v4483 = vmul.f32 %v4461, %v329
        %v4484 = vmul.f32 %v4461, %v330
        %v4485 = vmul.f32 %v4461, %v331
        %v4486 = vmul.f32 %v4461, %v332
        %v4487 = vmul.f32 %v4461, %v333
        %v4488 = vmul.f32 %v4461, %v334
        %v4489 = vmul.f32 %v4461, %v335
        %v4490 = vmul.f32 %v4461, %v336
        %v4491 = vmul.f32 %v4461, %v337
        %v4492 = vmul.f32 %v4461, %v338
        %v4493 = vmul.f32 %v4461, %v339
        %v4494 = vadd.f32 %v4381, %v4462
        %v4495 = vadd.f32 %v4383, %v4463
        %v4496 = vadd.f32 %v4386, %v4464
        %v4497 = vadd.f32 %v4388, %v4465
        %v4498 = vadd.f32 %v4391, %v4466
        %v4499 = vadd.f32 %v4393, %v4467
        %v4500 = vadd.f32 %v4396, %v4468
        %v4501 = vadd.f32 %v4398, %v4469
        %v4502 = vadd.f32 %v4401, %v4470
        %v4503 = vadd.f32 %v4403, %v4471
        %v4504 = vadd.f32 %v4406, %v4472
        %v4505 = vadd.f32 %v4408, %v4473
        %v4506 = vadd.f32 %v4411, %v4474
        %v4507 = vadd.f32 %v4413, %v4475
        %v4508 = vadd.f32 %v4416, %v4476
        %v4509 = vadd.f32 %v4418, %v4477
        %v4510 = vadd.f32 %v4421, %v4478
        %v4511 = vadd.f32 %v4423, %v4479
        %v4512 = vadd.f32 %v4426, %v4480
        %v4513 = vadd.f32 %v4428, %v4481
        %v4514 = vadd.f32 %v4431, %v4482
        %v4515 = vadd.f32 %v4433, %v4483
        %v4516 = vadd.f32 %v4436, %v4484
        %v4517 = vadd.f32 %v4438, %v4485
        %v4518 = vadd.f32 %v4441, %v4486
        %v4519 = vadd.f32 %v4443, %v4487
        %v4520 = vadd.f32 %v4446, %v4488
        %v4521 = vadd.f32 %v4448, %v4489
        %v4522 = vadd.f32 %v4451, %v4490
        %v4523 = vadd.f32 %v4453, %v4491
        %v4524 = vadd.f32 %v4456, %v4492
        %v4525 = vadd.f32 %v4458, %v4493
        %s4526 = sld [smem:[#allocation2 + $0x3]]
        %v4527 = vstv %s4526
        %v4528 = vmul.f32 %v4527, %v2183
        %v4529 = vmul.f32 %v4527, %v2184
        %v4530 = vmul.f32 %v4527, %v2185
        %v4531 = vmul.f32 %v4527, %v2186
        %v4532 = vmul.f32 %v4527, %v2187
        %v4533 = vmul.f32 %v4527, %v2188
        %v4534 = vmul.f32 %v4527, %v2189
        %v4535 = vmul.f32 %v4527, %v2190
        %v4536 = vmul.f32 %v4527, %v2191
        %v4537 = vmul.f32 %v4527, %v2192
        %v4538 = vmul.f32 %v4527, %v2193
        %v4539 = vmul.f32 %v4527, %v2194
        %v4540 = vmul.f32 %v4527, %v2195
        %v4541 = vmul.f32 %v4527, %v2196
        %v4542 = vmul.f32 %v4527, %v2197
        %v4543 = vmul.f32 %v4527, %v2198
        %v4544 = vmul.f32 %v4527, %v2199
        %v4545 = vmul.f32 %v4527, %v2200
        %v4546 = vmul.f32 %v4527, %v2201
        %v4547 = vmul.f32 %v4527, %v2202
        %v4548 = vmul.f32 %v4527, %v2203
        %v4549 = vmul.f32 %v4527, %v2204
        %v4550 = vmul.f32 %v4527, %v2205
        %v4551 = vmul.f32 %v4527, %v2206
        %v4552 = vmul.f32 %v4527, %v2207
        %v4553 = vmul.f32 %v4527, %v2208
        %v4554 = vmul.f32 %v4527, %v2209
        %v4555 = vmul.f32 %v4527, %v2210
        %v4556 = vmul.f32 %v4527, %v2211
        %v4557 = vmul.f32 %v4527, %v2212
        %v4558 = vmul.f32 %v4527, %v2213
        %v4559 = vmul.f32 %v4527, %v2214
        %v4560 = vadd.f32 %v4494, %v4528
        %v4561 = vadd.f32 %v4495, %v4529
        %v4562 = vadd.f32 %v4496, %v4530
        %v4563 = vadd.f32 %v4497, %v4531
        %v4564 = vadd.f32 %v4498, %v4532
        %v4565 = vadd.f32 %v4499, %v4533
        %v4566 = vadd.f32 %v4500, %v4534
        %v4567 = vadd.f32 %v4501, %v4535
        %v4568 = vadd.f32 %v4502, %v4536
        %v4569 = vadd.f32 %v4503, %v4537
        %v4570 = vadd.f32 %v4504, %v4538
        %v4571 = vadd.f32 %v4505, %v4539
        %v4572 = vadd.f32 %v4506, %v4540
        %v4573 = vadd.f32 %v4507, %v4541
        %v4574 = vadd.f32 %v4508, %v4542
        %v4575 = vadd.f32 %v4509, %v4543
        %v4576 = vadd.f32 %v4510, %v4544
        %v4577 = vadd.f32 %v4511, %v4545
        %v4578 = vadd.f32 %v4512, %v4546
        %v4579 = vadd.f32 %v4513, %v4547
        %v4580 = vadd.f32 %v4514, %v4548
        %v4581 = vadd.f32 %v4515, %v4549
        %v4582 = vadd.f32 %v4516, %v4550
        %v4583 = vadd.f32 %v4517, %v4551
        %v4584 = vadd.f32 %v4518, %v4552
        %v4585 = vadd.f32 %v4519, %v4553
        %v4586 = vadd.f32 %v4520, %v4554
        %v4587 = vadd.f32 %v4521, %v4555
        %v4588 = vadd.f32 %v4522, %v4556
        %v4589 = vadd.f32 %v4523, %v4557
        %v4590 = vadd.f32 %v4524, %v4558
        %v4591 = vadd.f32 %v4525, %v4559
        %s4592 = scalar_lea.vmem %s2, 40
        %v4593 = vld [vmem:[%s4592] sm:$0xf]
        %v4594 = vld [vmem:[%s4592 + $0x4] sm:$0xf]
        %v4595 = vld [vmem:[%s4592 + $0x8] sm:$0xf]
        %v4596 = vld [vmem:[%s4592 + $0xc] sm:$0xf]
        %v4597 = vld [vmem:[%s4592 + $0x10] sm:$0x3]
        %v4603 = vunpack.c.l.b16 %v4593
        %v4604 = vunpack.c.l.b16 %v4594
        %v4605 = vunpack.c.l.b16 %v4595
        %v4606 = vunpack.c.l.b16 %v4596
        %v4607 = vunpack.c.l.b16 %v4597
        %v4608 = vpack.c.b16 %v4604, %v4603
        %v4609 = vpack.c.b16 %v4606, %v4605
        %v4610 = vpack.c.b16 %v4607, %v4607
        %v4614 = vsel %vm2235, %v3915, 0
        %v4617 = vsel %vm2235, %v3916, 0
        %v4620 = vsel %vm2235, %v3917, 0
        %v4623 = vsel %vm2235, %v3918, 0
        %v4626 = vsel %vm2235, %v3919, 0
        %v4629 = vsel %vm2235, %v3920, 0
        %v4632 = vsel %vm2235, %v3921, 0
        %v4635 = vsel %vm2235, %v3922, 0
        %v4638 = vsel %vm2235, %v3923, 0
        %v4641 = vsel %vm2235, %v3924, 0
        %v4644 = vsel %vm2235, %v3925, 0
        %v4647 = vsel %vm2235, %v3926, 0
        %v4650 = vsel %vm2235, %v3927, 0
        %v4653 = vsel %vm2235, %v3928, 0
        %v4656 = vsel %vm2235, %v3929, 0
        %v4659 = vsel %vm2235, %v3930, 0
        %v4662 = vsel %vm2284, %v4610, 0
        %4664 = vmatpush.bf16.msra.mxu0 0
        %4665 = vmatpush.bf16.msra.mxu0 0
        %4666 = vmatpush.bf16.msra.mxu0 0
        %4667 = vmatpush.bf16.msra.mxu0 0
        %4668 = vmatpush.bf16.msra.mxu0 0
        %4669 = vmatpush.bf16.msra.mxu0 %v4662
        %4670 = vmatpush.bf16.msra.mxu0 %v4609
        %4671 = vmatpush.bf16.msra.mxu0 %v4608
        %4672 = vmatmul.bf16.gmra.mxu0 %v4614
        %v4673 = vpop.f32.mrf.mxu0
        %v4674 = vadd.f32 0.0, %v4673
        %v4675 = vpop.f32.mrf.mxu0
        %v4676 = vadd.f32 0.0, %v4675
        %4677 = vmatmul.bf16.gmra.mxu0 %v4617
        %v4678 = vpop.f32.mrf.mxu0
        %v4679 = vadd.f32 0.0, %v4678
        %v4680 = vpop.f32.mrf.mxu0
        %v4681 = vadd.f32 0.0, %v4680
        %4682 = vmatmul.bf16.gmra.mxu0 %v4620
        %v4683 = vpop.f32.mrf.mxu0
        %v4684 = vadd.f32 0.0, %v4683
        %v4685 = vpop.f32.mrf.mxu0
        %v4686 = vadd.f32 0.0, %v4685
        %4687 = vmatmul.bf16.gmra.mxu0 %v4623
        %v4688 = vpop.f32.mrf.mxu0
        %v4689 = vadd.f32 0.0, %v4688
        %v4690 = vpop.f32.mrf.mxu0
        %v4691 = vadd.f32 0.0, %v4690
        %4692 = vmatmul.bf16.gmra.mxu0 %v4626
        %v4693 = vpop.f32.mrf.mxu0
        %v4694 = vadd.f32 0.0, %v4693
        %v4695 = vpop.f32.mrf.mxu0
        %v4696 = vadd.f32 0.0, %v4695
        %4697 = vmatmul.bf16.gmra.mxu0 %v4629
        %v4698 = vpop.f32.mrf.mxu0
        %v4699 = vadd.f32 0.0, %v4698
        %v4700 = vpop.f32.mrf.mxu0
        %v4701 = vadd.f32 0.0, %v4700
        %4702 = vmatmul.bf16.gmra.mxu0 %v4632
        %v4703 = vpop.f32.mrf.mxu0
        %v4704 = vadd.f32 0.0, %v4703
        %v4705 = vpop.f32.mrf.mxu0
        %v4706 = vadd.f32 0.0, %v4705
        %4707 = vmatmul.bf16.gmra.mxu0 %v4635
        %v4708 = vpop.f32.mrf.mxu0
        %v4709 = vadd.f32 0.0, %v4708
        %v4710 = vpop.f32.mrf.mxu0
        %v4711 = vadd.f32 0.0, %v4710
        %4712 = vmatmul.bf16.gmra.mxu0 %v4638
        %v4713 = vpop.f32.mrf.mxu0
        %v4714 = vadd.f32 0.0, %v4713
        %v4715 = vpop.f32.mrf.mxu0
        %v4716 = vadd.f32 0.0, %v4715
        %4717 = vmatmul.bf16.gmra.mxu0 %v4641
        %v4718 = vpop.f32.mrf.mxu0
        %v4719 = vadd.f32 0.0, %v4718
        %v4720 = vpop.f32.mrf.mxu0
        %v4721 = vadd.f32 0.0, %v4720
        %4722 = vmatmul.bf16.gmra.mxu0 %v4644
        %v4723 = vpop.f32.mrf.mxu0
        %v4724 = vadd.f32 0.0, %v4723
        %v4725 = vpop.f32.mrf.mxu0
        %v4726 = vadd.f32 0.0, %v4725
        %4727 = vmatmul.bf16.gmra.mxu0 %v4647
        %v4728 = vpop.f32.mrf.mxu0
        %v4729 = vadd.f32 0.0, %v4728
        %v4730 = vpop.f32.mrf.mxu0
        %v4731 = vadd.f32 0.0, %v4730
        %4732 = vmatmul.bf16.gmra.mxu0 %v4650
        %v4733 = vpop.f32.mrf.mxu0
        %v4734 = vadd.f32 0.0, %v4733
        %v4735 = vpop.f32.mrf.mxu0
        %v4736 = vadd.f32 0.0, %v4735
        %4737 = vmatmul.bf16.gmra.mxu0 %v4653
        %v4738 = vpop.f32.mrf.mxu0
        %v4739 = vadd.f32 0.0, %v4738
        %v4740 = vpop.f32.mrf.mxu0
        %v4741 = vadd.f32 0.0, %v4740
        %4742 = vmatmul.bf16.gmra.mxu0 %v4656
        %v4743 = vpop.f32.mrf.mxu0
        %v4744 = vadd.f32 0.0, %v4743
        %v4745 = vpop.f32.mrf.mxu0
        %v4746 = vadd.f32 0.0, %v4745
        %4747 = vmatmul.bf16.gmra.mxu0 %v4659
        %v4748 = vpop.f32.mrf.mxu0
        %v4749 = vadd.f32 0.0, %v4748
        %v4750 = vpop.f32.mrf.mxu0
        %v4751 = vadd.f32 0.0, %v4750
        %4752 = vdwg.mxu0
        %s4753 = sld [smem:[#allocation2 + $0x4]]
        %v4754 = vstv %s4753
        %v4755 = vmul.f32 %v4754, %v2477
        %v4756 = vmul.f32 %v4754, %v2478
        %v4757 = vmul.f32 %v4754, %v2479
        %v4758 = vmul.f32 %v4754, %v2480
        %v4759 = vmul.f32 %v4754, %v2481
        %v4760 = vmul.f32 %v4754, %v2482
        %v4761 = vmul.f32 %v4754, %v2483
        %v4762 = vmul.f32 %v4754, %v2484
        %v4763 = vmul.f32 %v4754, %v2485
        %v4764 = vmul.f32 %v4754, %v2486
        %v4765 = vmul.f32 %v4754, %v2487
        %v4766 = vmul.f32 %v4754, %v2488
        %v4767 = vmul.f32 %v4754, %v2489
        %v4768 = vmul.f32 %v4754, %v2490
        %v4769 = vmul.f32 %v4754, %v2491
        %v4770 = vmul.f32 %v4754, %v2492
        %v4771 = vmul.f32 %v4754, %v2493
        %v4772 = vmul.f32 %v4754, %v2494
        %v4773 = vmul.f32 %v4754, %v2495
        %v4774 = vmul.f32 %v4754, %v2496
        %v4775 = vmul.f32 %v4754, %v2497
        %v4776 = vmul.f32 %v4754, %v2498
        %v4777 = vmul.f32 %v4754, %v2499
        %v4778 = vmul.f32 %v4754, %v2500
        %v4779 = vmul.f32 %v4754, %v2501
        %v4780 = vmul.f32 %v4754, %v2502
        %v4781 = vmul.f32 %v4754, %v2503
        %v4782 = vmul.f32 %v4754, %v2504
        %v4783 = vmul.f32 %v4754, %v2505
        %v4784 = vmul.f32 %v4754, %v2506
        %v4785 = vmul.f32 %v4754, %v2507
        %v4786 = vmul.f32 %v4754, %v2508
        %v4787 = vadd.f32 %v4674, %v4755
        %v4788 = vadd.f32 %v4676, %v4756
        %v4789 = vadd.f32 %v4679, %v4757
        %v4790 = vadd.f32 %v4681, %v4758
        %v4791 = vadd.f32 %v4684, %v4759
        %v4792 = vadd.f32 %v4686, %v4760
        %v4793 = vadd.f32 %v4689, %v4761
        %v4794 = vadd.f32 %v4691, %v4762
        %v4795 = vadd.f32 %v4694, %v4763
        %v4796 = vadd.f32 %v4696, %v4764
        %v4797 = vadd.f32 %v4699, %v4765
        %v4798 = vadd.f32 %v4701, %v4766
        %v4799 = vadd.f32 %v4704, %v4767
        %v4800 = vadd.f32 %v4706, %v4768
        %v4801 = vadd.f32 %v4709, %v4769
        %v4802 = vadd.f32 %v4711, %v4770
        %v4803 = vadd.f32 %v4714, %v4771
        %v4804 = vadd.f32 %v4716, %v4772
        %v4805 = vadd.f32 %v4719, %v4773
        %v4806 = vadd.f32 %v4721, %v4774
        %v4807 = vadd.f32 %v4724, %v4775
        %v4808 = vadd.f32 %v4726, %v4776
        %v4809 = vadd.f32 %v4729, %v4777
        %v4810 = vadd.f32 %v4731, %v4778
        %v4811 = vadd.f32 %v4734, %v4779
        %v4812 = vadd.f32 %v4736, %v4780
        %v4813 = vadd.f32 %v4739, %v4781
        %v4814 = vadd.f32 %v4741, %v4782
        %v4815 = vadd.f32 %v4744, %v4783
        %v4816 = vadd.f32 %v4746, %v4784
        %v4817 = vadd.f32 %v4749, %v4785
        %v4818 = vadd.f32 %v4751, %v4786
        %s4819 = sld [smem:[#allocation2 + $0x5]]
        %v4820 = vstv %s4819
        %v4821 = vmul.f32 %v4820, %v4315
        %v4822 = vmul.f32 %v4820, %v4316
        %v4823 = vmul.f32 %v4820, %v4317
        %v4824 = vmul.f32 %v4820, %v4318
        %v4825 = vmul.f32 %v4820, %v4319
        %v4826 = vmul.f32 %v4820, %v4320
        %v4827 = vmul.f32 %v4820, %v4321
        %v4828 = vmul.f32 %v4820, %v4322
        %v4829 = vmul.f32 %v4820, %v4323
        %v4830 = vmul.f32 %v4820, %v4324
        %v4831 = vmul.f32 %v4820, %v4325
        %v4832 = vmul.f32 %v4820, %v4326
        %v4833 = vmul.f32 %v4820, %v4327
        %v4834 = vmul.f32 %v4820, %v4328
        %v4835 = vmul.f32 %v4820, %v4329
        %v4836 = vmul.f32 %v4820, %v4330
        %v4837 = vmul.f32 %v4820, %v4331
        %v4838 = vmul.f32 %v4820, %v4332
        %v4839 = vmul.f32 %v4820, %v4333
        %v4840 = vmul.f32 %v4820, %v4334
        %v4841 = vmul.f32 %v4820, %v4335
        %v4842 = vmul.f32 %v4820, %v4336
        %v4843 = vmul.f32 %v4820, %v4337
        %v4844 = vmul.f32 %v4820, %v4338
        %v4845 = vmul.f32 %v4820, %v4339
        %v4846 = vmul.f32 %v4820, %v4340
        %v4847 = vmul.f32 %v4820, %v4341
        %v4848 = vmul.f32 %v4820, %v4342
        %v4849 = vmul.f32 %v4820, %v4343
        %v4850 = vmul.f32 %v4820, %v4344
        %v4851 = vmul.f32 %v4820, %v4345
        %v4852 = vmul.f32 %v4820, %v4346
        %v4853 = vadd.f32 %v4787, %v4821
        %v4854 = vadd.f32 %v4788, %v4822
        %v4855 = vadd.f32 %v4789, %v4823
        %v4856 = vadd.f32 %v4790, %v4824
        %v4857 = vadd.f32 %v4791, %v4825
        %v4858 = vadd.f32 %v4792, %v4826
        %v4859 = vadd.f32 %v4793, %v4827
        %v4860 = vadd.f32 %v4794, %v4828
        %v4861 = vadd.f32 %v4795, %v4829
        %v4862 = vadd.f32 %v4796, %v4830
        %v4863 = vadd.f32 %v4797, %v4831
        %v4864 = vadd.f32 %v4798, %v4832
        %v4865 = vadd.f32 %v4799, %v4833
        %v4866 = vadd.f32 %v4800, %v4834
        %v4867 = vadd.f32 %v4801, %v4835
        %v4868 = vadd.f32 %v4802, %v4836
        %v4869 = vadd.f32 %v4803, %v4837
        %v4870 = vadd.f32 %v4804, %v4838
        %v4871 = vadd.f32 %v4805, %v4839
        %v4872 = vadd.f32 %v4806, %v4840
        %v4873 = vadd.f32 %v4807, %v4841
        %v4874 = vadd.f32 %v4808, %v4842
        %v4875 = vadd.f32 %v4809, %v4843
        %v4876 = vadd.f32 %v4810, %v4844
        %v4877 = vadd.f32 %v4811, %v4845
        %v4878 = vadd.f32 %v4812, %v4846
        %v4879 = vadd.f32 %v4813, %v4847
        %v4880 = vadd.f32 %v4814, %v4848
        %v4881 = vadd.f32 %v4815, %v4849
        %v4882 = vadd.f32 %v4816, %v4850
        %v4883 = vadd.f32 %v4817, %v4851
        %v4884 = vadd.f32 %v4818, %v4852
        %v4885 = vadd.f32 %v4560, %v4853
        %v4886 = vadd.f32 %v4561, %v4854
        %v4887 = vadd.f32 %v4562, %v4855
        %v4888 = vadd.f32 %v4563, %v4856
        %v4889 = vadd.f32 %v4564, %v4857
        %v4890 = vadd.f32 %v4565, %v4858
        %v4891 = vadd.f32 %v4566, %v4859
        %v4892 = vadd.f32 %v4567, %v4860
        %v4893 = vadd.f32 %v4568, %v4861
        %v4894 = vadd.f32 %v4569, %v4862
        %v4895 = vadd.f32 %v4570, %v4863
        %v4896 = vadd.f32 %v4571, %v4864
        %v4897 = vadd.f32 %v4572, %v4865
        %v4898 = vadd.f32 %v4573, %v4866
        %v4899 = vadd.f32 %v4574, %v4867
        %v4900 = vadd.f32 %v4575, %v4868
        %v4901 = vadd.f32 %v4576, %v4869
        %v4902 = vadd.f32 %v4577, %v4870
        %v4903 = vadd.f32 %v4578, %v4871
        %v4904 = vadd.f32 %v4579, %v4872
        %v4905 = vadd.f32 %v4580, %v4873
        %v4906 = vadd.f32 %v4581, %v4874
        %v4907 = vadd.f32 %v4582, %v4875
        %v4908 = vadd.f32 %v4583, %v4876
        %v4909 = vadd.f32 %v4584, %v4877
        %v4910 = vadd.f32 %v4585, %v4878
        %v4911 = vadd.f32 %v4586, %v4879
        %v4912 = vadd.f32 %v4587, %v4880
        %v4913 = vadd.f32 %v4588, %v4881
        %v4914 = vadd.f32 %v4589, %v4882
        %v4915 = vadd.f32 %v4590, %v4883
        %v4916 = vadd.f32 %v4591, %v4884
        %v4949 = vrot.slane %v4885, 7
        %v4950 = vrot.slane %v4886, 7
        %v4951 = vsel %vm372, %v4949, %v4950
        %v4952 = vrot.slane %v4887, 7
        %v4953 = vrot.slane %v4888, 7
        %v4954 = vsel %vm372, %v4952, %v4953
        %v4955 = vrot.slane %v4889, 7
        %v4956 = vrot.slane %v4890, 7
        %v4957 = vsel %vm372, %v4955, %v4956
        %v4958 = vrot.slane %v4891, 7
        %v4959 = vrot.slane %v4892, 7
        %v4960 = vsel %vm372, %v4958, %v4959
        %v4961 = vrot.slane %v4893, 7
        %v4962 = vrot.slane %v4894, 7
        %v4963 = vsel %vm372, %v4961, %v4962
        %v4964 = vrot.slane %v4895, 7
        %v4965 = vrot.slane %v4896, 7
        %v4966 = vsel %vm372, %v4964, %v4965
        %v4967 = vrot.slane %v4897, 7
        %v4968 = vrot.slane %v4898, 7
        %v4969 = vsel %vm372, %v4967, %v4968
        %v4970 = vrot.slane %v4899, 7
        %v4971 = vrot.slane %v4900, 7
        %v4972 = vsel %vm372, %v4970, %v4971
        %v4973 = vrot.slane %v4901, 7
        %v4974 = vrot.slane %v4902, 7
        %v4975 = vsel %vm372, %v4973, %v4974
        %v4976 = vrot.slane %v4903, 7
        %v4977 = vrot.slane %v4904, 7
        %v4978 = vsel %vm372, %v4976, %v4977
        %v4979 = vrot.slane %v4905, 7
        %v4980 = vrot.slane %v4906, 7
        %v4981 = vsel %vm372, %v4979, %v4980
        %v4982 = vrot.slane %v4907, 7
        %v4983 = vrot.slane %v4908, 7
        %v4984 = vsel %vm372, %v4982, %v4983
        %v4985 = vrot.slane %v4909, 7
        %v4986 = vrot.slane %v4910, 7
        %v4987 = vsel %vm372, %v4985, %v4986
        %v4988 = vrot.slane %v4911, 7
        %v4989 = vrot.slane %v4912, 7
        %v4990 = vsel %vm372, %v4988, %v4989
        %v4991 = vrot.slane %v4913, 7
        %v4992 = vrot.slane %v4914, 7
        %v4993 = vsel %vm372, %v4991, %v4992
        %v4994 = vrot.slane %v4915, 7
        %v4995 = vrot.slane %v4916, 7
        %v4996 = vsel %vm372, %v4994, %v4995
        %v5045 = vsel %vm372, 0.0, %v4949
        %v5046 = vsel %vm372, 0.0, %v4952
        %v5047 = vsel %vm372, 0.0, %v4955
        %v5048 = vsel %vm372, 0.0, %v4958
        %v5049 = vsel %vm372, 0.0, %v4961
        %v5050 = vsel %vm372, 0.0, %v4964
        %v5051 = vsel %vm372, 0.0, %v4967
        %v5052 = vsel %vm372, 0.0, %v4970
        %v5053 = vsel %vm372, 0.0, %v4973
        %v5054 = vsel %vm372, 0.0, %v4976
        %v5055 = vsel %vm372, 0.0, %v4979
        %v5056 = vsel %vm372, 0.0, %v4982
        %v5057 = vsel %vm372, 0.0, %v4985
        %v5058 = vsel %vm372, 0.0, %v4988
        %v5059 = vsel %vm372, 0.0, %v4991
        %v5060 = vsel %vm372, 0.0, %v4994
        %v5061 = vsel %vm372, %v4950, 0.0
        %v5062 = vsel %vm372, %v4953, 0.0
        %v5063 = vsel %vm372, %v4956, 0.0
        %v5064 = vsel %vm372, %v4959, 0.0
        %v5065 = vsel %vm372, %v4962, 0.0
        %v5066 = vsel %vm372, %v4965, 0.0
        %v5067 = vsel %vm372, %v4968, 0.0
        %v5068 = vsel %vm372, %v4971, 0.0
        %v5069 = vsel %vm372, %v4974, 0.0
        %v5070 = vsel %vm372, %v4977, 0.0
        %v5071 = vsel %vm372, %v4980, 0.0
        %v5072 = vsel %vm372, %v4983, 0.0
        %v5073 = vsel %vm372, %v4986, 0.0
        %v5074 = vsel %vm372, %v4989, 0.0
        %v5075 = vsel %vm372, %v4992, 0.0
        %v5076 = vsel %vm372, %v4995, 0.0
        %v5077 = vmax.f32 %v5045, 0.0
        %v5078 = vmax.f32 %v4951, 0.0
        %v5079 = vmax.f32 %v5061, 0.0
        %v5080 = vmax.f32 %v5046, 0.0
        %v5081 = vmax.f32 %v4954, 0.0
        %v5082 = vmax.f32 %v5062, 0.0
        %v5083 = vmax.f32 %v5047, 0.0
        %v5084 = vmax.f32 %v4957, 0.0
        %v5085 = vmax.f32 %v5063, 0.0
        %v5086 = vmax.f32 %v5048, 0.0
        %v5087 = vmax.f32 %v4960, 0.0
        %v5088 = vmax.f32 %v5064, 0.0
        %v5089 = vmax.f32 %v5049, 0.0
        %v5090 = vmax.f32 %v4963, 0.0
        %v5091 = vmax.f32 %v5065, 0.0
        %v5092 = vmax.f32 %v5050, 0.0
        %v5093 = vmax.f32 %v4966, 0.0
        %v5094 = vmax.f32 %v5066, 0.0
        %v5095 = vmax.f32 %v5051, 0.0
        %v5096 = vmax.f32 %v4969, 0.0
        %v5097 = vmax.f32 %v5067, 0.0
        %v5098 = vmax.f32 %v5052, 0.0
        %v5099 = vmax.f32 %v4972, 0.0
        %v5100 = vmax.f32 %v5068, 0.0
        %v5101 = vmax.f32 %v5053, 0.0
        %v5102 = vmax.f32 %v4975, 0.0
        %v5103 = vmax.f32 %v5069, 0.0
        %v5104 = vmax.f32 %v5054, 0.0
        %v5105 = vmax.f32 %v4978, 0.0
        %v5106 = vmax.f32 %v5070, 0.0
        %v5107 = vmax.f32 %v5055, 0.0
        %v5108 = vmax.f32 %v4981, 0.0
        %v5109 = vmax.f32 %v5071, 0.0
        %v5110 = vmax.f32 %v5056, 0.0
        %v5111 = vmax.f32 %v4984, 0.0
        %v5112 = vmax.f32 %v5072, 0.0
        %v5113 = vmax.f32 %v5057, 0.0
        %v5114 = vmax.f32 %v4987, 0.0
        %v5115 = vmax.f32 %v5073, 0.0
        %v5116 = vmax.f32 %v5058, 0.0
        %v5117 = vmax.f32 %v4990, 0.0
        %v5118 = vmax.f32 %v5074, 0.0
        %v5119 = vmax.f32 %v5059, 0.0
        %v5120 = vmax.f32 %v4993, 0.0
        %v5121 = vmax.f32 %v5075, 0.0
        %v5122 = vmax.f32 %v5060, 0.0
        %v5123 = vmax.f32 %v4996, 0.0
        %v5124 = vmax.f32 %v5076, 0.0
        %v5170 = vrot.slane %v5077, 1
        %v5171 = vrot.slane %v5078, 1
        %v5172 = vsel %vm595, %v5170, %v5171
        %v5173 = vrot.slane %v5079, 1
        %v5174 = vsel %vm595, %v5171, %v5173
        %v5175 = vrot.slane %v5080, 1
        %v5176 = vrot.slane %v5081, 1
        %v5177 = vsel %vm595, %v5175, %v5176
        %v5178 = vrot.slane %v5082, 1
        %v5179 = vsel %vm595, %v5176, %v5178
        %v5180 = vrot.slane %v5083, 1
        %v5181 = vrot.slane %v5084, 1
        %v5182 = vsel %vm595, %v5180, %v5181
        %v5183 = vrot.slane %v5085, 1
        %v5184 = vsel %vm595, %v5181, %v5183
        %v5185 = vrot.slane %v5086, 1
        %v5186 = vrot.slane %v5087, 1
        %v5187 = vsel %vm595, %v5185, %v5186
        %v5188 = vrot.slane %v5088, 1
        %v5189 = vsel %vm595, %v5186, %v5188
        %v5190 = vrot.slane %v5089, 1
        %v5191 = vrot.slane %v5090, 1
        %v5192 = vsel %vm595, %v5190, %v5191
        %v5193 = vrot.slane %v5091, 1
        %v5194 = vsel %vm595, %v5191, %v5193
        %v5195 = vrot.slane %v5092, 1
        %v5196 = vrot.slane %v5093, 1
        %v5197 = vsel %vm595, %v5195, %v5196
        %v5198 = vrot.slane %v5094, 1
        %v5199 = vsel %vm595, %v5196, %v5198
        %v5200 = vrot.slane %v5095, 1
        %v5201 = vrot.slane %v5096, 1
        %v5202 = vsel %vm595, %v5200, %v5201
        %v5203 = vrot.slane %v5097, 1
        %v5204 = vsel %vm595, %v5201, %v5203
        %v5205 = vrot.slane %v5098, 1
        %v5206 = vrot.slane %v5099, 1
        %v5207 = vsel %vm595, %v5205, %v5206
        %v5208 = vrot.slane %v5100, 1
        %v5209 = vsel %vm595, %v5206, %v5208
        %v5210 = vrot.slane %v5101, 1
        %v5211 = vrot.slane %v5102, 1
        %v5212 = vsel %vm595, %v5210, %v5211
        %v5213 = vrot.slane %v5103, 1
        %v5214 = vsel %vm595, %v5211, %v5213
        %v5215 = vrot.slane %v5104, 1
        %v5216 = vrot.slane %v5105, 1
        %v5217 = vsel %vm595, %v5215, %v5216
        %v5218 = vrot.slane %v5106, 1
        %v5219 = vsel %vm595, %v5216, %v5218
        %v5220 = vrot.slane %v5107, 1
        %v5221 = vrot.slane %v5108, 1
        %v5222 = vsel %vm595, %v5220, %v5221
        %v5223 = vrot.slane %v5109, 1
        %v5224 = vsel %vm595, %v5221, %v5223
        %v5225 = vrot.slane %v5110, 1
        %v5226 = vrot.slane %v5111, 1
        %v5227 = vsel %vm595, %v5225, %v5226
        %v5228 = vrot.slane %v5112, 1
        %v5229 = vsel %vm595, %v5226, %v5228
        %v5230 = vrot.slane %v5113, 1
        %v5231 = vrot.slane %v5114, 1
        %v5232 = vsel %vm595, %v5230, %v5231
        %v5233 = vrot.slane %v5115, 1
        %v5234 = vsel %vm595, %v5231, %v5233
        %v5235 = vrot.slane %v5116, 1
        %v5236 = vrot.slane %v5117, 1
        %v5237 = vsel %vm595, %v5235, %v5236
        %v5238 = vrot.slane %v5118, 1
        %v5239 = vsel %vm595, %v5236, %v5238
        %v5240 = vrot.slane %v5119, 1
        %v5241 = vrot.slane %v5120, 1
        %v5242 = vsel %vm595, %v5240, %v5241
        %v5243 = vrot.slane %v5121, 1
        %v5244 = vsel %vm595, %v5241, %v5243
        %v5245 = vrot.slane %v5077, 2
        %v5246 = vrot.slane %v5078, 2
        %v5247 = vsel %vm673, %v5245, %v5246
        %v5248 = vrot.slane %v5079, 2
        %v5249 = vsel %vm673, %v5246, %v5248
        %v5250 = vrot.slane %v5080, 2
        %v5251 = vrot.slane %v5081, 2
        %v5252 = vsel %vm673, %v5250, %v5251
        %v5253 = vrot.slane %v5082, 2
        %v5254 = vsel %vm673, %v5251, %v5253
        %v5255 = vrot.slane %v5083, 2
        %v5256 = vrot.slane %v5084, 2
        %v5257 = vsel %vm673, %v5255, %v5256
        %v5258 = vrot.slane %v5085, 2
        %v5259 = vsel %vm673, %v5256, %v5258
        %v5260 = vrot.slane %v5086, 2
        %v5261 = vrot.slane %v5087, 2
        %v5262 = vsel %vm673, %v5260, %v5261
        %v5263 = vrot.slane %v5088, 2
        %v5264 = vsel %vm673, %v5261, %v5263
        %v5265 = vrot.slane %v5089, 2
        %v5266 = vrot.slane %v5090, 2
        %v5267 = vsel %vm673, %v5265, %v5266
        %v5268 = vrot.slane %v5091, 2
        %v5269 = vsel %vm673, %v5266, %v5268
        %v5270 = vrot.slane %v5092, 2
        %v5271 = vrot.slane %v5093, 2
        %v5272 = vsel %vm673, %v5270, %v5271
        %v5273 = vrot.slane %v5094, 2
        %v5274 = vsel %vm673, %v5271, %v5273
        %v5275 = vrot.slane %v5095, 2
        %v5276 = vrot.slane %v5096, 2
        %v5277 = vsel %vm673, %v5275, %v5276
        %v5278 = vrot.slane %v5097, 2
        %v5279 = vsel %vm673, %v5276, %v5278
        %v5280 = vrot.slane %v5098, 2
        %v5281 = vrot.slane %v5099, 2
        %v5282 = vsel %vm673, %v5280, %v5281
        %v5283 = vrot.slane %v5100, 2
        %v5284 = vsel %vm673, %v5281, %v5283
        %v5285 = vrot.slane %v5101, 2
        %v5286 = vrot.slane %v5102, 2
        %v5287 = vsel %vm673, %v5285, %v5286
        %v5288 = vrot.slane %v5103, 2
        %v5289 = vsel %vm673, %v5286, %v5288
        %v5290 = vrot.slane %v5104, 2
        %v5291 = vrot.slane %v5105, 2
        %v5292 = vsel %vm673, %v5290, %v5291
        %v5293 = vrot.slane %v5106, 2
        %v5294 = vsel %vm673, %v5291, %v5293
        %v5295 = vrot.slane %v5107, 2
        %v5296 = vrot.slane %v5108, 2
        %v5297 = vsel %vm673, %v5295, %v5296
        %v5298 = vrot.slane %v5109, 2
        %v5299 = vsel %vm673, %v5296, %v5298
        %v5300 = vrot.slane %v5110, 2
        %v5301 = vrot.slane %v5111, 2
        %v5302 = vsel %vm673, %v5300, %v5301
        %v5303 = vrot.slane %v5112, 2
        %v5304 = vsel %vm673, %v5301, %v5303
        %v5305 = vrot.slane %v5113, 2
        %v5306 = vrot.slane %v5114, 2
        %v5307 = vsel %vm673, %v5305, %v5306
        %v5308 = vrot.slane %v5115, 2
        %v5309 = vsel %vm673, %v5306, %v5308
        %v5310 = vrot.slane %v5116, 2
        %v5311 = vrot.slane %v5117, 2
        %v5312 = vsel %vm673, %v5310, %v5311
        %v5313 = vrot.slane %v5118, 2
        %v5314 = vsel %vm673, %v5311, %v5313
        %v5315 = vrot.slane %v5119, 2
        %v5316 = vrot.slane %v5120, 2
        %v5317 = vsel %vm673, %v5315, %v5316
        %v5318 = vrot.slane %v5121, 2
        %v5319 = vsel %vm673, %v5316, %v5318
        %v5323 = vrot.slane %v5122, 1
        %v5324 = vrot.slane %v5123, 1
        %v5325 = vsel %vm595, %v5323, %v5324
        %v5326 = vrot.slane %v5124, 1
        %v5327 = vsel %vm595, %v5324, %v5326
        %v5328 = vrot.slane %v5122, 2
        %v5329 = vrot.slane %v5123, 2
        %v5330 = vsel %vm673, %v5328, %v5329
        %v5331 = vrot.slane %v5124, 2
        %v5332 = vsel %vm673, %v5329, %v5331
        %5333 = vrot.lane.b32.xlu0 %v5172, 4
        %v5334 = vpop.permute.xlu0 %5333
        %5335 = vrot.lane.b32.xlu0 %v5174, 4
        %v5336 = vpop.permute.xlu0 %5335
        %5337 = vrot.lane.b32.xlu0 %v5177, 4
        %v5338 = vpop.permute.xlu0 %5337
        %5339 = vrot.lane.b32.xlu0 %v5179, 4
        %v5340 = vpop.permute.xlu0 %5339
        %5341 = vrot.lane.b32.xlu0 %v5182, 4
        %v5342 = vpop.permute.xlu0 %5341
        %5343 = vrot.lane.b32.xlu0 %v5184, 4
        %v5344 = vpop.permute.xlu0 %5343
        %5345 = vrot.lane.b32.xlu0 %v5187, 4
        %v5346 = vpop.permute.xlu0 %5345
        %5347 = vrot.lane.b32.xlu0 %v5189, 4
        %v5348 = vpop.permute.xlu0 %5347
        %5349 = vrot.lane.b32.xlu0 %v5192, 4
        %v5350 = vpop.permute.xlu0 %5349
        %5351 = vrot.lane.b32.xlu0 %v5194, 4
        %v5352 = vpop.permute.xlu0 %5351
        %5353 = vrot.lane.b32.xlu0 %v5197, 4
        %v5354 = vpop.permute.xlu0 %5353
        %5355 = vrot.lane.b32.xlu0 %v5199, 4
        %v5356 = vpop.permute.xlu0 %5355
        %5357 = vrot.lane.b32.xlu0 %v5202, 4
        %v5358 = vpop.permute.xlu0 %5357
        %5359 = vrot.lane.b32.xlu0 %v5204, 4
        %v5360 = vpop.permute.xlu0 %5359
        %5361 = vrot.lane.b32.xlu0 %v5207, 4
        %v5362 = vpop.permute.xlu0 %5361
        %5363 = vrot.lane.b32.xlu0 %v5209, 4
        %v5364 = vpop.permute.xlu0 %5363
        %5365 = vrot.lane.b32.xlu0 %v5212, 4
        %v5366 = vpop.permute.xlu0 %5365
        %5367 = vrot.lane.b32.xlu0 %v5214, 4
        %v5368 = vpop.permute.xlu0 %5367
        %5369 = vrot.lane.b32.xlu0 %v5217, 4
        %v5370 = vpop.permute.xlu0 %5369
        %5371 = vrot.lane.b32.xlu0 %v5219, 4
        %v5372 = vpop.permute.xlu0 %5371
        %5373 = vrot.lane.b32.xlu0 %v5222, 4
        %v5374 = vpop.permute.xlu0 %5373
        %5375 = vrot.lane.b32.xlu0 %v5224, 4
        %v5376 = vpop.permute.xlu0 %5375
        %5377 = vrot.lane.b32.xlu0 %v5227, 4
        %v5378 = vpop.permute.xlu0 %5377
        %5379 = vrot.lane.b32.xlu0 %v5229, 4
        %v5380 = vpop.permute.xlu0 %5379
        %5381 = vrot.lane.b32.xlu0 %v5232, 4
        %v5382 = vpop.permute.xlu0 %5381
        %5383 = vrot.lane.b32.xlu0 %v5234, 4
        %v5384 = vpop.permute.xlu0 %5383
        %5385 = vrot.lane.b32.xlu0 %v5237, 4
        %v5386 = vpop.permute.xlu0 %5385
        %5387 = vrot.lane.b32.xlu0 %v5239, 4
        %v5388 = vpop.permute.xlu0 %5387
        %5389 = vrot.lane.b32.xlu0 %v5242, 4
        %v5390 = vpop.permute.xlu0 %5389
        %5391 = vrot.lane.b32.xlu0 %v5244, 4
        %v5392 = vpop.permute.xlu0 %5391
        %5423 = vrot.lane.b32.xlu0 %v5247, 8
        %v5424 = vpop.permute.xlu0 %5423
        %5425 = vrot.lane.b32.xlu0 %v5249, 8
        %v5426 = vpop.permute.xlu0 %5425
        %5427 = vrot.lane.b32.xlu0 %v5252, 8
        %v5428 = vpop.permute.xlu0 %5427
        %5429 = vrot.lane.b32.xlu0 %v5254, 8
        %v5430 = vpop.permute.xlu0 %5429
        %5431 = vrot.lane.b32.xlu0 %v5257, 8
        %v5432 = vpop.permute.xlu0 %5431
        %5433 = vrot.lane.b32.xlu0 %v5259, 8
        %v5434 = vpop.permute.xlu0 %5433
        %5435 = vrot.lane.b32.xlu0 %v5262, 8
        %v5436 = vpop.permute.xlu0 %5435
        %5437 = vrot.lane.b32.xlu0 %v5264, 8
        %v5438 = vpop.permute.xlu0 %5437
        %5439 = vrot.lane.b32.xlu0 %v5267, 8
        %v5440 = vpop.permute.xlu0 %5439
        %5441 = vrot.lane.b32.xlu0 %v5269, 8
        %v5442 = vpop.permute.xlu0 %5441
        %5443 = vrot.lane.b32.xlu0 %v5272, 8
        %v5444 = vpop.permute.xlu0 %5443
        %5445 = vrot.lane.b32.xlu0 %v5274, 8
        %v5446 = vpop.permute.xlu0 %5445
        %5447 = vrot.lane.b32.xlu0 %v5277, 8
        %v5448 = vpop.permute.xlu0 %5447
        %5449 = vrot.lane.b32.xlu0 %v5279, 8
        %v5450 = vpop.permute.xlu0 %5449
        %5451 = vrot.lane.b32.xlu0 %v5282, 8
        %v5452 = vpop.permute.xlu0 %5451
        %5453 = vrot.lane.b32.xlu0 %v5284, 8
        %v5454 = vpop.permute.xlu0 %5453
        %5455 = vrot.lane.b32.xlu0 %v5287, 8
        %v5456 = vpop.permute.xlu0 %5455
        %5457 = vrot.lane.b32.xlu0 %v5289, 8
        %v5458 = vpop.permute.xlu0 %5457
        %5459 = vrot.lane.b32.xlu0 %v5292, 8
        %v5460 = vpop.permute.xlu0 %5459
        %5461 = vrot.lane.b32.xlu0 %v5294, 8
        %v5462 = vpop.permute.xlu0 %5461
        %5463 = vrot.lane.b32.xlu0 %v5297, 8
        %v5464 = vpop.permute.xlu0 %5463
        %5465 = vrot.lane.b32.xlu0 %v5299, 8
        %v5466 = vpop.permute.xlu0 %5465
        %5467 = vrot.lane.b32.xlu0 %v5302, 8
        %v5468 = vpop.permute.xlu0 %5467
        %5469 = vrot.lane.b32.xlu0 %v5304, 8
        %v5470 = vpop.permute.xlu0 %5469
        %5471 = vrot.lane.b32.xlu0 %v5307, 8
        %v5472 = vpop.permute.xlu0 %5471
        %5473 = vrot.lane.b32.xlu0 %v5309, 8
        %v5474 = vpop.permute.xlu0 %5473
        %5475 = vrot.lane.b32.xlu0 %v5312, 8
        %v5476 = vpop.permute.xlu0 %5475
        %5477 = vrot.lane.b32.xlu0 %v5314, 8
        %v5478 = vpop.permute.xlu0 %5477
        %5479 = vrot.lane.b32.xlu0 %v5317, 8
        %v5480 = vpop.permute.xlu0 %5479
        %5481 = vrot.lane.b32.xlu0 %v5319, 8
        %v5482 = vpop.permute.xlu0 %5481
        %5513 = vrot.lane.b32.xlu0 %v5077, 12
        %v5514 = vpop.permute.xlu0 %5513
        %5515 = vrot.lane.b32.xlu0 %v5078, 12
        %v5516 = vpop.permute.xlu0 %5515
        %5517 = vrot.lane.b32.xlu0 %v5080, 12
        %v5518 = vpop.permute.xlu0 %5517
        %5519 = vrot.lane.b32.xlu0 %v5081, 12
        %v5520 = vpop.permute.xlu0 %5519
        %5521 = vrot.lane.b32.xlu0 %v5083, 12
        %v5522 = vpop.permute.xlu0 %5521
        %5523 = vrot.lane.b32.xlu0 %v5084, 12
        %v5524 = vpop.permute.xlu0 %5523
        %5525 = vrot.lane.b32.xlu0 %v5086, 12
        %v5526 = vpop.permute.xlu0 %5525
        %5527 = vrot.lane.b32.xlu0 %v5087, 12
        %v5528 = vpop.permute.xlu0 %5527
        %5529 = vrot.lane.b32.xlu0 %v5089, 12
        %v5530 = vpop.permute.xlu0 %5529
        %5531 = vrot.lane.b32.xlu0 %v5090, 12
        %v5532 = vpop.permute.xlu0 %5531
        %5533 = vrot.lane.b32.xlu0 %v5092, 12
        %v5534 = vpop.permute.xlu0 %5533
        %5535 = vrot.lane.b32.xlu0 %v5093, 12
        %v5536 = vpop.permute.xlu0 %5535
        %5537 = vrot.lane.b32.xlu0 %v5095, 12
        %v5538 = vpop.permute.xlu0 %5537
        %5539 = vrot.lane.b32.xlu0 %v5096, 12
        %v5540 = vpop.permute.xlu0 %5539
        %5541 = vrot.lane.b32.xlu0 %v5098, 12
        %v5542 = vpop.permute.xlu0 %5541
        %5543 = vrot.lane.b32.xlu0 %v5099, 12
        %v5544 = vpop.permute.xlu0 %5543
        %5545 = vrot.lane.b32.xlu0 %v5101, 12
        %v5546 = vpop.permute.xlu0 %5545
        %5547 = vrot.lane.b32.xlu0 %v5102, 12
        %v5548 = vpop.permute.xlu0 %5547
        %5549 = vrot.lane.b32.xlu0 %v5104, 12
        %v5550 = vpop.permute.xlu0 %5549
        %5551 = vrot.lane.b32.xlu0 %v5105, 12
        %v5552 = vpop.permute.xlu0 %5551
        %5553 = vrot.lane.b32.xlu0 %v5107, 12
        %v5554 = vpop.permute.xlu0 %5553
        %5555 = vrot.lane.b32.xlu0 %v5108, 12
        %v5556 = vpop.permute.xlu0 %5555
        %5557 = vrot.lane.b32.xlu0 %v5110, 12
        %v5558 = vpop.permute.xlu0 %5557
        %5559 = vrot.lane.b32.xlu0 %v5111, 12
        %v5560 = vpop.permute.xlu0 %5559
        %5561 = vrot.lane.b32.xlu0 %v5113, 12
        %v5562 = vpop.permute.xlu0 %5561
        %5563 = vrot.lane.b32.xlu0 %v5114, 12
        %v5564 = vpop.permute.xlu0 %5563
        %5565 = vrot.lane.b32.xlu0 %v5116, 12
        %v5566 = vpop.permute.xlu0 %5565
        %5567 = vrot.lane.b32.xlu0 %v5117, 12
        %v5568 = vpop.permute.xlu0 %5567
        %5569 = vrot.lane.b32.xlu0 %v5119, 12
        %v5570 = vpop.permute.xlu0 %5569
        %5571 = vrot.lane.b32.xlu0 %v5120, 12
        %v5572 = vpop.permute.xlu0 %5571
        %5573 = vrot.lane.b32.xlu0 %v5122, 12
        %v5574 = vpop.permute.xlu0 %5573
        %5575 = vrot.lane.b32.xlu0 %v5123, 12
        %v5576 = vpop.permute.xlu0 %5575
        %5609 = vrot.lane.b32.xlu0 %v5172, 16
        %v5610 = vpop.permute.xlu0 %5609
        %5611 = vrot.lane.b32.xlu0 %v5174, 16
        %v5612 = vpop.permute.xlu0 %5611
        %5613 = vrot.lane.b32.xlu0 %v5177, 16
        %v5614 = vpop.permute.xlu0 %5613
        %5615 = vrot.lane.b32.xlu0 %v5179, 16
        %v5616 = vpop.permute.xlu0 %5615
        %5617 = vrot.lane.b32.xlu0 %v5182, 16
        %v5618 = vpop.permute.xlu0 %5617
        %5619 = vrot.lane.b32.xlu0 %v5184, 16
        %v5620 = vpop.permute.xlu0 %5619
        %5621 = vrot.lane.b32.xlu0 %v5187, 16
        %v5622 = vpop.permute.xlu0 %5621
        %5623 = vrot.lane.b32.xlu0 %v5189, 16
        %v5624 = vpop.permute.xlu0 %5623
        %5625 = vrot.lane.b32.xlu0 %v5192, 16
        %v5626 = vpop.permute.xlu0 %5625
        %5627 = vrot.lane.b32.xlu0 %v5194, 16
        %v5628 = vpop.permute.xlu0 %5627
        %5629 = vrot.lane.b32.xlu0 %v5197, 16
        %v5630 = vpop.permute.xlu0 %5629
        %5631 = vrot.lane.b32.xlu0 %v5199, 16
        %v5632 = vpop.permute.xlu0 %5631
        %5633 = vrot.lane.b32.xlu0 %v5202, 16
        %v5634 = vpop.permute.xlu0 %5633
        %5635 = vrot.lane.b32.xlu0 %v5204, 16
        %v5636 = vpop.permute.xlu0 %5635
        %5637 = vrot.lane.b32.xlu0 %v5207, 16
        %v5638 = vpop.permute.xlu0 %5637
        %5639 = vrot.lane.b32.xlu0 %v5209, 16
        %v5640 = vpop.permute.xlu0 %5639
        %5641 = vrot.lane.b32.xlu0 %v5212, 16
        %v5642 = vpop.permute.xlu0 %5641
        %5643 = vrot.lane.b32.xlu0 %v5214, 16
        %v5644 = vpop.permute.xlu0 %5643
        %5645 = vrot.lane.b32.xlu0 %v5217, 16
        %v5646 = vpop.permute.xlu0 %5645
        %5647 = vrot.lane.b32.xlu0 %v5219, 16
        %v5648 = vpop.permute.xlu0 %5647
        %5649 = vrot.lane.b32.xlu0 %v5222, 16
        %v5650 = vpop.permute.xlu0 %5649
        %5651 = vrot.lane.b32.xlu0 %v5224, 16
        %v5652 = vpop.permute.xlu0 %5651
        %5653 = vrot.lane.b32.xlu0 %v5227, 16
        %v5654 = vpop.permute.xlu0 %5653
        %5655 = vrot.lane.b32.xlu0 %v5229, 16
        %v5656 = vpop.permute.xlu0 %5655
        %5657 = vrot.lane.b32.xlu0 %v5232, 16
        %v5658 = vpop.permute.xlu0 %5657
        %5659 = vrot.lane.b32.xlu0 %v5234, 16
        %v5660 = vpop.permute.xlu0 %5659
        %5661 = vrot.lane.b32.xlu0 %v5237, 16
        %v5662 = vpop.permute.xlu0 %5661
        %5663 = vrot.lane.b32.xlu0 %v5239, 16
        %v5664 = vpop.permute.xlu0 %5663
        %5665 = vrot.lane.b32.xlu0 %v5242, 16
        %v5666 = vpop.permute.xlu0 %5665
        %5667 = vrot.lane.b32.xlu0 %v5244, 16
        %v5668 = vpop.permute.xlu0 %5667
        %5669 = vrot.lane.b32.xlu0 %v5325, 16
        %v5670 = vpop.permute.xlu0 %5669
        %5671 = vrot.lane.b32.xlu0 %v5327, 16
        %v5672 = vpop.permute.xlu0 %5671
        %5705 = vrot.lane.b32.xlu0 %v5247, 20
        %v5706 = vpop.permute.xlu0 %5705
        %5707 = vrot.lane.b32.xlu0 %v5249, 20
        %v5708 = vpop.permute.xlu0 %5707
        %5709 = vrot.lane.b32.xlu0 %v5252, 20
        %v5710 = vpop.permute.xlu0 %5709
        %5711 = vrot.lane.b32.xlu0 %v5254, 20
        %v5712 = vpop.permute.xlu0 %5711
        %5713 = vrot.lane.b32.xlu0 %v5257, 20
        %v5714 = vpop.permute.xlu0 %5713
        %5715 = vrot.lane.b32.xlu0 %v5259, 20
        %v5716 = vpop.permute.xlu0 %5715
        %5717 = vrot.lane.b32.xlu0 %v5262, 20
        %v5718 = vpop.permute.xlu0 %5717
        %5719 = vrot.lane.b32.xlu0 %v5264, 20
        %v5720 = vpop.permute.xlu0 %5719
        %5721 = vrot.lane.b32.xlu0 %v5267, 20
        %v5722 = vpop.permute.xlu0 %5721
        %5723 = vrot.lane.b32.xlu0 %v5269, 20
        %v5724 = vpop.permute.xlu0 %5723
        %5725 = vrot.lane.b32.xlu0 %v5272, 20
        %v5726 = vpop.permute.xlu0 %5725
        %5727 = vrot.lane.b32.xlu0 %v5274, 20
        %v5728 = vpop.permute.xlu0 %5727
        %5729 = vrot.lane.b32.xlu0 %v5277, 20
        %v5730 = vpop.permute.xlu0 %5729
        %5731 = vrot.lane.b32.xlu0 %v5279, 20
        %v5732 = vpop.permute.xlu0 %5731
        %5733 = vrot.lane.b32.xlu0 %v5282, 20
        %v5734 = vpop.permute.xlu0 %5733
        %5735 = vrot.lane.b32.xlu0 %v5284, 20
        %v5736 = vpop.permute.xlu0 %5735
        %5737 = vrot.lane.b32.xlu0 %v5287, 20
        %v5738 = vpop.permute.xlu0 %5737
        %5739 = vrot.lane.b32.xlu0 %v5289, 20
        %v5740 = vpop.permute.xlu0 %5739
        %5741 = vrot.lane.b32.xlu0 %v5292, 20
        %v5742 = vpop.permute.xlu0 %5741
        %5743 = vrot.lane.b32.xlu0 %v5294, 20
        %v5744 = vpop.permute.xlu0 %5743
        %5745 = vrot.lane.b32.xlu0 %v5297, 20
        %v5746 = vpop.permute.xlu0 %5745
        %5747 = vrot.lane.b32.xlu0 %v5299, 20
        %v5748 = vpop.permute.xlu0 %5747
        %5749 = vrot.lane.b32.xlu0 %v5302, 20
        %v5750 = vpop.permute.xlu0 %5749
        %5751 = vrot.lane.b32.xlu0 %v5304, 20
        %v5752 = vpop.permute.xlu0 %5751
        %5753 = vrot.lane.b32.xlu0 %v5307, 20
        %v5754 = vpop.permute.xlu0 %5753
        %5755 = vrot.lane.b32.xlu0 %v5309, 20
        %v5756 = vpop.permute.xlu0 %5755
        %5757 = vrot.lane.b32.xlu0 %v5312, 20
        %v5758 = vpop.permute.xlu0 %5757
        %5759 = vrot.lane.b32.xlu0 %v5314, 20
        %v5760 = vpop.permute.xlu0 %5759
        %5761 = vrot.lane.b32.xlu0 %v5317, 20
        %v5762 = vpop.permute.xlu0 %5761
        %5763 = vrot.lane.b32.xlu0 %v5319, 20
        %v5764 = vpop.permute.xlu0 %5763
        %5765 = vrot.lane.b32.xlu0 %v5330, 20
        %v5766 = vpop.permute.xlu0 %5765
        %5767 = vrot.lane.b32.xlu0 %v5332, 20
        %v5768 = vpop.permute.xlu0 %5767
        %5801 = vrot.lane.b32.xlu0 %v5080, 24
        %v5802 = vpop.permute.xlu0 %5801
        %5803 = vrot.lane.b32.xlu0 %v5081, 24
        %v5804 = vpop.permute.xlu0 %5803
        %5805 = vrot.lane.b32.xlu0 %v5083, 24
        %v5806 = vpop.permute.xlu0 %5805
        %5807 = vrot.lane.b32.xlu0 %v5084, 24
        %v5808 = vpop.permute.xlu0 %5807
        %5809 = vrot.lane.b32.xlu0 %v5086, 24
        %v5810 = vpop.permute.xlu0 %5809
        %5811 = vrot.lane.b32.xlu0 %v5087, 24
        %v5812 = vpop.permute.xlu0 %5811
        %5813 = vrot.lane.b32.xlu0 %v5089, 24
        %v5814 = vpop.permute.xlu0 %5813
        %5815 = vrot.lane.b32.xlu0 %v5090, 24
        %v5816 = vpop.permute.xlu0 %5815
        %5817 = vrot.lane.b32.xlu0 %v5092, 24
        %v5818 = vpop.permute.xlu0 %5817
        %5819 = vrot.lane.b32.xlu0 %v5093, 24
        %v5820 = vpop.permute.xlu0 %5819
        %5821 = vrot.lane.b32.xlu0 %v5095, 24
        %v5822 = vpop.permute.xlu0 %5821
        %5823 = vrot.lane.b32.xlu0 %v5096, 24
        %v5824 = vpop.permute.xlu0 %5823
        %5825 = vrot.lane.b32.xlu0 %v5098, 24
        %v5826 = vpop.permute.xlu0 %5825
        %5827 = vrot.lane.b32.xlu0 %v5099, 24
        %v5828 = vpop.permute.xlu0 %5827
        %5829 = vrot.lane.b32.xlu0 %v5101, 24
        %v5830 = vpop.permute.xlu0 %5829
        %5831 = vrot.lane.b32.xlu0 %v5102, 24
        %v5832 = vpop.permute.xlu0 %5831
        %5833 = vrot.lane.b32.xlu0 %v5104, 24
        %v5834 = vpop.permute.xlu0 %5833
        %5835 = vrot.lane.b32.xlu0 %v5105, 24
        %v5836 = vpop.permute.xlu0 %5835
        %5837 = vrot.lane.b32.xlu0 %v5107, 24
        %v5838 = vpop.permute.xlu0 %5837
        %5839 = vrot.lane.b32.xlu0 %v5108, 24
        %v5840 = vpop.permute.xlu0 %5839
        %5841 = vrot.lane.b32.xlu0 %v5110, 24
        %v5842 = vpop.permute.xlu0 %5841
        %5843 = vrot.lane.b32.xlu0 %v5111, 24
        %v5844 = vpop.permute.xlu0 %5843
        %5845 = vrot.lane.b32.xlu0 %v5113, 24
        %v5846 = vpop.permute.xlu0 %5845
        %5847 = vrot.lane.b32.xlu0 %v5114, 24
        %v5848 = vpop.permute.xlu0 %5847
        %5849 = vrot.lane.b32.xlu0 %v5116, 24
        %v5850 = vpop.permute.xlu0 %5849
        %5851 = vrot.lane.b32.xlu0 %v5117, 24
        %v5852 = vpop.permute.xlu0 %5851
        %5853 = vrot.lane.b32.xlu0 %v5119, 24
        %v5854 = vpop.permute.xlu0 %5853
        %5855 = vrot.lane.b32.xlu0 %v5120, 24
        %v5856 = vpop.permute.xlu0 %5855
        %5857 = vrot.lane.b32.xlu0 %v5122, 24
        %v5858 = vpop.permute.xlu0 %5857
        %5859 = vrot.lane.b32.xlu0 %v5123, 24
        %v5860 = vpop.permute.xlu0 %5859
        %5891 = vrot.lane.b32.xlu0 %v5177, 28
        %v5892 = vpop.permute.xlu0 %5891
        %5893 = vrot.lane.b32.xlu0 %v5179, 28
        %v5894 = vpop.permute.xlu0 %5893
        %5895 = vrot.lane.b32.xlu0 %v5182, 28
        %v5896 = vpop.permute.xlu0 %5895
        %5897 = vrot.lane.b32.xlu0 %v5184, 28
        %v5898 = vpop.permute.xlu0 %5897
        %5899 = vrot.lane.b32.xlu0 %v5187, 28
        %v5900 = vpop.permute.xlu0 %5899
        %5901 = vrot.lane.b32.xlu0 %v5189, 28
        %v5902 = vpop.permute.xlu0 %5901
        %5903 = vrot.lane.b32.xlu0 %v5192, 28
        %v5904 = vpop.permute.xlu0 %5903
        %5905 = vrot.lane.b32.xlu0 %v5194, 28
        %v5906 = vpop.permute.xlu0 %5905
        %5907 = vrot.lane.b32.xlu0 %v5197, 28
        %v5908 = vpop.permute.xlu0 %5907
        %5909 = vrot.lane.b32.xlu0 %v5199, 28
        %v5910 = vpop.permute.xlu0 %5909
        %5911 = vrot.lane.b32.xlu0 %v5202, 28
        %v5912 = vpop.permute.xlu0 %5911
        %5913 = vrot.lane.b32.xlu0 %v5204, 28
        %v5914 = vpop.permute.xlu0 %5913
        %5915 = vrot.lane.b32.xlu0 %v5207, 28
        %v5916 = vpop.permute.xlu0 %5915
        %5917 = vrot.lane.b32.xlu0 %v5209, 28
        %v5918 = vpop.permute.xlu0 %5917
        %5919 = vrot.lane.b32.xlu0 %v5212, 28
        %v5920 = vpop.permute.xlu0 %5919
        %5921 = vrot.lane.b32.xlu0 %v5214, 28
        %v5922 = vpop.permute.xlu0 %5921
        %5923 = vrot.lane.b32.xlu0 %v5217, 28
        %v5924 = vpop.permute.xlu0 %5923
        %5925 = vrot.lane.b32.xlu0 %v5219, 28
        %v5926 = vpop.permute.xlu0 %5925
        %5927 = vrot.lane.b32.xlu0 %v5222, 28
        %v5928 = vpop.permute.xlu0 %5927
        %5929 = vrot.lane.b32.xlu0 %v5224, 28
        %v5930 = vpop.permute.xlu0 %5929
        %5931 = vrot.lane.b32.xlu0 %v5227, 28
        %v5932 = vpop.permute.xlu0 %5931
        %5933 = vrot.lane.b32.xlu0 %v5229, 28
        %v5934 = vpop.permute.xlu0 %5933
        %5935 = vrot.lane.b32.xlu0 %v5232, 28
        %v5936 = vpop.permute.xlu0 %5935
        %5937 = vrot.lane.b32.xlu0 %v5234, 28
        %v5938 = vpop.permute.xlu0 %5937
        %5939 = vrot.lane.b32.xlu0 %v5237, 28
        %v5940 = vpop.permute.xlu0 %5939
        %5941 = vrot.lane.b32.xlu0 %v5239, 28
        %v5942 = vpop.permute.xlu0 %5941
        %5943 = vrot.lane.b32.xlu0 %v5242, 28
        %v5944 = vpop.permute.xlu0 %5943
        %5945 = vrot.lane.b32.xlu0 %v5244, 28
        %v5946 = vpop.permute.xlu0 %5945
        %5947 = vrot.lane.b32.xlu0 %v5325, 28
        %v5948 = vpop.permute.xlu0 %5947
        %5949 = vrot.lane.b32.xlu0 %v5327, 28
        %v5950 = vpop.permute.xlu0 %5949
        %5981 = vrot.lane.b32.xlu0 %v5252, 32
        %v5982 = vpop.permute.xlu0 %5981
        %5983 = vrot.lane.b32.xlu0 %v5254, 32
        %v5984 = vpop.permute.xlu0 %5983
        %5985 = vrot.lane.b32.xlu0 %v5257, 32
        %v5986 = vpop.permute.xlu0 %5985
        %5987 = vrot.lane.b32.xlu0 %v5259, 32
        %v5988 = vpop.permute.xlu0 %5987
        %5989 = vrot.lane.b32.xlu0 %v5262, 32
        %v5990 = vpop.permute.xlu0 %5989
        %5991 = vrot.lane.b32.xlu0 %v5264, 32
        %v5992 = vpop.permute.xlu0 %5991
        %5993 = vrot.lane.b32.xlu0 %v5267, 32
        %v5994 = vpop.permute.xlu0 %5993
        %5995 = vrot.lane.b32.xlu0 %v5269, 32
        %v5996 = vpop.permute.xlu0 %5995
        %5997 = vrot.lane.b32.xlu0 %v5272, 32
        %v5998 = vpop.permute.xlu0 %5997
        %5999 = vrot.lane.b32.xlu0 %v5274, 32
        %v6000 = vpop.permute.xlu0 %5999
        %6001 = vrot.lane.b32.xlu0 %v5277, 32
        %v6002 = vpop.permute.xlu0 %6001
        %6003 = vrot.lane.b32.xlu0 %v5279, 32
        %v6004 = vpop.permute.xlu0 %6003
        %6005 = vrot.lane.b32.xlu0 %v5282, 32
        %v6006 = vpop.permute.xlu0 %6005
        %6007 = vrot.lane.b32.xlu0 %v5284, 32
        %v6008 = vpop.permute.xlu0 %6007
        %6009 = vrot.lane.b32.xlu0 %v5287, 32
        %v6010 = vpop.permute.xlu0 %6009
        %6011 = vrot.lane.b32.xlu0 %v5289, 32
        %v6012 = vpop.permute.xlu0 %6011
        %6013 = vrot.lane.b32.xlu0 %v5292, 32
        %v6014 = vpop.permute.xlu0 %6013
        %6015 = vrot.lane.b32.xlu0 %v5294, 32
        %v6016 = vpop.permute.xlu0 %6015
        %6017 = vrot.lane.b32.xlu0 %v5297, 32
        %v6018 = vpop.permute.xlu0 %6017
        %6019 = vrot.lane.b32.xlu0 %v5299, 32
        %v6020 = vpop.permute.xlu0 %6019
        %6021 = vrot.lane.b32.xlu0 %v5302, 32
        %v6022 = vpop.permute.xlu0 %6021
        %6023 = vrot.lane.b32.xlu0 %v5304, 32
        %v6024 = vpop.permute.xlu0 %6023
        %6025 = vrot.lane.b32.xlu0 %v5307, 32
        %v6026 = vpop.permute.xlu0 %6025
        %6027 = vrot.lane.b32.xlu0 %v5309, 32
        %v6028 = vpop.permute.xlu0 %6027
        %6029 = vrot.lane.b32.xlu0 %v5312, 32
        %v6030 = vpop.permute.xlu0 %6029
        %6031 = vrot.lane.b32.xlu0 %v5314, 32
        %v6032 = vpop.permute.xlu0 %6031
        %6033 = vrot.lane.b32.xlu0 %v5317, 32
        %v6034 = vpop.permute.xlu0 %6033
        %6035 = vrot.lane.b32.xlu0 %v5319, 32
        %v6036 = vpop.permute.xlu0 %6035
        %6037 = vrot.lane.b32.xlu0 %v5330, 32
        %v6038 = vpop.permute.xlu0 %6037
        %6039 = vrot.lane.b32.xlu0 %v5332, 32
        %v6040 = vpop.permute.xlu0 %6039
        %v6071 = vsel %vm1517, %v5077, %v5334
        %v6072 = vsel %vm1517, %v5078, %v5336
        %v6073 = vsel %vm1517, %v5080, %v5338
        %v6074 = vsel %vm1517, %v5081, %v5340
        %v6075 = vsel %vm1517, %v5083, %v5342
        %v6076 = vsel %vm1517, %v5084, %v5344
        %v6077 = vsel %vm1517, %v5086, %v5346
        %v6078 = vsel %vm1517, %v5087, %v5348
        %v6079 = vsel %vm1517, %v5089, %v5350
        %v6080 = vsel %vm1517, %v5090, %v5352
        %v6081 = vsel %vm1517, %v5092, %v5354
        %v6082 = vsel %vm1517, %v5093, %v5356
        %v6083 = vsel %vm1517, %v5095, %v5358
        %v6084 = vsel %vm1517, %v5096, %v5360
        %v6085 = vsel %vm1517, %v5098, %v5362
        %v6086 = vsel %vm1517, %v5099, %v5364
        %v6087 = vsel %vm1517, %v5101, %v5366
        %v6088 = vsel %vm1517, %v5102, %v5368
        %v6089 = vsel %vm1517, %v5104, %v5370
        %v6090 = vsel %vm1517, %v5105, %v5372
        %v6091 = vsel %vm1517, %v5107, %v5374
        %v6092 = vsel %vm1517, %v5108, %v5376
        %v6093 = vsel %vm1517, %v5110, %v5378
        %v6094 = vsel %vm1517, %v5111, %v5380
        %v6095 = vsel %vm1517, %v5113, %v5382
        %v6096 = vsel %vm1517, %v5114, %v5384
        %v6097 = vsel %vm1517, %v5116, %v5386
        %v6098 = vsel %vm1517, %v5117, %v5388
        %v6099 = vsel %vm1517, %v5119, %v5390
        %v6100 = vsel %vm1517, %v5120, %v5392
        %v6101 = vsel %vm1549, %v6071, %v5424
        %v6102 = vsel %vm1549, %v6072, %v5426
        %v6103 = vsel %vm1549, %v6073, %v5428
        %v6104 = vsel %vm1549, %v6074, %v5430
        %v6105 = vsel %vm1549, %v6075, %v5432
        %v6106 = vsel %vm1549, %v6076, %v5434
        %v6107 = vsel %vm1549, %v6077, %v5436
        %v6108 = vsel %vm1549, %v6078, %v5438
        %v6109 = vsel %vm1549, %v6079, %v5440
        %v6110 = vsel %vm1549, %v6080, %v5442
        %v6111 = vsel %vm1549, %v6081, %v5444
        %v6112 = vsel %vm1549, %v6082, %v5446
        %v6113 = vsel %vm1549, %v6083, %v5448
        %v6114 = vsel %vm1549, %v6084, %v5450
        %v6115 = vsel %vm1549, %v6085, %v5452
        %v6116 = vsel %vm1549, %v6086, %v5454
        %v6117 = vsel %vm1549, %v6087, %v5456
        %v6118 = vsel %vm1549, %v6088, %v5458
        %v6119 = vsel %vm1549, %v6089, %v5460
        %v6120 = vsel %vm1549, %v6090, %v5462
        %v6121 = vsel %vm1549, %v6091, %v5464
        %v6122 = vsel %vm1549, %v6092, %v5466
        %v6123 = vsel %vm1549, %v6093, %v5468
        %v6124 = vsel %vm1549, %v6094, %v5470
        %v6125 = vsel %vm1549, %v6095, %v5472
        %v6126 = vsel %vm1549, %v6096, %v5474
        %v6127 = vsel %vm1549, %v6097, %v5476
        %v6128 = vsel %vm1549, %v6098, %v5478
        %v6129 = vsel %vm1549, %v6099, %v5480
        %v6130 = vsel %vm1549, %v6100, %v5482
        %v6131 = vsel %vm1581, %v1550, %v5514
        %v6132 = vsel %vm1581, %v1550, %v5516
        %v6133 = vsel %vm1581, %v6101, %v5518
        %v6134 = vsel %vm1581, %v6102, %v5520
        %v6135 = vsel %vm1581, %v6103, %v5522
        %v6136 = vsel %vm1581, %v6104, %v5524
        %v6137 = vsel %vm1581, %v6105, %v5526
        %v6138 = vsel %vm1581, %v6106, %v5528
        %v6139 = vsel %vm1581, %v6107, %v5530
        %v6140 = vsel %vm1581, %v6108, %v5532
        %v6141 = vsel %vm1581, %v6109, %v5534
        %v6142 = vsel %vm1581, %v6110, %v5536
        %v6143 = vsel %vm1581, %v6111, %v5538
        %v6144 = vsel %vm1581, %v6112, %v5540
        %v6145 = vsel %vm1581, %v6113, %v5542
        %v6146 = vsel %vm1581, %v6114, %v5544
        %v6147 = vsel %vm1581, %v6115, %v5546
        %v6148 = vsel %vm1581, %v6116, %v5548
        %v6149 = vsel %vm1581, %v6117, %v5550
        %v6150 = vsel %vm1581, %v6118, %v5552
        %v6151 = vsel %vm1581, %v6119, %v5554
        %v6152 = vsel %vm1581, %v6120, %v5556
        %v6153 = vsel %vm1581, %v6121, %v5558
        %v6154 = vsel %vm1581, %v6122, %v5560
        %v6155 = vsel %vm1581, %v6123, %v5562
        %v6156 = vsel %vm1581, %v6124, %v5564
        %v6157 = vsel %vm1581, %v6125, %v5566
        %v6158 = vsel %vm1581, %v6126, %v5568
        %v6159 = vsel %vm1581, %v6127, %v5570
        %v6160 = vsel %vm1581, %v6128, %v5572
        %v6161 = vsel %vm1581, %v6129, %v5574
        %v6162 = vsel %vm1581, %v6130, %v5576
        %v6163 = vsel %vm1614, %v6131, %v5610
        %v6164 = vsel %vm1614, %v6132, %v5612
        %v6165 = vsel %vm1614, %v6133, %v5614
        %v6166 = vsel %vm1614, %v6134, %v5616
        %v6167 = vsel %vm1614, %v6135, %v5618
        %v6168 = vsel %vm1614, %v6136, %v5620
        %v6169 = vsel %vm1614, %v6137, %v5622
        %v6170 = vsel %vm1614, %v6138, %v5624
        %v6171 = vsel %vm1614, %v6139, %v5626
        %v6172 = vsel %vm1614, %v6140, %v5628
        %v6173 = vsel %vm1614, %v6141, %v5630
        %v6174 = vsel %vm1614, %v6142, %v5632
        %v6175 = vsel %vm1614, %v6143, %v5634
        %v6176 = vsel %vm1614, %v6144, %v5636
        %v6177 = vsel %vm1614, %v6145, %v5638
        %v6178 = vsel %vm1614, %v6146, %v5640
        %v6179 = vsel %vm1614, %v6147, %v5642
        %v6180 = vsel %vm1614, %v6148, %v5644
        %v6181 = vsel %vm1614, %v6149, %v5646
        %v6182 = vsel %vm1614, %v6150, %v5648
        %v6183 = vsel %vm1614, %v6151, %v5650
        %v6184 = vsel %vm1614, %v6152, %v5652
        %v6185 = vsel %vm1614, %v6153, %v5654
        %v6186 = vsel %vm1614, %v6154, %v5656
        %v6187 = vsel %vm1614, %v6155, %v5658
        %v6188 = vsel %vm1614, %v6156, %v5660
        %v6189 = vsel %vm1614, %v6157, %v5662
        %v6190 = vsel %vm1614, %v6158, %v5664
        %v6191 = vsel %vm1614, %v6159, %v5666
        %v6192 = vsel %vm1614, %v6160, %v5668
        %v6193 = vsel %vm1614, %v6161, %v5670
        %v6194 = vsel %vm1614, %v6162, %v5672
        %v6195 = vsel %vm1647, %v6163, %v5706
        %v6196 = vsel %vm1647, %v6164, %v5708
        %v6197 = vsel %vm1647, %v6165, %v5710
        %v6198 = vsel %vm1647, %v6166, %v5712
        %v6199 = vsel %vm1647, %v6167, %v5714
        %v6200 = vsel %vm1647, %v6168, %v5716
        %v6201 = vsel %vm1647, %v6169, %v5718
        %v6202 = vsel %vm1647, %v6170, %v5720
        %v6203 = vsel %vm1647, %v6171, %v5722
        %v6204 = vsel %vm1647, %v6172, %v5724
        %v6205 = vsel %vm1647, %v6173, %v5726
        %v6206 = vsel %vm1647, %v6174, %v5728
        %v6207 = vsel %vm1647, %v6175, %v5730
        %v6208 = vsel %vm1647, %v6176, %v5732
        %v6209 = vsel %vm1647, %v6177, %v5734
        %v6210 = vsel %vm1647, %v6178, %v5736
        %v6211 = vsel %vm1647, %v6179, %v5738
        %v6212 = vsel %vm1647, %v6180, %v5740
        %v6213 = vsel %vm1647, %v6181, %v5742
        %v6214 = vsel %vm1647, %v6182, %v5744
        %v6215 = vsel %vm1647, %v6183, %v5746
        %v6216 = vsel %vm1647, %v6184, %v5748
        %v6217 = vsel %vm1647, %v6185, %v5750
        %v6218 = vsel %vm1647, %v6186, %v5752
        %v6219 = vsel %vm1647, %v6187, %v5754
        %v6220 = vsel %vm1647, %v6188, %v5756
        %v6221 = vsel %vm1647, %v6189, %v5758
        %v6222 = vsel %vm1647, %v6190, %v5760
        %v6223 = vsel %vm1647, %v6191, %v5762
        %v6224 = vsel %vm1647, %v6192, %v5764
        %v6225 = vsel %vm1647, %v6193, %v5766
        %v6226 = vsel %vm1647, %v6194, %v5768
        %v6227 = vsel %vm1680, %v6195, %v5802
        %v6228 = vsel %vm1680, %v6196, %v5804
        %v6229 = vsel %vm1680, %v6197, %v5806
        %v6230 = vsel %vm1680, %v6198, %v5808
        %v6231 = vsel %vm1680, %v6199, %v5810
        %v6232 = vsel %vm1680, %v6200, %v5812
        %v6233 = vsel %vm1680, %v6201, %v5814
        %v6234 = vsel %vm1680, %v6202, %v5816
        %v6235 = vsel %vm1680, %v6203, %v5818
        %v6236 = vsel %vm1680, %v6204, %v5820
        %v6237 = vsel %vm1680, %v6205, %v5822
        %v6238 = vsel %vm1680, %v6206, %v5824
        %v6239 = vsel %vm1680, %v6207, %v5826
        %v6240 = vsel %vm1680, %v6208, %v5828
        %v6241 = vsel %vm1680, %v6209, %v5830
        %v6242 = vsel %vm1680, %v6210, %v5832
        %v6243 = vsel %vm1680, %v6211, %v5834
        %v6244 = vsel %vm1680, %v6212, %v5836
        %v6245 = vsel %vm1680, %v6213, %v5838
        %v6246 = vsel %vm1680, %v6214, %v5840
        %v6247 = vsel %vm1680, %v6215, %v5842
        %v6248 = vsel %vm1680, %v6216, %v5844
        %v6249 = vsel %vm1680, %v6217, %v5846
        %v6250 = vsel %vm1680, %v6218, %v5848
        %v6251 = vsel %vm1680, %v6219, %v5850
        %v6252 = vsel %vm1680, %v6220, %v5852
        %v6253 = vsel %vm1680, %v6221, %v5854
        %v6254 = vsel %vm1680, %v6222, %v5856
        %v6255 = vsel %vm1680, %v6223, %v5858
        %v6256 = vsel %vm1680, %v6224, %v5860
        %v6257 = vsel %vm1680, %v6225, %v1299
        %v6258 = vsel %vm1680, %v6226, %v1299
        %v6259 = vsel %vm1713, %v6227, %v5892
        %v6260 = vsel %vm1713, %v6228, %v5894
        %v6261 = vsel %vm1713, %v6229, %v5896
        %v6262 = vsel %vm1713, %v6230, %v5898
        %v6263 = vsel %vm1713, %v6231, %v5900
        %v6264 = vsel %vm1713, %v6232, %v5902
        %v6265 = vsel %vm1713, %v6233, %v5904
        %v6266 = vsel %vm1713, %v6234, %v5906
        %v6267 = vsel %vm1713, %v6235, %v5908
        %v6268 = vsel %vm1713, %v6236, %v5910
        %v6269 = vsel %vm1713, %v6237, %v5912
        %v6270 = vsel %vm1713, %v6238, %v5914
        %v6271 = vsel %vm1713, %v6239, %v5916
        %v6272 = vsel %vm1713, %v6240, %v5918
        %v6273 = vsel %vm1713, %v6241, %v5920
        %v6274 = vsel %vm1713, %v6242, %v5922
        %v6275 = vsel %vm1713, %v6243, %v5924
        %v6276 = vsel %vm1713, %v6244, %v5926
        %v6277 = vsel %vm1713, %v6245, %v5928
        %v6278 = vsel %vm1713, %v6246, %v5930
        %v6279 = vsel %vm1713, %v6247, %v5932
        %v6280 = vsel %vm1713, %v6248, %v5934
        %v6281 = vsel %vm1713, %v6249, %v5936
        %v6282 = vsel %vm1713, %v6250, %v5938
        %v6283 = vsel %vm1713, %v6251, %v5940
        %v6284 = vsel %vm1713, %v6252, %v5942
        %v6285 = vsel %vm1713, %v6253, %v5944
        %v6286 = vsel %vm1713, %v6254, %v5946
        %v6287 = vsel %vm1713, %v6255, %v5948
        %v6288 = vsel %vm1713, %v6256, %v5950
        %v6289 = vsel %vm1713, %v6257, %v1392
        %v6290 = vsel %vm1713, %v6258, %v1392
        %v6291 = vsel %vm1746, %v6259, %v5982
        %v6292 = vsel %vm1746, %v6260, %v5984
        %v6293 = vsel %vm1746, %v6261, %v5986
        %v6294 = vsel %vm1746, %v6262, %v5988
        %v6295 = vsel %vm1746, %v6263, %v5990
        %v6296 = vsel %vm1746, %v6264, %v5992
        %v6297 = vsel %vm1746, %v6265, %v5994
        %v6298 = vsel %vm1746, %v6266, %v5996
        %v6299 = vsel %vm1746, %v6267, %v5998
        %v6300 = vsel %vm1746, %v6268, %v6000
        %v6301 = vsel %vm1746, %v6269, %v6002
        %v6302 = vsel %vm1746, %v6270, %v6004
        %v6303 = vsel %vm1746, %v6271, %v6006
        %v6304 = vsel %vm1746, %v6272, %v6008
        %v6305 = vsel %vm1746, %v6273, %v6010
        %v6306 = vsel %vm1746, %v6274, %v6012
        %v6307 = vsel %vm1746, %v6275, %v6014
        %v6308 = vsel %vm1746, %v6276, %v6016
        %v6309 = vsel %vm1746, %v6277, %v6018
        %v6310 = vsel %vm1746, %v6278, %v6020
        %v6311 = vsel %vm1746, %v6279, %v6022
        %v6312 = vsel %vm1746, %v6280, %v6024
        %v6313 = vsel %vm1746, %v6281, %v6026
        %v6314 = vsel %vm1746, %v6282, %v6028
        %v6315 = vsel %vm1746, %v6283, %v6030
        %v6316 = vsel %vm1746, %v6284, %v6032
        %v6317 = vsel %vm1746, %v6285, %v6034
        %v6318 = vsel %vm1746, %v6286, %v6036
        %v6319 = vsel %vm1746, %v6287, %v6038
        %v6320 = vsel %vm1746, %v6288, %v6040
        %v6321 = vsel %vm1746, %v6289, %v1485
        %v6322 = vsel %vm1746, %v6290, %v1485
        %v6323 = vpack.c.bf16 %v6292, %v6291
        %v6324 = vpack.c.bf16 %v6294, %v6293
        %v6325 = vpack.c.bf16 %v6296, %v6295
        %v6326 = vpack.c.bf16 %v6298, %v6297
        %v6327 = vpack.c.bf16 %v6300, %v6299
        %v6328 = vpack.c.bf16 %v6302, %v6301
        %v6329 = vpack.c.bf16 %v6304, %v6303
        %v6330 = vpack.c.bf16 %v6306, %v6305
        %v6331 = vpack.c.bf16 %v6308, %v6307
        %v6332 = vpack.c.bf16 %v6310, %v6309
        %v6333 = vpack.c.bf16 %v6312, %v6311
        %v6334 = vpack.c.bf16 %v6314, %v6313
        %v6335 = vpack.c.bf16 %v6316, %v6315
        %v6336 = vpack.c.bf16 %v6318, %v6317
        %v6337 = vpack.c.bf16 %v6320, %v6319
        %v6338 = vpack.c.bf16 %v6322, %v6321
        %v6371 = vrot.slane %v5045, 1
        %v6372 = vrot.slane %v4951, 1
        %v6373 = vsel %vm595, %v6371, %v6372
        %v6374 = vrot.slane %v5061, 1
        %v6375 = vsel %vm595, %v6372, %v6374
        %v6376 = vrot.slane %v5046, 1
        %v6377 = vrot.slane %v4954, 1
        %v6378 = vsel %vm595, %v6376, %v6377
        %v6379 = vrot.slane %v5062, 1
        %v6380 = vsel %vm595, %v6377, %v6379
        %v6381 = vrot.slane %v5047, 1
        %v6382 = vrot.slane %v4957, 1
        %v6383 = vsel %vm595, %v6381, %v6382
        %v6384 = vrot.slane %v5063, 1
        %v6385 = vsel %vm595, %v6382, %v6384
        %v6386 = vrot.slane %v5048, 1
        %v6387 = vrot.slane %v4960, 1
        %v6388 = vsel %vm595, %v6386, %v6387
        %v6389 = vrot.slane %v5064, 1
        %v6390 = vsel %vm595, %v6387, %v6389
        %v6391 = vrot.slane %v5049, 1
        %v6392 = vrot.slane %v4963, 1
        %v6393 = vsel %vm595, %v6391, %v6392
        %v6394 = vrot.slane %v5065, 1
        %v6395 = vsel %vm595, %v6392, %v6394
        %v6396 = vrot.slane %v5050, 1
        %v6397 = vrot.slane %v4966, 1
        %v6398 = vsel %vm595, %v6396, %v6397
        %v6399 = vrot.slane %v5066, 1
        %v6400 = vsel %vm595, %v6397, %v6399
        %v6401 = vrot.slane %v5051, 1
        %v6402 = vrot.slane %v4969, 1
        %v6403 = vsel %vm595, %v6401, %v6402
        %v6404 = vrot.slane %v5067, 1
        %v6405 = vsel %vm595, %v6402, %v6404
        %v6406 = vrot.slane %v5052, 1
        %v6407 = vrot.slane %v4972, 1
        %v6408 = vsel %vm595, %v6406, %v6407
        %v6409 = vrot.slane %v5068, 1
        %v6410 = vsel %vm595, %v6407, %v6409
        %v6411 = vrot.slane %v5053, 1
        %v6412 = vrot.slane %v4975, 1
        %v6413 = vsel %vm595, %v6411, %v6412
        %v6414 = vrot.slane %v5069, 1
        %v6415 = vsel %vm595, %v6412, %v6414
        %v6416 = vrot.slane %v5054, 1
        %v6417 = vrot.slane %v4978, 1
        %v6418 = vsel %vm595, %v6416, %v6417
        %v6419 = vrot.slane %v5070, 1
        %v6420 = vsel %vm595, %v6417, %v6419
        %v6421 = vrot.slane %v5055, 1
        %v6422 = vrot.slane %v4981, 1
        %v6423 = vsel %vm595, %v6421, %v6422
        %v6424 = vrot.slane %v5071, 1
        %v6425 = vsel %vm595, %v6422, %v6424
        %v6426 = vrot.slane %v5056, 1
        %v6427 = vrot.slane %v4984, 1
        %v6428 = vsel %vm595, %v6426, %v6427
        %v6429 = vrot.slane %v5072, 1
        %v6430 = vsel %vm595, %v6427, %v6429
        %v6431 = vrot.slane %v5057, 1
        %v6432 = vrot.slane %v4987, 1
        %v6433 = vsel %vm595, %v6431, %v6432
        %v6434 = vrot.slane %v5073, 1
        %v6435 = vsel %vm595, %v6432, %v6434
        %v6436 = vrot.slane %v5058, 1
        %v6437 = vrot.slane %v4990, 1
        %v6438 = vsel %vm595, %v6436, %v6437
        %v6439 = vrot.slane %v5074, 1
        %v6440 = vsel %vm595, %v6437, %v6439
        %v6441 = vrot.slane %v5059, 1
        %v6442 = vrot.slane %v4993, 1
        %v6443 = vsel %vm595, %v6441, %v6442
        %v6444 = vrot.slane %v5075, 1
        %v6445 = vsel %vm595, %v6442, %v6444
        %v6446 = vrot.slane %v5060, 1
        %v6447 = vrot.slane %v4996, 1
        %v6448 = vsel %vm595, %v6446, %v6447
        %v6449 = vrot.slane %v5076, 1
        %v6450 = vsel %vm595, %v6447, %v6449
        %v6483 = vadd.f32 %v5045, %v6373
        %v6484 = vadd.f32 %v4951, %v6375
        %v6485 = vadd.f32 %v5046, %v6378
        %v6486 = vadd.f32 %v4954, %v6380
        %v6487 = vadd.f32 %v5047, %v6383
        %v6488 = vadd.f32 %v4957, %v6385
        %v6489 = vadd.f32 %v5048, %v6388
        %v6490 = vadd.f32 %v4960, %v6390
        %v6491 = vadd.f32 %v5049, %v6393
        %v6492 = vadd.f32 %v4963, %v6395
        %v6493 = vadd.f32 %v5050, %v6398
        %v6494 = vadd.f32 %v4966, %v6400
        %v6495 = vadd.f32 %v5051, %v6403
        %v6496 = vadd.f32 %v4969, %v6405
        %v6497 = vadd.f32 %v5052, %v6408
        %v6498 = vadd.f32 %v4972, %v6410
        %v6499 = vadd.f32 %v5053, %v6413
        %v6500 = vadd.f32 %v4975, %v6415
        %v6501 = vadd.f32 %v5054, %v6418
        %v6502 = vadd.f32 %v4978, %v6420
        %v6503 = vadd.f32 %v5055, %v6423
        %v6504 = vadd.f32 %v4981, %v6425
        %v6505 = vadd.f32 %v5056, %v6428
        %v6506 = vadd.f32 %v4984, %v6430
        %v6507 = vadd.f32 %v5057, %v6433
        %v6508 = vadd.f32 %v4987, %v6435
        %v6509 = vadd.f32 %v5058, %v6438
        %v6510 = vadd.f32 %v4990, %v6440
        %v6511 = vadd.f32 %v5059, %v6443
        %v6512 = vadd.f32 %v4993, %v6445
        %v6513 = vadd.f32 %v5060, %v6448
        %v6514 = vadd.f32 %v4996, %v6450
        %v6515 = vrot.slane %v5045, 2
        %v6516 = vrot.slane %v4951, 2
        %v6517 = vsel %vm673, %v6515, %v6516
        %v6518 = vrot.slane %v5061, 2
        %v6519 = vsel %vm673, %v6516, %v6518
        %v6520 = vrot.slane %v5046, 2
        %v6521 = vrot.slane %v4954, 2
        %v6522 = vsel %vm673, %v6520, %v6521
        %v6523 = vrot.slane %v5062, 2
        %v6524 = vsel %vm673, %v6521, %v6523
        %v6525 = vrot.slane %v5047, 2
        %v6526 = vrot.slane %v4957, 2
        %v6527 = vsel %vm673, %v6525, %v6526
        %v6528 = vrot.slane %v5063, 2
        %v6529 = vsel %vm673, %v6526, %v6528
        %v6530 = vrot.slane %v5048, 2
        %v6531 = vrot.slane %v4960, 2
        %v6532 = vsel %vm673, %v6530, %v6531
        %v6533 = vrot.slane %v5064, 2
        %v6534 = vsel %vm673, %v6531, %v6533
        %v6535 = vrot.slane %v5049, 2
        %v6536 = vrot.slane %v4963, 2
        %v6537 = vsel %vm673, %v6535, %v6536
        %v6538 = vrot.slane %v5065, 2
        %v6539 = vsel %vm673, %v6536, %v6538
        %v6540 = vrot.slane %v5050, 2
        %v6541 = vrot.slane %v4966, 2
        %v6542 = vsel %vm673, %v6540, %v6541
        %v6543 = vrot.slane %v5066, 2
        %v6544 = vsel %vm673, %v6541, %v6543
        %v6545 = vrot.slane %v5051, 2
        %v6546 = vrot.slane %v4969, 2
        %v6547 = vsel %vm673, %v6545, %v6546
        %v6548 = vrot.slane %v5067, 2
        %v6549 = vsel %vm673, %v6546, %v6548
        %v6550 = vrot.slane %v5052, 2
        %v6551 = vrot.slane %v4972, 2
        %v6552 = vsel %vm673, %v6550, %v6551
        %v6553 = vrot.slane %v5068, 2
        %v6554 = vsel %vm673, %v6551, %v6553
        %v6555 = vrot.slane %v5053, 2
        %v6556 = vrot.slane %v4975, 2
        %v6557 = vsel %vm673, %v6555, %v6556
        %v6558 = vrot.slane %v5069, 2
        %v6559 = vsel %vm673, %v6556, %v6558
        %v6560 = vrot.slane %v5054, 2
        %v6561 = vrot.slane %v4978, 2
        %v6562 = vsel %vm673, %v6560, %v6561
        %v6563 = vrot.slane %v5070, 2
        %v6564 = vsel %vm673, %v6561, %v6563
        %v6565 = vrot.slane %v5055, 2
        %v6566 = vrot.slane %v4981, 2
        %v6567 = vsel %vm673, %v6565, %v6566
        %v6568 = vrot.slane %v5071, 2
        %v6569 = vsel %vm673, %v6566, %v6568
        %v6570 = vrot.slane %v5056, 2
        %v6571 = vrot.slane %v4984, 2
        %v6572 = vsel %vm673, %v6570, %v6571
        %v6573 = vrot.slane %v5072, 2
        %v6574 = vsel %vm673, %v6571, %v6573
        %v6575 = vrot.slane %v5057, 2
        %v6576 = vrot.slane %v4987, 2
        %v6577 = vsel %vm673, %v6575, %v6576
        %v6578 = vrot.slane %v5073, 2
        %v6579 = vsel %vm673, %v6576, %v6578
        %v6580 = vrot.slane %v5058, 2
        %v6581 = vrot.slane %v4990, 2
        %v6582 = vsel %vm673, %v6580, %v6581
        %v6583 = vrot.slane %v5074, 2
        %v6584 = vsel %vm673, %v6581, %v6583
        %v6585 = vrot.slane %v5059, 2
        %v6586 = vrot.slane %v4993, 2
        %v6587 = vsel %vm673, %v6585, %v6586
        %v6588 = vrot.slane %v5075, 2
        %v6589 = vsel %vm673, %v6586, %v6588
        %v6590 = vrot.slane %v5060, 2
        %v6591 = vrot.slane %v4996, 2
        %v6592 = vsel %vm673, %v6590, %v6591
        %v6593 = vrot.slane %v5076, 2
        %v6594 = vsel %vm673, %v6591, %v6593
        %v6627 = vadd.f32 %v6483, %v6517
        %v6628 = vadd.f32 %v6484, %v6519
        %v6629 = vadd.f32 %v6485, %v6522
        %v6630 = vadd.f32 %v6486, %v6524
        %v6631 = vadd.f32 %v6487, %v6527
        %v6632 = vadd.f32 %v6488, %v6529
        %v6633 = vadd.f32 %v6489, %v6532
        %v6634 = vadd.f32 %v6490, %v6534
        %v6635 = vadd.f32 %v6491, %v6537
        %v6636 = vadd.f32 %v6492, %v6539
        %v6637 = vadd.f32 %v6493, %v6542
        %v6638 = vadd.f32 %v6494, %v6544
        %v6639 = vadd.f32 %v6495, %v6547
        %v6640 = vadd.f32 %v6496, %v6549
        %v6641 = vadd.f32 %v6497, %v6552
        %v6642 = vadd.f32 %v6498, %v6554
        %v6643 = vadd.f32 %v6499, %v6557
        %v6644 = vadd.f32 %v6500, %v6559
        %v6645 = vadd.f32 %v6501, %v6562
        %v6646 = vadd.f32 %v6502, %v6564
        %v6647 = vadd.f32 %v6503, %v6567
        %v6648 = vadd.f32 %v6504, %v6569
        %v6649 = vadd.f32 %v6505, %v6572
        %v6650 = vadd.f32 %v6506, %v6574
        %v6651 = vadd.f32 %v6507, %v6577
        %v6652 = vadd.f32 %v6508, %v6579
        %v6653 = vadd.f32 %v6509, %v6582
        %v6654 = vadd.f32 %v6510, %v6584
        %v6655 = vadd.f32 %v6511, %v6587
        %v6656 = vadd.f32 %v6512, %v6589
        %v6657 = vadd.f32 %v6513, %v6592
        %v6658 = vadd.f32 %v6514, %v6594
        %v6659 = vadd.f32 %v2086, %v6627
        %v6660 = vadd.f32 %v2086, %v6628
        %v6661 = vadd.f32 %v6627, %v6629
        %v6662 = vadd.f32 %v6628, %v6630
        %v6663 = vadd.f32 %v6629, %v6631
        %v6664 = vadd.f32 %v6630, %v6632
        %v6665 = vadd.f32 %v6631, %v6633
        %v6666 = vadd.f32 %v6632, %v6634
        %v6667 = vadd.f32 %v6633, %v6635
        %v6668 = vadd.f32 %v6634, %v6636
        %v6669 = vadd.f32 %v6635, %v6637
        %v6670 = vadd.f32 %v6636, %v6638
        %v6671 = vadd.f32 %v6637, %v6639
        %v6672 = vadd.f32 %v6638, %v6640
        %v6673 = vadd.f32 %v6639, %v6641
        %v6674 = vadd.f32 %v6640, %v6642
        %v6675 = vadd.f32 %v6641, %v6643
        %v6676 = vadd.f32 %v6642, %v6644
        %v6677 = vadd.f32 %v6643, %v6645
        %v6678 = vadd.f32 %v6644, %v6646
        %v6679 = vadd.f32 %v6645, %v6647
        %v6680 = vadd.f32 %v6646, %v6648
        %v6681 = vadd.f32 %v6647, %v6649
        %v6682 = vadd.f32 %v6648, %v6650
        %v6683 = vadd.f32 %v6649, %v6651
        %v6684 = vadd.f32 %v6650, %v6652
        %v6685 = vadd.f32 %v6651, %v6653
        %v6686 = vadd.f32 %v6652, %v6654
        %v6687 = vadd.f32 %v6653, %v6655
        %v6688 = vadd.f32 %v6654, %v6656
        %v6689 = vadd.f32 %v6655, %v6657
        %v6690 = vadd.f32 %v6656, %v6658
        %v6691 = vadd.f32 %v6659, %v6629
        %v6692 = vadd.f32 %v6660, %v6630
        %v6693 = vadd.f32 %v6661, %v6631
        %v6694 = vadd.f32 %v6662, %v6632
        %v6695 = vadd.f32 %v6663, %v6633
        %v6696 = vadd.f32 %v6664, %v6634
        %v6697 = vadd.f32 %v6665, %v6635
        %v6698 = vadd.f32 %v6666, %v6636
        %v6699 = vadd.f32 %v6667, %v6637
        %v6700 = vadd.f32 %v6668, %v6638
        %v6701 = vadd.f32 %v6669, %v6639
        %v6702 = vadd.f32 %v6670, %v6640
        %v6703 = vadd.f32 %v6671, %v6641
        %v6704 = vadd.f32 %v6672, %v6642
        %v6705 = vadd.f32 %v6673, %v6643
        %v6706 = vadd.f32 %v6674, %v6644
        %v6707 = vadd.f32 %v6675, %v6645
        %v6708 = vadd.f32 %v6676, %v6646
        %v6709 = vadd.f32 %v6677, %v6647
        %v6710 = vadd.f32 %v6678, %v6648
        %v6711 = vadd.f32 %v6679, %v6649
        %v6712 = vadd.f32 %v6680, %v6650
        %v6713 = vadd.f32 %v6681, %v6651
        %v6714 = vadd.f32 %v6682, %v6652
        %v6715 = vadd.f32 %v6683, %v6653
        %v6716 = vadd.f32 %v6684, %v6654
        %v6717 = vadd.f32 %v6685, %v6655
        %v6718 = vadd.f32 %v6686, %v6656
        %v6719 = vadd.f32 %v6687, %v6657
        %v6720 = vadd.f32 %v6688, %v6658
        %v6721 = vadd.f32 %v6689, %v2086
        %v6722 = vadd.f32 %v6690, %v2086
        %v6723 = vmul.f32 %v6691, %v232
        %v6724 = vmul.f32 %v6692, %v247
        %v6725 = vmul.f32 %v6693, %v262
        %v6726 = vmul.f32 %v6694, %v277
        %v6727 = vmul.f32 %v6695, %v262
        %v6728 = vmul.f32 %v6696, %v277
        %v6729 = vmul.f32 %v6697, %v262
        %v6730 = vmul.f32 %v6698, %v277
        %v6731 = vmul.f32 %v6699, %v262
        %v6732 = vmul.f32 %v6700, %v277
        %v6733 = vmul.f32 %v6701, %v262
        %v6734 = vmul.f32 %v6702, %v277
        %v6735 = vmul.f32 %v6703, %v262
        %v6736 = vmul.f32 %v6704, %v277
        %v6737 = vmul.f32 %v6705, %v262
        %v6738 = vmul.f32 %v6706, %v277
        %v6739 = vmul.f32 %v6707, %v262
        %v6740 = vmul.f32 %v6708, %v277
        %v6741 = vmul.f32 %v6709, %v262
        %v6742 = vmul.f32 %v6710, %v277
        %v6743 = vmul.f32 %v6711, %v262
        %v6744 = vmul.f32 %v6712, %v277
        %v6745 = vmul.f32 %v6713, %v262
        %v6746 = vmul.f32 %v6714, %v277
        %v6747 = vmul.f32 %v6715, %v262
        %v6748 = vmul.f32 %v6716, %v277
        %v6749 = vmul.f32 %v6717, %v262
        %v6750 = vmul.f32 %v6718, %v277
        %v6751 = vmul.f32 %v6719, %v262
        %v6752 = vmul.f32 %v6720, %v277
        %v6753 = vmul.f32 %v6721, %v292
        %v6754 = vmul.f32 %v6722, %v307
        %s6755 = scalar_lea.vmem %s2, 60
        %v6756 = vld [vmem:[%s6755] sm:$0xf]
        %v6757 = vld [vmem:[%s6755 + $0x4] sm:$0xf]
        %v6758 = vld [vmem:[%s6755 + $0x8] sm:$0xf]
        %v6759 = vld [vmem:[%s6755 + $0xc] sm:$0xf]
        %v6760 = vld [vmem:[%s6755 + $0x10] sm:$0x3]
        %v6766 = vunpack.c.l.b16 %v6756
        %v6767 = vunpack.c.l.b16 %v6757
        %v6768 = vunpack.c.l.b16 %v6758
        %v6769 = vunpack.c.l.b16 %v6759
        %v6770 = vunpack.c.l.b16 %v6760
        %v6771 = vpack.c.b16 %v6767, %v6766
        %v6772 = vpack.c.b16 %v6769, %v6768
        %v6773 = vpack.c.b16 %v6770, %v6770
        %v6777 = vsel %vm2284, %v6773, 0
        %6779 = vmatpush.bf16.msra.mxu0 0
        %6780 = vmatpush.bf16.msra.mxu0 0
        %6781 = vmatpush.bf16.msra.mxu0 0
        %6782 = vmatpush.bf16.msra.mxu0 0
        %6783 = vmatpush.bf16.msra.mxu0 0
        %6784 = vmatpush.bf16.msra.mxu0 %v6777
        %6785 = vmatpush.bf16.msra.mxu0 %v6772
        %6786 = vmatpush.bf16.msra.mxu0 %v6771
        %6787 = vmatmul.bf16.gmra.mxu0 %v2237
        %v6788 = vpop.f32.mrf.mxu0
        %v6789 = vadd.f32 0.0, %v6788
        %v6790 = vpop.f32.mrf.mxu0
        %v6791 = vadd.f32 0.0, %v6790
        %6792 = vmatmul.bf16.gmra.mxu0 %v2240
        %v6793 = vpop.f32.mrf.mxu0
        %v6794 = vadd.f32 0.0, %v6793
        %v6795 = vpop.f32.mrf.mxu0
        %v6796 = vadd.f32 0.0, %v6795
        %6797 = vmatmul.bf16.gmra.mxu0 %v2243
        %v6798 = vpop.f32.mrf.mxu0
        %v6799 = vadd.f32 0.0, %v6798
        %v6800 = vpop.f32.mrf.mxu0
        %v6801 = vadd.f32 0.0, %v6800
        %6802 = vmatmul.bf16.gmra.mxu0 %v2246
        %v6803 = vpop.f32.mrf.mxu0
        %v6804 = vadd.f32 0.0, %v6803
        %v6805 = vpop.f32.mrf.mxu0
        %v6806 = vadd.f32 0.0, %v6805
        %6807 = vmatmul.bf16.gmra.mxu0 %v2249
        %v6808 = vpop.f32.mrf.mxu0
        %v6809 = vadd.f32 0.0, %v6808
        %v6810 = vpop.f32.mrf.mxu0
        %v6811 = vadd.f32 0.0, %v6810
        %6812 = vmatmul.bf16.gmra.mxu0 %v2252
        %v6813 = vpop.f32.mrf.mxu0
        %v6814 = vadd.f32 0.0, %v6813
        %v6815 = vpop.f32.mrf.mxu0
        %v6816 = vadd.f32 0.0, %v6815
        %6817 = vmatmul.bf16.gmra.mxu0 %v2255
        %v6818 = vpop.f32.mrf.mxu0
        %v6819 = vadd.f32 0.0, %v6818
        %v6820 = vpop.f32.mrf.mxu0
        %v6821 = vadd.f32 0.0, %v6820
        %6822 = vmatmul.bf16.gmra.mxu0 %v2258
        %v6823 = vpop.f32.mrf.mxu0
        %v6824 = vadd.f32 0.0, %v6823
        %v6825 = vpop.f32.mrf.mxu0
        %v6826 = vadd.f32 0.0, %v6825
        %6827 = vmatmul.bf16.gmra.mxu0 %v2261
        %v6828 = vpop.f32.mrf.mxu0
        %v6829 = vadd.f32 0.0, %v6828
        %v6830 = vpop.f32.mrf.mxu0
        %v6831 = vadd.f32 0.0, %v6830
        %6832 = vmatmul.bf16.gmra.mxu0 %v2264
        %v6833 = vpop.f32.mrf.mxu0
        %v6834 = vadd.f32 0.0, %v6833
        %v6835 = vpop.f32.mrf.mxu0
        %v6836 = vadd.f32 0.0, %v6835
        %6837 = vmatmul.bf16.gmra.mxu0 %v2267
        %v6838 = vpop.f32.mrf.mxu0
        %v6839 = vadd.f32 0.0, %v6838
        %v6840 = vpop.f32.mrf.mxu0
        %v6841 = vadd.f32 0.0, %v6840
        %6842 = vmatmul.bf16.gmra.mxu0 %v2270
        %v6843 = vpop.f32.mrf.mxu0
        %v6844 = vadd.f32 0.0, %v6843
        %v6845 = vpop.f32.mrf.mxu0
        %v6846 = vadd.f32 0.0, %v6845
        %6847 = vmatmul.bf16.gmra.mxu0 %v2273
        %v6848 = vpop.f32.mrf.mxu0
        %v6849 = vadd.f32 0.0, %v6848
        %v6850 = vpop.f32.mrf.mxu0
        %v6851 = vadd.f32 0.0, %v6850
        %6852 = vmatmul.bf16.gmra.mxu0 %v2276
        %v6853 = vpop.f32.mrf.mxu0
        %v6854 = vadd.f32 0.0, %v6853
        %v6855 = vpop.f32.mrf.mxu0
        %v6856 = vadd.f32 0.0, %v6855
        %6857 = vmatmul.bf16.gmra.mxu0 %v2279
        %v6858 = vpop.f32.mrf.mxu0
        %v6859 = vadd.f32 0.0, %v6858
        %v6860 = vpop.f32.mrf.mxu0
        %v6861 = vadd.f32 0.0, %v6860
        %6862 = vmatmul.bf16.gmra.mxu0 %v2282
        %v6863 = vpop.f32.mrf.mxu0
        %v6864 = vadd.f32 0.0, %v6863
        %v6865 = vpop.f32.mrf.mxu0
        %v6866 = vadd.f32 0.0, %v6865
        %6867 = vdwg.mxu0
        %s6868 = sld [smem:[#allocation2 + $0x6]]
        %v6869 = vstv %s6868
        %v6870 = vmul.f32 %v6869, %v308
        %v6871 = vmul.f32 %v6869, %v309
        %v6872 = vmul.f32 %v6869, %v310
        %v6873 = vmul.f32 %v6869, %v311
        %v6874 = vmul.f32 %v6869, %v312
        %v6875 = vmul.f32 %v6869, %v313
        %v6876 = vmul.f32 %v6869, %v314
        %v6877 = vmul.f32 %v6869, %v315
        %v6878 = vmul.f32 %v6869, %v316
        %v6879 = vmul.f32 %v6869, %v317
        %v6880 = vmul.f32 %v6869, %v318
        %v6881 = vmul.f32 %v6869, %v319
        %v6882 = vmul.f32 %v6869, %v320
        %v6883 = vmul.f32 %v6869, %v321
        %v6884 = vmul.f32 %v6869, %v322
        %v6885 = vmul.f32 %v6869, %v323
        %v6886 = vmul.f32 %v6869, %v324
        %v6887 = vmul.f32 %v6869, %v325
        %v6888 = vmul.f32 %v6869, %v326
        %v6889 = vmul.f32 %v6869, %v327
        %v6890 = vmul.f32 %v6869, %v328
        %v6891 = vmul.f32 %v6869, %v329
        %v6892 = vmul.f32 %v6869, %v330
        %v6893 = vmul.f32 %v6869, %v331
        %v6894 = vmul.f32 %v6869, %v332
        %v6895 = vmul.f32 %v6869, %v333
        %v6896 = vmul.f32 %v6869, %v334
        %v6897 = vmul.f32 %v6869, %v335
        %v6898 = vmul.f32 %v6869, %v336
        %v6899 = vmul.f32 %v6869, %v337
        %v6900 = vmul.f32 %v6869, %v338
        %v6901 = vmul.f32 %v6869, %v339
        %v6902 = vadd.f32 %v6789, %v6870
        %v6903 = vadd.f32 %v6791, %v6871
        %v6904 = vadd.f32 %v6794, %v6872
        %v6905 = vadd.f32 %v6796, %v6873
        %v6906 = vadd.f32 %v6799, %v6874
        %v6907 = vadd.f32 %v6801, %v6875
        %v6908 = vadd.f32 %v6804, %v6876
        %v6909 = vadd.f32 %v6806, %v6877
        %v6910 = vadd.f32 %v6809, %v6878
        %v6911 = vadd.f32 %v6811, %v6879
        %v6912 = vadd.f32 %v6814, %v6880
        %v6913 = vadd.f32 %v6816, %v6881
        %v6914 = vadd.f32 %v6819, %v6882
        %v6915 = vadd.f32 %v6821, %v6883
        %v6916 = vadd.f32 %v6824, %v6884
        %v6917 = vadd.f32 %v6826, %v6885
        %v6918 = vadd.f32 %v6829, %v6886
        %v6919 = vadd.f32 %v6831, %v6887
        %v6920 = vadd.f32 %v6834, %v6888
        %v6921 = vadd.f32 %v6836, %v6889
        %v6922 = vadd.f32 %v6839, %v6890
        %v6923 = vadd.f32 %v6841, %v6891
        %v6924 = vadd.f32 %v6844, %v6892
        %v6925 = vadd.f32 %v6846, %v6893
        %v6926 = vadd.f32 %v6849, %v6894
        %v6927 = vadd.f32 %v6851, %v6895
        %v6928 = vadd.f32 %v6854, %v6896
        %v6929 = vadd.f32 %v6856, %v6897
        %v6930 = vadd.f32 %v6859, %v6898
        %v6931 = vadd.f32 %v6861, %v6899
        %v6932 = vadd.f32 %v6864, %v6900
        %v6933 = vadd.f32 %v6866, %v6901
        %s6934 = sld [smem:[#allocation2 + $0x7]]
        %v6935 = vstv %s6934
        %v6936 = vmul.f32 %v6935, %v2183
        %v6937 = vmul.f32 %v6935, %v2184
        %v6938 = vmul.f32 %v6935, %v2185
        %v6939 = vmul.f32 %v6935, %v2186
        %v6940 = vmul.f32 %v6935, %v2187
        %v6941 = vmul.f32 %v6935, %v2188
        %v6942 = vmul.f32 %v6935, %v2189
        %v6943 = vmul.f32 %v6935, %v2190
        %v6944 = vmul.f32 %v6935, %v2191
        %v6945 = vmul.f32 %v6935, %v2192
        %v6946 = vmul.f32 %v6935, %v2193
        %v6947 = vmul.f32 %v6935, %v2194
        %v6948 = vmul.f32 %v6935, %v2195
        %v6949 = vmul.f32 %v6935, %v2196
        %v6950 = vmul.f32 %v6935, %v2197
        %v6951 = vmul.f32 %v6935, %v2198
        %v6952 = vmul.f32 %v6935, %v2199
        %v6953 = vmul.f32 %v6935, %v2200
        %v6954 = vmul.f32 %v6935, %v2201
        %v6955 = vmul.f32 %v6935, %v2202
        %v6956 = vmul.f32 %v6935, %v2203
        %v6957 = vmul.f32 %v6935, %v2204
        %v6958 = vmul.f32 %v6935, %v2205
        %v6959 = vmul.f32 %v6935, %v2206
        %v6960 = vmul.f32 %v6935, %v2207
        %v6961 = vmul.f32 %v6935, %v2208
        %v6962 = vmul.f32 %v6935, %v2209
        %v6963 = vmul.f32 %v6935, %v2210
        %v6964 = vmul.f32 %v6935, %v2211
        %v6965 = vmul.f32 %v6935, %v2212
        %v6966 = vmul.f32 %v6935, %v2213
        %v6967 = vmul.f32 %v6935, %v2214
        %v6968 = vadd.f32 %v6902, %v6936
        %v6969 = vadd.f32 %v6903, %v6937
        %v6970 = vadd.f32 %v6904, %v6938
        %v6971 = vadd.f32 %v6905, %v6939
        %v6972 = vadd.f32 %v6906, %v6940
        %v6973 = vadd.f32 %v6907, %v6941
        %v6974 = vadd.f32 %v6908, %v6942
        %v6975 = vadd.f32 %v6909, %v6943
        %v6976 = vadd.f32 %v6910, %v6944
        %v6977 = vadd.f32 %v6911, %v6945
        %v6978 = vadd.f32 %v6912, %v6946
        %v6979 = vadd.f32 %v6913, %v6947
        %v6980 = vadd.f32 %v6914, %v6948
        %v6981 = vadd.f32 %v6915, %v6949
        %v6982 = vadd.f32 %v6916, %v6950
        %v6983 = vadd.f32 %v6917, %v6951
        %v6984 = vadd.f32 %v6918, %v6952
        %v6985 = vadd.f32 %v6919, %v6953
        %v6986 = vadd.f32 %v6920, %v6954
        %v6987 = vadd.f32 %v6921, %v6955
        %v6988 = vadd.f32 %v6922, %v6956
        %v6989 = vadd.f32 %v6923, %v6957
        %v6990 = vadd.f32 %v6924, %v6958
        %v6991 = vadd.f32 %v6925, %v6959
        %v6992 = vadd.f32 %v6926, %v6960
        %v6993 = vadd.f32 %v6927, %v6961
        %v6994 = vadd.f32 %v6928, %v6962
        %v6995 = vadd.f32 %v6929, %v6963
        %v6996 = vadd.f32 %v6930, %v6964
        %v6997 = vadd.f32 %v6931, %v6965
        %v6998 = vadd.f32 %v6932, %v6966
        %v6999 = vadd.f32 %v6933, %v6967
        %s7000 = scalar_lea.vmem %s2, 80
        %v7001 = vld [vmem:[%s7000] sm:$0xf]
        %v7002 = vld [vmem:[%s7000 + $0x4] sm:$0xf]
        %v7003 = vld [vmem:[%s7000 + $0x8] sm:$0xf]
        %v7004 = vld [vmem:[%s7000 + $0xc] sm:$0xf]
        %v7005 = vld [vmem:[%s7000 + $0x10] sm:$0x3]
        %v7011 = vunpack.c.l.b16 %v7001
        %v7012 = vunpack.c.l.b16 %v7002
        %v7013 = vunpack.c.l.b16 %v7003
        %v7014 = vunpack.c.l.b16 %v7004
        %v7015 = vunpack.c.l.b16 %v7005
        %v7016 = vpack.c.b16 %v7012, %v7011
        %v7017 = vpack.c.b16 %v7014, %v7013
        %v7018 = vpack.c.b16 %v7015, %v7015
        %v7022 = vsel %vm2284, %v7018, 0
        %7024 = vmatpush.bf16.msra.mxu0 0
        %7025 = vmatpush.bf16.msra.mxu0 0
        %7026 = vmatpush.bf16.msra.mxu0 0
        %7027 = vmatpush.bf16.msra.mxu0 0
        %7028 = vmatpush.bf16.msra.mxu0 0
        %7029 = vmatpush.bf16.msra.mxu0 %v7022
        %7030 = vmatpush.bf16.msra.mxu0 %v7017
        %7031 = vmatpush.bf16.msra.mxu0 %v7016
        %7032 = vmatmul.bf16.gmra.mxu0 %v4614
        %v7033 = vpop.f32.mrf.mxu0
        %v7034 = vadd.f32 0.0, %v7033
        %v7035 = vpop.f32.mrf.mxu0
        %v7036 = vadd.f32 0.0, %v7035
        %7037 = vmatmul.bf16.gmra.mxu0 %v4617
        %v7038 = vpop.f32.mrf.mxu0
        %v7039 = vadd.f32 0.0, %v7038
        %v7040 = vpop.f32.mrf.mxu0
        %v7041 = vadd.f32 0.0, %v7040
        %7042 = vmatmul.bf16.gmra.mxu0 %v4620
        %v7043 = vpop.f32.mrf.mxu0
        %v7044 = vadd.f32 0.0, %v7043
        %v7045 = vpop.f32.mrf.mxu0
        %v7046 = vadd.f32 0.0, %v7045
        %7047 = vmatmul.bf16.gmra.mxu0 %v4623
        %v7048 = vpop.f32.mrf.mxu0
        %v7049 = vadd.f32 0.0, %v7048
        %v7050 = vpop.f32.mrf.mxu0
        %v7051 = vadd.f32 0.0, %v7050
        %7052 = vmatmul.bf16.gmra.mxu0 %v4626
        %v7053 = vpop.f32.mrf.mxu0
        %v7054 = vadd.f32 0.0, %v7053
        %v7055 = vpop.f32.mrf.mxu0
        %v7056 = vadd.f32 0.0, %v7055
        %7057 = vmatmul.bf16.gmra.mxu0 %v4629
        %v7058 = vpop.f32.mrf.mxu0
        %v7059 = vadd.f32 0.0, %v7058
        %v7060 = vpop.f32.mrf.mxu0
        %v7061 = vadd.f32 0.0, %v7060
        %7062 = vmatmul.bf16.gmra.mxu0 %v4632
        %v7063 = vpop.f32.mrf.mxu0
        %v7064 = vadd.f32 0.0, %v7063
        %v7065 = vpop.f32.mrf.mxu0
        %v7066 = vadd.f32 0.0, %v7065
        %7067 = vmatmul.bf16.gmra.mxu0 %v4635
        %v7068 = vpop.f32.mrf.mxu0
        %v7069 = vadd.f32 0.0, %v7068
        %v7070 = vpop.f32.mrf.mxu0
        %v7071 = vadd.f32 0.0, %v7070
        %7072 = vmatmul.bf16.gmra.mxu0 %v4638
        %v7073 = vpop.f32.mrf.mxu0
        %v7074 = vadd.f32 0.0, %v7073
        %v7075 = vpop.f32.mrf.mxu0
        %v7076 = vadd.f32 0.0, %v7075
        %7077 = vmatmul.bf16.gmra.mxu0 %v4641
        %v7078 = vpop.f32.mrf.mxu0
        %v7079 = vadd.f32 0.0, %v7078
        %v7080 = vpop.f32.mrf.mxu0
        %v7081 = vadd.f32 0.0, %v7080
        %7082 = vmatmul.bf16.gmra.mxu0 %v4644
        %v7083 = vpop.f32.mrf.mxu0
        %v7084 = vadd.f32 0.0, %v7083
        %v7085 = vpop.f32.mrf.mxu0
        %v7086 = vadd.f32 0.0, %v7085
        %7087 = vmatmul.bf16.gmra.mxu0 %v4647
        %v7088 = vpop.f32.mrf.mxu0
        %v7089 = vadd.f32 0.0, %v7088
        %v7090 = vpop.f32.mrf.mxu0
        %v7091 = vadd.f32 0.0, %v7090
        %7092 = vmatmul.bf16.gmra.mxu0 %v4650
        %v7093 = vpop.f32.mrf.mxu0
        %v7094 = vadd.f32 0.0, %v7093
        %v7095 = vpop.f32.mrf.mxu0
        %v7096 = vadd.f32 0.0, %v7095
        %7097 = vmatmul.bf16.gmra.mxu0 %v4653
        %v7098 = vpop.f32.mrf.mxu0
        %v7099 = vadd.f32 0.0, %v7098
        %v7100 = vpop.f32.mrf.mxu0
        %v7101 = vadd.f32 0.0, %v7100
        %7102 = vmatmul.bf16.gmra.mxu0 %v4656
        %v7103 = vpop.f32.mrf.mxu0
        %v7104 = vadd.f32 0.0, %v7103
        %v7105 = vpop.f32.mrf.mxu0
        %v7106 = vadd.f32 0.0, %v7105
        %7107 = vmatmul.bf16.gmra.mxu0 %v4659
        %v7108 = vpop.f32.mrf.mxu0
        %v7109 = vadd.f32 0.0, %v7108
        %v7110 = vpop.f32.mrf.mxu0
        %v7111 = vadd.f32 0.0, %v7110
        %7112 = vdwg.mxu0
        %s7113 = sld [smem:[#allocation2 + $0x8]]
        %v7114 = vstv %s7113
        %v7115 = vmul.f32 %v7114, %v2477
        %v7116 = vmul.f32 %v7114, %v2478
        %v7117 = vmul.f32 %v7114, %v2479
        %v7118 = vmul.f32 %v7114, %v2480
        %v7119 = vmul.f32 %v7114, %v2481
        %v7120 = vmul.f32 %v7114, %v2482
        %v7121 = vmul.f32 %v7114, %v2483
        %v7122 = vmul.f32 %v7114, %v2484
        %v7123 = vmul.f32 %v7114, %v2485
        %v7124 = vmul.f32 %v7114, %v2486
        %v7125 = vmul.f32 %v7114, %v2487
        %v7126 = vmul.f32 %v7114, %v2488
        %v7127 = vmul.f32 %v7114, %v2489
        %v7128 = vmul.f32 %v7114, %v2490
        %v7129 = vmul.f32 %v7114, %v2491
        %v7130 = vmul.f32 %v7114, %v2492
        %v7131 = vmul.f32 %v7114, %v2493
        %v7132 = vmul.f32 %v7114, %v2494
        %v7133 = vmul.f32 %v7114, %v2495
        %v7134 = vmul.f32 %v7114, %v2496
        %v7135 = vmul.f32 %v7114, %v2497
        %v7136 = vmul.f32 %v7114, %v2498
        %v7137 = vmul.f32 %v7114, %v2499
        %v7138 = vmul.f32 %v7114, %v2500
        %v7139 = vmul.f32 %v7114, %v2501
        %v7140 = vmul.f32 %v7114, %v2502
        %v7141 = vmul.f32 %v7114, %v2503
        %v7142 = vmul.f32 %v7114, %v2504
        %v7143 = vmul.f32 %v7114, %v2505
        %v7144 = vmul.f32 %v7114, %v2506
        %v7145 = vmul.f32 %v7114, %v2507
        %v7146 = vmul.f32 %v7114, %v2508
        %v7147 = vadd.f32 %v7034, %v7115
        %v7148 = vadd.f32 %v7036, %v7116
        %v7149 = vadd.f32 %v7039, %v7117
        %v7150 = vadd.f32 %v7041, %v7118
        %v7151 = vadd.f32 %v7044, %v7119
        %v7152 = vadd.f32 %v7046, %v7120
        %v7153 = vadd.f32 %v7049, %v7121
        %v7154 = vadd.f32 %v7051, %v7122
        %v7155 = vadd.f32 %v7054, %v7123
        %v7156 = vadd.f32 %v7056, %v7124
        %v7157 = vadd.f32 %v7059, %v7125
        %v7158 = vadd.f32 %v7061, %v7126
        %v7159 = vadd.f32 %v7064, %v7127
        %v7160 = vadd.f32 %v7066, %v7128
        %v7161 = vadd.f32 %v7069, %v7129
        %v7162 = vadd.f32 %v7071, %v7130
        %v7163 = vadd.f32 %v7074, %v7131
        %v7164 = vadd.f32 %v7076, %v7132
        %v7165 = vadd.f32 %v7079, %v7133
        %v7166 = vadd.f32 %v7081, %v7134
        %v7167 = vadd.f32 %v7084, %v7135
        %v7168 = vadd.f32 %v7086, %v7136
        %v7169 = vadd.f32 %v7089, %v7137
        %v7170 = vadd.f32 %v7091, %v7138
        %v7171 = vadd.f32 %v7094, %v7139
        %v7172 = vadd.f32 %v7096, %v7140
        %v7173 = vadd.f32 %v7099, %v7141
        %v7174 = vadd.f32 %v7101, %v7142
        %v7175 = vadd.f32 %v7104, %v7143
        %v7176 = vadd.f32 %v7106, %v7144
        %v7177 = vadd.f32 %v7109, %v7145
        %v7178 = vadd.f32 %v7111, %v7146
        %s7179 = sld [smem:[#allocation2 + $0x9]]
        %v7180 = vstv %s7179
        %v7181 = vmul.f32 %v7180, %v4315
        %v7182 = vmul.f32 %v7180, %v4316
        %v7183 = vmul.f32 %v7180, %v4317
        %v7184 = vmul.f32 %v7180, %v4318
        %v7185 = vmul.f32 %v7180, %v4319
        %v7186 = vmul.f32 %v7180, %v4320
        %v7187 = vmul.f32 %v7180, %v4321
        %v7188 = vmul.f32 %v7180, %v4322
        %v7189 = vmul.f32 %v7180, %v4323
        %v7190 = vmul.f32 %v7180, %v4324
        %v7191 = vmul.f32 %v7180, %v4325
        %v7192 = vmul.f32 %v7180, %v4326
        %v7193 = vmul.f32 %v7180, %v4327
        %v7194 = vmul.f32 %v7180, %v4328
        %v7195 = vmul.f32 %v7180, %v4329
        %v7196 = vmul.f32 %v7180, %v4330
        %v7197 = vmul.f32 %v7180, %v4331
        %v7198 = vmul.f32 %v7180, %v4332
        %v7199 = vmul.f32 %v7180, %v4333
        %v7200 = vmul.f32 %v7180, %v4334
        %v7201 = vmul.f32 %v7180, %v4335
        %v7202 = vmul.f32 %v7180, %v4336
        %v7203 = vmul.f32 %v7180, %v4337
        %v7204 = vmul.f32 %v7180, %v4338
        %v7205 = vmul.f32 %v7180, %v4339
        %v7206 = vmul.f32 %v7180, %v4340
        %v7207 = vmul.f32 %v7180, %v4341
        %v7208 = vmul.f32 %v7180, %v4342
        %v7209 = vmul.f32 %v7180, %v4343
        %v7210 = vmul.f32 %v7180, %v4344
        %v7211 = vmul.f32 %v7180, %v4345
        %v7212 = vmul.f32 %v7180, %v4346
        %v7213 = vadd.f32 %v7147, %v7181
        %v7214 = vadd.f32 %v7148, %v7182
        %v7215 = vadd.f32 %v7149, %v7183
        %v7216 = vadd.f32 %v7150, %v7184
        %v7217 = vadd.f32 %v7151, %v7185
        %v7218 = vadd.f32 %v7152, %v7186
        %v7219 = vadd.f32 %v7153, %v7187
        %v7220 = vadd.f32 %v7154, %v7188
        %v7221 = vadd.f32 %v7155, %v7189
        %v7222 = vadd.f32 %v7156, %v7190
        %v7223 = vadd.f32 %v7157, %v7191
        %v7224 = vadd.f32 %v7158, %v7192
        %v7225 = vadd.f32 %v7159, %v7193
        %v7226 = vadd.f32 %v7160, %v7194
        %v7227 = vadd.f32 %v7161, %v7195
        %v7228 = vadd.f32 %v7162, %v7196
        %v7229 = vadd.f32 %v7163, %v7197
        %v7230 = vadd.f32 %v7164, %v7198
        %v7231 = vadd.f32 %v7165, %v7199
        %v7232 = vadd.f32 %v7166, %v7200
        %v7233 = vadd.f32 %v7167, %v7201
        %v7234 = vadd.f32 %v7168, %v7202
        %v7235 = vadd.f32 %v7169, %v7203
        %v7236 = vadd.f32 %v7170, %v7204
        %v7237 = vadd.f32 %v7171, %v7205
        %v7238 = vadd.f32 %v7172, %v7206
        %v7239 = vadd.f32 %v7173, %v7207
        %v7240 = vadd.f32 %v7174, %v7208
        %v7241 = vadd.f32 %v7175, %v7209
        %v7242 = vadd.f32 %v7176, %v7210
        %v7243 = vadd.f32 %v7177, %v7211
        %v7244 = vadd.f32 %v7178, %v7212
        %v7245 = vadd.f32 %v6968, %v7213
        %v7246 = vadd.f32 %v6969, %v7214
        %v7247 = vadd.f32 %v6970, %v7215
        %v7248 = vadd.f32 %v6971, %v7216
        %v7249 = vadd.f32 %v6972, %v7217
        %v7250 = vadd.f32 %v6973, %v7218
        %v7251 = vadd.f32 %v6974, %v7219
        %v7252 = vadd.f32 %v6975, %v7220
        %v7253 = vadd.f32 %v6976, %v7221
        %v7254 = vadd.f32 %v6977, %v7222
        %v7255 = vadd.f32 %v6978, %v7223
        %v7256 = vadd.f32 %v6979, %v7224
        %v7257 = vadd.f32 %v6980, %v7225
        %v7258 = vadd.f32 %v6981, %v7226
        %v7259 = vadd.f32 %v6982, %v7227
        %v7260 = vadd.f32 %v6983, %v7228
        %v7261 = vadd.f32 %v6984, %v7229
        %v7262 = vadd.f32 %v6985, %v7230
        %v7263 = vadd.f32 %v6986, %v7231
        %v7264 = vadd.f32 %v6987, %v7232
        %v7265 = vadd.f32 %v6988, %v7233
        %v7266 = vadd.f32 %v6989, %v7234
        %v7267 = vadd.f32 %v6990, %v7235
        %v7268 = vadd.f32 %v6991, %v7236
        %v7269 = vadd.f32 %v6992, %v7237
        %v7270 = vadd.f32 %v6993, %v7238
        %v7271 = vadd.f32 %v6994, %v7239
        %v7272 = vadd.f32 %v6995, %v7240
        %v7273 = vadd.f32 %v6996, %v7241
        %v7274 = vadd.f32 %v6997, %v7242
        %v7275 = vadd.f32 %v6998, %v7243
        %v7276 = vadd.f32 %v6999, %v7244
        %s7277 = scalar_lea.vmem %s2, 100
        %v7278 = vld [vmem:[%s7277] sm:$0xf]
        %v7279 = vld [vmem:[%s7277 + $0x4] sm:$0xf]
        %v7280 = vld [vmem:[%s7277 + $0x8] sm:$0xf]
        %v7281 = vld [vmem:[%s7277 + $0xc] sm:$0xf]
        %v7282 = vld [vmem:[%s7277 + $0x10] sm:$0x3]
        %v7288 = vunpack.c.l.b16 %v7278
        %v7289 = vunpack.c.l.b16 %v7279
        %v7290 = vunpack.c.l.b16 %v7280
        %v7291 = vunpack.c.l.b16 %v7281
        %v7292 = vunpack.c.l.b16 %v7282
        %v7293 = vpack.c.b16 %v7289, %v7288
        %v7294 = vpack.c.b16 %v7291, %v7290
        %v7295 = vpack.c.b16 %v7292, %v7292
        %v7299 = vsel %vm2235, %v6323, 0
        %v7302 = vsel %vm2235, %v6324, 0
        %v7305 = vsel %vm2235, %v6325, 0
        %v7308 = vsel %vm2235, %v6326, 0
        %v7311 = vsel %vm2235, %v6327, 0
        %v7314 = vsel %vm2235, %v6328, 0
        %v7317 = vsel %vm2235, %v6329, 0
        %v7320 = vsel %vm2235, %v6330, 0
        %v7323 = vsel %vm2235, %v6331, 0
        %v7326 = vsel %vm2235, %v6332, 0
        %v7329 = vsel %vm2235, %v6333, 0
        %v7332 = vsel %vm2235, %v6334, 0
        %v7335 = vsel %vm2235, %v6335, 0
        %v7338 = vsel %vm2235, %v6336, 0
        %v7341 = vsel %vm2235, %v6337, 0
        %v7344 = vsel %vm2235, %v6338, 0
        %v7347 = vsel %vm2284, %v7295, 0
        %7349 = vmatpush.bf16.msra.mxu0 0
        %7350 = vmatpush.bf16.msra.mxu0 0
        %7351 = vmatpush.bf16.msra.mxu0 0
        %7352 = vmatpush.bf16.msra.mxu0 0
        %7353 = vmatpush.bf16.msra.mxu0 0
        %7354 = vmatpush.bf16.msra.mxu0 %v7347
        %7355 = vmatpush.bf16.msra.mxu0 %v7294
        %7356 = vmatpush.bf16.msra.mxu0 %v7293
        %7357 = vmatmul.bf16.gmra.mxu0 %v7299
        %v7358 = vpop.f32.mrf.mxu0
        %v7359 = vadd.f32 0.0, %v7358
        %v7360 = vpop.f32.mrf.mxu0
        %v7361 = vadd.f32 0.0, %v7360
        %7362 = vmatmul.bf16.gmra.mxu0 %v7302
        %v7363 = vpop.f32.mrf.mxu0
        %v7364 = vadd.f32 0.0, %v7363
        %v7365 = vpop.f32.mrf.mxu0
        %v7366 = vadd.f32 0.0, %v7365
        %7367 = vmatmul.bf16.gmra.mxu0 %v7305
        %v7368 = vpop.f32.mrf.mxu0
        %v7369 = vadd.f32 0.0, %v7368
        %v7370 = vpop.f32.mrf.mxu0
        %v7371 = vadd.f32 0.0, %v7370
        %7372 = vmatmul.bf16.gmra.mxu0 %v7308
        %v7373 = vpop.f32.mrf.mxu0
        %v7374 = vadd.f32 0.0, %v7373
        %v7375 = vpop.f32.mrf.mxu0
        %v7376 = vadd.f32 0.0, %v7375
        %7377 = vmatmul.bf16.gmra.mxu0 %v7311
        %v7378 = vpop.f32.mrf.mxu0
        %v7379 = vadd.f32 0.0, %v7378
        %v7380 = vpop.f32.mrf.mxu0
        %v7381 = vadd.f32 0.0, %v7380
        %7382 = vmatmul.bf16.gmra.mxu0 %v7314
        %v7383 = vpop.f32.mrf.mxu0
        %v7384 = vadd.f32 0.0, %v7383
        %v7385 = vpop.f32.mrf.mxu0
        %v7386 = vadd.f32 0.0, %v7385
        %7387 = vmatmul.bf16.gmra.mxu0 %v7317
        %v7388 = vpop.f32.mrf.mxu0
        %v7389 = vadd.f32 0.0, %v7388
        %v7390 = vpop.f32.mrf.mxu0
        %v7391 = vadd.f32 0.0, %v7390
        %7392 = vmatmul.bf16.gmra.mxu0 %v7320
        %v7393 = vpop.f32.mrf.mxu0
        %v7394 = vadd.f32 0.0, %v7393
        %v7395 = vpop.f32.mrf.mxu0
        %v7396 = vadd.f32 0.0, %v7395
        %7397 = vmatmul.bf16.gmra.mxu0 %v7323
        %v7398 = vpop.f32.mrf.mxu0
        %v7399 = vadd.f32 0.0, %v7398
        %v7400 = vpop.f32.mrf.mxu0
        %v7401 = vadd.f32 0.0, %v7400
        %7402 = vmatmul.bf16.gmra.mxu0 %v7326
        %v7403 = vpop.f32.mrf.mxu0
        %v7404 = vadd.f32 0.0, %v7403
        %v7405 = vpop.f32.mrf.mxu0
        %v7406 = vadd.f32 0.0, %v7405
        %7407 = vmatmul.bf16.gmra.mxu0 %v7329
        %v7408 = vpop.f32.mrf.mxu0
        %v7409 = vadd.f32 0.0, %v7408
        %v7410 = vpop.f32.mrf.mxu0
        %v7411 = vadd.f32 0.0, %v7410
        %7412 = vmatmul.bf16.gmra.mxu0 %v7332
        %v7413 = vpop.f32.mrf.mxu0
        %v7414 = vadd.f32 0.0, %v7413
        %v7415 = vpop.f32.mrf.mxu0
        %v7416 = vadd.f32 0.0, %v7415
        %7417 = vmatmul.bf16.gmra.mxu0 %v7335
        %v7418 = vpop.f32.mrf.mxu0
        %v7419 = vadd.f32 0.0, %v7418
        %v7420 = vpop.f32.mrf.mxu0
        %v7421 = vadd.f32 0.0, %v7420
        %7422 = vmatmul.bf16.gmra.mxu0 %v7338
        %v7423 = vpop.f32.mrf.mxu0
        %v7424 = vadd.f32 0.0, %v7423
        %v7425 = vpop.f32.mrf.mxu0
        %v7426 = vadd.f32 0.0, %v7425
        %7427 = vmatmul.bf16.gmra.mxu0 %v7341
        %v7428 = vpop.f32.mrf.mxu0
        %v7429 = vadd.f32 0.0, %v7428
        %v7430 = vpop.f32.mrf.mxu0
        %v7431 = vadd.f32 0.0, %v7430
        %7432 = vmatmul.bf16.gmra.mxu0 %v7344
        %v7433 = vpop.f32.mrf.mxu0
        %v7434 = vadd.f32 0.0, %v7433
        %v7435 = vpop.f32.mrf.mxu0
        %v7436 = vadd.f32 0.0, %v7435
        %7437 = vdwg.mxu0
        %s7438 = sld [smem:[#allocation2 + $0xa]]
        %v7439 = vstv %s7438
        %v7440 = vmul.f32 %v7439, %v4885
        %v7441 = vmul.f32 %v7439, %v4886
        %v7442 = vmul.f32 %v7439, %v4887
        %v7443 = vmul.f32 %v7439, %v4888
        %v7444 = vmul.f32 %v7439, %v4889
        %v7445 = vmul.f32 %v7439, %v4890
        %v7446 = vmul.f32 %v7439, %v4891
        %v7447 = vmul.f32 %v7439, %v4892
        %v7448 = vmul.f32 %v7439, %v4893
        %v7449 = vmul.f32 %v7439, %v4894
        %v7450 = vmul.f32 %v7439, %v4895
        %v7451 = vmul.f32 %v7439, %v4896
        %v7452 = vmul.f32 %v7439, %v4897
        %v7453 = vmul.f32 %v7439, %v4898
        %v7454 = vmul.f32 %v7439, %v4899
        %v7455 = vmul.f32 %v7439, %v4900
        %v7456 = vmul.f32 %v7439, %v4901
        %v7457 = vmul.f32 %v7439, %v4902
        %v7458 = vmul.f32 %v7439, %v4903
        %v7459 = vmul.f32 %v7439, %v4904
        %v7460 = vmul.f32 %v7439, %v4905
        %v7461 = vmul.f32 %v7439, %v4906
        %v7462 = vmul.f32 %v7439, %v4907
        %v7463 = vmul.f32 %v7439, %v4908
        %v7464 = vmul.f32 %v7439, %v4909
        %v7465 = vmul.f32 %v7439, %v4910
        %v7466 = vmul.f32 %v7439, %v4911
        %v7467 = vmul.f32 %v7439, %v4912
        %v7468 = vmul.f32 %v7439, %v4913
        %v7469 = vmul.f32 %v7439, %v4914
        %v7470 = vmul.f32 %v7439, %v4915
        %v7471 = vmul.f32 %v7439, %v4916
        %v7472 = vadd.f32 %v7359, %v7440
        %v7473 = vadd.f32 %v7361, %v7441
        %v7474 = vadd.f32 %v7364, %v7442
        %v7475 = vadd.f32 %v7366, %v7443
        %v7476 = vadd.f32 %v7369, %v7444
        %v7477 = vadd.f32 %v7371, %v7445
        %v7478 = vadd.f32 %v7374, %v7446
        %v7479 = vadd.f32 %v7376, %v7447
        %v7480 = vadd.f32 %v7379, %v7448
        %v7481 = vadd.f32 %v7381, %v7449
        %v7482 = vadd.f32 %v7384, %v7450
        %v7483 = vadd.f32 %v7386, %v7451
        %v7484 = vadd.f32 %v7389, %v7452
        %v7485 = vadd.f32 %v7391, %v7453
        %v7486 = vadd.f32 %v7394, %v7454
        %v7487 = vadd.f32 %v7396, %v7455
        %v7488 = vadd.f32 %v7399, %v7456
        %v7489 = vadd.f32 %v7401, %v7457
        %v7490 = vadd.f32 %v7404, %v7458
        %v7491 = vadd.f32 %v7406, %v7459
        %v7492 = vadd.f32 %v7409, %v7460
        %v7493 = vadd.f32 %v7411, %v7461
        %v7494 = vadd.f32 %v7414, %v7462
        %v7495 = vadd.f32 %v7416, %v7463
        %v7496 = vadd.f32 %v7419, %v7464
        %v7497 = vadd.f32 %v7421, %v7465
        %v7498 = vadd.f32 %v7424, %v7466
        %v7499 = vadd.f32 %v7426, %v7467
        %v7500 = vadd.f32 %v7429, %v7468
        %v7501 = vadd.f32 %v7431, %v7469
        %v7502 = vadd.f32 %v7434, %v7470
        %v7503 = vadd.f32 %v7436, %v7471
        %s7504 = sld [smem:[#allocation2 + $0xb]]
        %v7505 = vstv %s7504
        %v7506 = vmul.f32 %v7505, %v6723
        %v7507 = vmul.f32 %v7505, %v6724
        %v7508 = vmul.f32 %v7505, %v6725
        %v7509 = vmul.f32 %v7505, %v6726
        %v7510 = vmul.f32 %v7505, %v6727
        %v7511 = vmul.f32 %v7505, %v6728
        %v7512 = vmul.f32 %v7505, %v6729
        %v7513 = vmul.f32 %v7505, %v6730
        %v7514 = vmul.f32 %v7505, %v6731
        %v7515 = vmul.f32 %v7505, %v6732
        %v7516 = vmul.f32 %v7505, %v6733
        %v7517 = vmul.f32 %v7505, %v6734
        %v7518 = vmul.f32 %v7505, %v6735
        %v7519 = vmul.f32 %v7505, %v6736
        %v7520 = vmul.f32 %v7505, %v6737
        %v7521 = vmul.f32 %v7505, %v6738
        %v7522 = vmul.f32 %v7505, %v6739
        %v7523 = vmul.f32 %v7505, %v6740
        %v7524 = vmul.f32 %v7505, %v6741
        %v7525 = vmul.f32 %v7505, %v6742
        %v7526 = vmul.f32 %v7505, %v6743
        %v7527 = vmul.f32 %v7505, %v6744
        %v7528 = vmul.f32 %v7505, %v6745
        %v7529 = vmul.f32 %v7505, %v6746
        %v7530 = vmul.f32 %v7505, %v6747
        %v7531 = vmul.f32 %v7505, %v6748
        %v7532 = vmul.f32 %v7505, %v6749
        %v7533 = vmul.f32 %v7505, %v6750
        %v7534 = vmul.f32 %v7505, %v6751
        %v7535 = vmul.f32 %v7505, %v6752
        %v7536 = vmul.f32 %v7505, %v6753
        %v7537 = vmul.f32 %v7505, %v6754
        %v7538 = vadd.f32 %v7472, %v7506
        %v7539 = vadd.f32 %v7473, %v7507
        %v7540 = vadd.f32 %v7474, %v7508
        %v7541 = vadd.f32 %v7475, %v7509
        %v7542 = vadd.f32 %v7476, %v7510
        %v7543 = vadd.f32 %v7477, %v7511
        %v7544 = vadd.f32 %v7478, %v7512
        %v7545 = vadd.f32 %v7479, %v7513
        %v7546 = vadd.f32 %v7480, %v7514
        %v7547 = vadd.f32 %v7481, %v7515
        %v7548 = vadd.f32 %v7482, %v7516
        %v7549 = vadd.f32 %v7483, %v7517
        %v7550 = vadd.f32 %v7484, %v7518
        %v7551 = vadd.f32 %v7485, %v7519
        %v7552 = vadd.f32 %v7486, %v7520
        %v7553 = vadd.f32 %v7487, %v7521
        %v7554 = vadd.f32 %v7488, %v7522
        %v7555 = vadd.f32 %v7489, %v7523
        %v7556 = vadd.f32 %v7490, %v7524
        %v7557 = vadd.f32 %v7491, %v7525
        %v7558 = vadd.f32 %v7492, %v7526
        %v7559 = vadd.f32 %v7493, %v7527
        %v7560 = vadd.f32 %v7494, %v7528
        %v7561 = vadd.f32 %v7495, %v7529
        %v7562 = vadd.f32 %v7496, %v7530
        %v7563 = vadd.f32 %v7497, %v7531
        %v7564 = vadd.f32 %v7498, %v7532
        %v7565 = vadd.f32 %v7499, %v7533
        %v7566 = vadd.f32 %v7500, %v7534
        %v7567 = vadd.f32 %v7501, %v7535
        %v7568 = vadd.f32 %v7502, %v7536
        %v7569 = vadd.f32 %v7503, %v7537
        %v7570 = vadd.f32 %v7245, %v7538
        %v7571 = vadd.f32 %v7246, %v7539
        %v7572 = vadd.f32 %v7247, %v7540
        %v7573 = vadd.f32 %v7248, %v7541
        %v7574 = vadd.f32 %v7249, %v7542
        %v7575 = vadd.f32 %v7250, %v7543
        %v7576 = vadd.f32 %v7251, %v7544
        %v7577 = vadd.f32 %v7252, %v7545
        %v7578 = vadd.f32 %v7253, %v7546
        %v7579 = vadd.f32 %v7254, %v7547
        %v7580 = vadd.f32 %v7255, %v7548
        %v7581 = vadd.f32 %v7256, %v7549
        %v7582 = vadd.f32 %v7257, %v7550
        %v7583 = vadd.f32 %v7258, %v7551
        %v7584 = vadd.f32 %v7259, %v7552
        %v7585 = vadd.f32 %v7260, %v7553
        %v7586 = vadd.f32 %v7261, %v7554
        %v7587 = vadd.f32 %v7262, %v7555
        %v7588 = vadd.f32 %v7263, %v7556
        %v7589 = vadd.f32 %v7264, %v7557
        %v7590 = vadd.f32 %v7265, %v7558
        %v7591 = vadd.f32 %v7266, %v7559
        %v7592 = vadd.f32 %v7267, %v7560
        %v7593 = vadd.f32 %v7268, %v7561
        %v7594 = vadd.f32 %v7269, %v7562
        %v7595 = vadd.f32 %v7270, %v7563
        %v7596 = vadd.f32 %v7271, %v7564
        %v7597 = vadd.f32 %v7272, %v7565
        %v7598 = vadd.f32 %v7273, %v7566
        %v7599 = vadd.f32 %v7274, %v7567
        %v7600 = vadd.f32 %v7275, %v7568
        %v7601 = vadd.f32 %v7276, %v7569
        %7602 = vst.msk [vmem:[%s184] sm:$0xff] %vm1517, %v7570
        %7603 = vst.msk [vmem:[%s184 + $0x8] sm:$0xff] %vm1517, %v7571
        %7604 = vst.msk [vmem:[%s184 + $0x10] sm:$0xff] %vm1517, %v7572
        %7605 = vst.msk [vmem:[%s184 + $0x18] sm:$0xff] %vm1517, %v7573
        %7606 = vst.msk [vmem:[%s184 + $0x20] sm:$0xff] %vm1517, %v7574
        %7607 = vst.msk [vmem:[%s184 + $0x28] sm:$0xff] %vm1517, %v7575
        %7608 = vst.msk [vmem:[%s184 + $0x30] sm:$0xff] %vm1517, %v7576
        %7609 = vst.msk [vmem:[%s184 + $0x38] sm:$0xff] %vm1517, %v7577
        %7610 = vst.msk [vmem:[%s184 + $0x40] sm:$0xff] %vm1517, %v7578
        %7611 = vst.msk [vmem:[%s184 + $0x48] sm:$0xff] %vm1517, %v7579
        %7612 = vst.msk [vmem:[%s184 + $0x50] sm:$0xff] %vm1517, %v7580
        %7613 = vst.msk [vmem:[%s184 + $0x58] sm:$0xff] %vm1517, %v7581
        %7614 = vst.msk [vmem:[%s184 + $0x60] sm:$0xff] %vm1517, %v7582
        %7615 = vst.msk [vmem:[%s184 + $0x68] sm:$0xff] %vm1517, %v7583
        %7616 = vst.msk [vmem:[%s184 + $0x70] sm:$0xff] %vm1517, %v7584
        %7617 = vst.msk [vmem:[%s184 + $0x78] sm:$0xff] %vm1517, %v7585
        %7618 = vst.msk [vmem:[%s184 + $0x80] sm:$0xff] %vm1517, %v7586
        %7619 = vst.msk [vmem:[%s184 + $0x88] sm:$0xff] %vm1517, %v7587
        %7620 = vst.msk [vmem:[%s184 + $0x90] sm:$0xff] %vm1517, %v7588
        %7621 = vst.msk [vmem:[%s184 + $0x98] sm:$0xff] %vm1517, %v7589
        %7622 = vst.msk [vmem:[%s184 + $0xa0] sm:$0xff] %vm1517, %v7590
        %7623 = vst.msk [vmem:[%s184 + $0xa8] sm:$0xff] %vm1517, %v7591
        %7624 = vst.msk [vmem:[%s184 + $0xb0] sm:$0xff] %vm1517, %v7592
        %7625 = vst.msk [vmem:[%s184 + $0xb8] sm:$0xff] %vm1517, %v7593
        %7626 = vst.msk [vmem:[%s184 + $0xc0] sm:$0xff] %vm1517, %v7594
        %7627 = vst.msk [vmem:[%s184 + $0xc8] sm:$0xff] %vm1517, %v7595
        %7628 = vst.msk [vmem:[%s184 + $0xd0] sm:$0xff] %vm1517, %v7596
        %7629 = vst.msk [vmem:[%s184 + $0xd8] sm:$0xff] %vm1517, %v7597
        %7630 = vst.msk [vmem:[%s184 + $0xe0] sm:$0xff] %vm1517, %v7598
        %7631 = vst.msk [vmem:[%s184 + $0xe8] sm:$0xff] %vm1517, %v7599
        %7632 = vst.msk [vmem:[%s184 + $0xf0] sm:$0xff] %vm1517, %v7600
        %7633 = vst.msk [vmem:[%s184 + $0xf8] sm:$0xff] %vm1517, %v7601
        %p7634 = scmp.lt.s32.totalorder %s15, 1
        %s7635 = scalar_select %p7634, %s15, 1
        %s7636 = smul.addr %s7635, 32
        %s7637 = smul.addr %s7636, 8
        %s7638 = scalar_lea.vmem %s3, %s7637
        // Predicated region
        $region37: #{tpu_custom_call.1} parent=31 // pred_check
          %p7639 = pneg %p101
        $region38: #{tpu_custom_call.1} parent=31 // pred_check_branch
          %7641 = sbr.rel (%p7639) target = $region40
        $region39: #{tpu_custom_call.1} parent=31 // pred_region
          _
        $region40: #{tpu_custom_call.1} parent=31 // pred_fallthru
          _
      $region32: #{tpu_custom_call.1} parent=5 // pred_fallthru
        _
      %p7642 = scmp.le.s32.totalorder 2, %s10
      // Predicated region
      $region41: #{tpu_custom_call.1} parent=5 // pred_check
        %p7643 = pneg %p7642
      $region42: #{tpu_custom_call.1} parent=5 // pred_check_branch
        %7645 = sbr.rel (%p7643) target = $region44
      $region43: #{tpu_custom_call.1} parent=5 // pred_region
        %s7646 = ssub.s32 %s10, 2
        // Predicated region
        $region45: #{tpu_custom_call.1} parent=43 // pred_check
          %p7647 = pneg %p107
        $region46: #{tpu_custom_call.1} parent=43 // pred_check_branch
          %7649 = sbr.rel (%p7647) target = $region48
        $region47: #{tpu_custom_call.1} parent=43 // pred_region
          %p7650 = scmp.lt.s32.totalorder %s16, 1
          %s7651 = scalar_select %p7650, %s16, 1
          %s7652 = smul.addr %s7651, 32
          %s7653 = smul.addr %s7652, 8
          %s7654 = scalar_lea.vmem %s3, %s7653
        $region48: #{tpu_custom_call.1} parent=43 // pred_fallthru
          _
      $region44: #{tpu_custom_call.1} parent=5 // pred_fallthru
        _
    $region6: #{tpu_custom_call.1} parent=1 // loop_footer
      %s14 = sadd.s32 1, %s10
    $region7: #{tpu_custom_call.1} parent=1 // loop_footer_branch
      %9 = sbr.rel target = $region3
    $region8: #{tpu_custom_call.1} parent=1 // loop_exit
      _
    %7655 = vsyncpa [#allocation3], 1
    %s7656 = scalar_lea.sflag [#allocation3], 1
    %7657 = vsyncpa %s7656, 1

</llo_original>
